<compile_context>
chip_gen: v7x
topology: tpu7x:2x2x1
jax: 0.10.0
libtpu: 0.0.40
codegen_flags: <defaults>
</compile_context>

<pallas_src>
import jax
import jax.numpy as jnp
from jax.experimental import pallas as pl
from jax.experimental.pallas import tpu as pltpu

BN_EPS = 1e-5
LANES = 128
VMEM_LIMIT_BYTES = 48 * 1024 * 1024   # explicit scoped-VMEM cap (defaults: 16/32 MiB)


def _pad_lanes(c):
    return ((c + LANES - 1) // LANES) * LANES


def _row_slice(start, size, stride):
    """Sublane slice; strided when stride > 1 (conv stride / maxpool phases)."""
    return pl.ds(start, size) if stride == 1 else pl.ds(start, size, stride=stride)


# ----------------------------- config helpers (mirror the PyTorch module) ----

def _padding(downsample, kernel_size):
    return max(0, (kernel_size - downsample + 1) // 2)


def _downsample(n_samples_in, n_samples_out):
    downsample = n_samples_in // n_samples_out
    if downsample < 1:
        raise ValueError('Number of samples should always decrease')
    if n_samples_in % n_samples_out != 0:
        raise ValueError('Samples must decrease by an integer factor.')
    return downsample


def build_config(n_channels, n_samples, net_filter_size, net_seq_length,
                 n_classes, kernel_size):
    if kernel_size % 2 == 0:
        raise ValueError('kernel_size must be odd')
    if n_classes == 2:
        n_classes = 1
    blocks_dim = list(zip(net_filter_size, net_seq_length))
    n_filters_in, n_filters_out = n_channels, blocks_dim[0][0]
    n_samples_in, n_samples_out = n_samples, blocks_dim[0][1]
    ds = _downsample(n_samples_in, n_samples_out)
    stem = dict(in_ch=n_filters_in, out_ch=n_filters_out, l_in=n_samples_in,
                l_out=n_samples_out, stride=ds, pad=_padding(ds, kernel_size))
    blocks = []
    for n_filters, n_samp in blocks_dim:
        n_filters_in, n_filters_out = n_filters_out, n_filters
        n_samples_in, n_samples_out = n_samples_out, n_samp
        ds = _downsample(n_samples_in, n_samples_out)
        blocks.append(dict(fin=n_filters_in, fout=n_filters_out,
                           l_in=n_samples_in, l_out=n_samples_out, ds=ds,
                           pad1=_padding(1, kernel_size),
                           pad2=_padding(ds, kernel_size)))
    return dict(stem=stem, blocks=blocks, n_classes=n_classes,
                kernel_size=kernel_size,
                c_last=blocks_dim[-1][0], l_last=blocks_dim[-1][1])


# ----------------------------- Pallas kernels --------------------------------

def first_block_pallas(x_raw, params, cfg, k_size):
    """Fused [stem Conv1d + BN] + [ResBlock 0] in one pallas_call.

    Block 0 always has n_filters_in == n_filters_out and downsample == 1 by construction,
    so its skip connection is the identity.  Output: s0 (pre-activation) in bf16.
    """
    st, bc = cfg['stem'], cfg['blocks'][0]
    assert bc['ds'] == 1 and bc['fin'] == bc['fout'], 'first block is identity-skip by construction'
    B, l_raw, cp_raw = x_raw.shape
    l0 = st['l_out']
    cp0 = params['stem_w'].shape[-1]
    st_stride, pad_st = st['stride'], st['pad']
    pad1, pad2 = bc['pad1'], bc['pad2']
    lp0, lp1, lp2 = l_raw + 2 * pad_st, l0 + 2 * pad1, l0 + 2 * pad2
    p = params['blocks'][0]

    def kernel(x0_ref, wst_ref, ast_ref, bst_ref, w1_ref, a1_ref, b1_ref, w2_ref,
               o_ref, x0p, xp, hp):
        # Zero only the conv padding rows (interior rows are fully overwritten each step).
        if pad_st > 0:
            x0p[pl.ds(0, pad_st), :] = jnp.zeros((pad_st, cp_raw), jnp.float32)
            x0p[pl.ds(pad_st + l_raw, pad_st), :] = jnp.zeros((pad_st, cp_raw), jnp.float32)
        if pad1 > 0:
            xp[pl.ds(0, pad1), :] = jnp.zeros((pad1, cp0), jnp.float32)
            xp[pl.ds(pad1 + l0, pad1), :] = jnp.zeros((pad1, cp0), jnp.float32)
        if pad2 > 0:
            hp[pl.ds(0, pad2), :] = jnp.zeros((pad2, cp0), jnp.float32)
            hp[pl.ds(pad2 + l0, pad2), :] = jnp.zeros((pad2, cp0), jnp.float32)

        # ---- stem: Conv1d(stride, pad, bias=False) + folded BN (no ReLU in the stem)
        x0p[pl.ds(pad_st, l_raw), :] = x0_ref[...]
        acc0 = jnp.zeros((l0, cp0), jnp.float32)
        for k in range(k_size):                      # per-tap MXU matmuls, f32 accumulation
            acc0 = acc0 + jnp.dot(
                x0p[_row_slice(k, l0, st_stride), :].astype(jnp.bfloat16),
                wst_ref[k], preferred_element_type=jnp.float32)
        h0 = acc0 * ast_ref[...] + bst_ref[...]      # x = y = h0 for block 0

        # ---- block-0 conv1 (stride 1, same pad) + bn1 + relu  (dropout1 = identity in eval)
        xp[pl.ds(pad1, l0), :] = h0
        acc1 = jnp.zeros((l0, cp0), jnp.float32)
        for k in range(k_size):
            acc1 = acc1 + jnp.dot(xp[pl.ds(k, l0), :].astype(jnp.bfloat16),
                                  w1_ref[k], preferred_element_type=jnp.float32)
        h = jnp.maximum(acc1 * a1_ref[...] + b1_ref[...], 0.0)

        # ---- block-0 conv2 (ds == 1) + identity skip; bn2+relu deferred to the next consumer
        hp[pl.ds(pad2, l0), :] = h
        acc2 = jnp.zeros((l0, cp0), jnp.float32)
        for k in range(k_size):
            acc2 = acc2 + jnp.dot(hp[pl.ds(k, l0), :].astype(jnp.bfloat16),
                                  w2_ref[k], preferred_element_type=jnp.float32)
        o_ref[...] = (acc2 + h0).astype(jnp.bfloat16)   # pre-activation s0 only (bf16)

    return pl.pallas_call(
        kernel,
        out_shape=jax.ShapeDtypeStruct((B, l0, cp0), jnp.bfloat16),
        grid=(B,),
        in_specs=[
            pl.BlockSpec((None, l_raw, cp_raw), lambda b: (b, 0, 0)),
            pl.BlockSpec((k_size, cp_raw, cp0), lambda b: (0, 0, 0)),
            pl.BlockSpec((1, cp0), lambda b: (0, 0)),
            pl.BlockSpec((1, cp0), lambda b: (0, 0)),
            pl.BlockSpec((k_size, cp0, cp0), lambda b: (0, 0, 0)),
            pl.BlockSpec((1, cp0), lambda b: (0, 0)),
            pl.BlockSpec((1, cp0), lambda b: (0, 0)),
            pl.BlockSpec((k_size, cp0, cp0), lambda b: (0, 0, 0)),
        ],
        out_specs=pl.BlockSpec((None, l0, cp0), lambda b: (b, 0, 0)),
        scratch_shapes=[pltpu.VMEM((lp0, cp_raw), jnp.float32),
                        pltpu.VMEM((lp1, cp0), jnp.float32),
                        pltpu.VMEM((lp2, cp0), jnp.float32)],
        compiler_params=pltpu.CompilerParams(
            dimension_semantics=("parallel",),
            vmem_limit_bytes=VMEM_LIMIT_BYTES),
    )(x_raw, params['stem_w'], params['stem_scale'], params['stem_shift'],
      p['w1'], p['bn1_scale'], p['bn1_shift'], p['w2'])


def resblock_pallas(s_prev, prev_scale, prev_shift, p, bc, k_size):
    """One fully fused ResBlock1d (blocks 1..N-1), single bf16 output.

    Takes the previous block's pre-activation s_prev (bf16) plus the previous bn2 affine,
    recomputes x = relu(bn2_prev(s_prev)) in VMEM, runs conv1+bn1+relu, conv2, skip
    (maxpool / 1x1 conv), residual add, and emits only the new pre-activation s (bf16).
    """
    B, l_in, cp_in = s_prev.shape
    l_out, ds = bc['l_out'], bc['ds']
    pad1, pad2 = bc['pad1'], bc['pad2']
    cp_out = p['w2'].shape[-1]
    has_skip = 'wskip' in p
    lp1, lp2 = l_in + 2 * pad1, l_in + 2 * pad2

    def kernel(s_ref, ps_ref, pb_ref, w1_ref, a1_ref, b1_ref, w2_ref, *rest):
        if has_skip:
            ws_ref, rest = rest[0], rest[1:]
        if ds > 1:
            o_ref, xp, hp, yp = rest
        else:
            o_ref, xp, hp = rest

        # Zero only the conv padding rows (cheap; done every step so it stays correct when the
        # batch grid axis is split across TensorCores on megacore parts).
        if pad1 > 0:
            xp[pl.ds(0, pad1), :] = jnp.zeros((pad1, cp_in), jnp.float32)
            xp[pl.ds(pad1 + l_in, pad1), :] = jnp.zeros((pad1, cp_in), jnp.float32)
        if pad2 > 0:
            hp[pl.ds(0, pad2), :] = jnp.zeros((pad2, cp_out), jnp.float32)
            hp[pl.ds(pad2 + l_in, pad2), :] = jnp.zeros((pad2, cp_out), jnp.float32)

        s = s_ref[...].astype(jnp.float32)                         # (l_in, cp_in)
        # Recompute x = relu(bn2_prev(s_prev)); dropout is identity in eval mode.
        x = jnp.maximum(s * ps_ref[...] + pb_ref[...], 0.0)
        xp[pl.ds(pad1, l_in), :] = x

        # ---- conv1 (stride 1, 'same' padding) + bn1 + relu: K per-tap MXU matmuls
        acc1 = jnp.zeros((l_in, cp_out), jnp.float32)
        for k in range(k_size):
            acc1 = acc1 + jnp.dot(xp[pl.ds(k, l_in), :].astype(jnp.bfloat16),
                                  w1_ref[k], preferred_element_type=jnp.float32)
        h = jnp.maximum(acc1 * a1_ref[...] + b1_ref[...], 0.0)
        hp[pl.ds(pad2, l_in), :] = h

        # ---- conv2 (stride = downsample); its BN is deferred to the next consumer
        acc2 = jnp.zeros((l_out, cp_out), jnp.float32)
        for k in range(k_size):
            acc2 = acc2 + jnp.dot(hp[_row_slice(k, l_out, ds), :].astype(jnp.bfloat16),
                                  w2_ref[k], preferred_element_type=jnp.float32)

        # ---- skip connection: MaxPool1d(ds), then 1x1 conv if the channel count changes.
        if ds > 1:
            # Strided sublane reads are done from a 32-bit scratch copy (proven lowering path).
            yp[...] = s
            ys = yp[pl.ds(0, l_out, stride=ds), :]
            for j in range(1, ds):
                ys = jnp.maximum(ys, yp[pl.ds(j, l_out, stride=ds), :])
        else:
            ys = s
        if has_skip:
            ysf = jnp.dot(ys.astype(jnp.bfloat16), ws_ref[...],
                          preferred_element_type=jnp.float32)
        else:
            ysf = ys

        # ---- residual add; emit only the pre-activation tensor (bn2+relu recomputed downstream)
        o_ref[...] = (acc2 + ysf).astype(jnp.bfloat16)

    in_arrays = [s_prev, prev_scale, prev_shift,
                 p['w1'], p['bn1_scale'], p['bn1_shift'], p['w2']]
    in_specs = [
        pl.BlockSpec((None, l_in, cp_in), lambda b: (b, 0, 0)),
        pl.BlockSpec((1, cp_in), lambda b: (0, 0)),
        pl.BlockSpec((1, cp_in), lambda b: (0, 0)),
        pl.BlockSpec((k_size, cp_in, cp_out), lambda b: (0, 0, 0)),
        pl.BlockSpec((1, cp_out), lambda b: (0, 0)),
        pl.BlockSpec((1, cp_out), lambda b: (0, 0)),
        pl.BlockSpec((k_size, cp_out, cp_out), lambda b: (0, 0, 0)),
    ]
    if has_skip:
        in_arrays.append(p['wskip'])
        in_specs.append(pl.BlockSpec((cp_in, cp_out), lambda b: (0, 0)))

    scratch = [pltpu.VMEM((lp1, cp_in), jnp.float32),
               pltpu.VMEM((lp2, cp_out), jnp.float32)]
    if ds > 1:
        scratch.append(pltpu.VMEM((l_in, cp_in), jnp.float32))

    return pl.pallas_call(
        kernel,
        out_shape=jax.ShapeDtypeStruct((B, l_out, cp_out), jnp.bfloat16),
        grid=(B,),
        in_specs=in_specs,
        out_specs=pl.BlockSpec((None, l_out, cp_out), lambda b: (b, 0, 0)),
        scratch_shapes=scratch,
        compiler_params=pltpu.CompilerParams(
            dimension_semantics=("parallel",),
            vmem_limit_bytes=VMEM_LIMIT_BYTES),
    )(*in_arrays)


def head_pallas(s_flat, scale_f, shift_f, w, b):
    """Fused classifier head: bn2(last block) + ReLU + flatten + Linear.

    s_flat: (B, F) bf16 where F = l_last * cp_last (length-major flatten of the last block's
    pre-activation).  scale_f/shift_f are the last block's folded bn2 affine tiled to (1, F).
    """
    B, F = s_flat.shape
    Fo = w.shape[1]

    def kernel(s_ref, sc_ref, sh_ref, w_ref, b_ref, o_ref):
        x = jnp.maximum(s_ref[...].astype(jnp.float32) * sc_ref[...] + sh_ref[...], 0.0)
        o_ref[...] = (jnp.dot(x.astype(jnp.bfloat16), w_ref[...],
                              preferred_element_type=jnp.float32) + b_ref[...])

    return pl.pallas_call(
        kernel,
        out_shape=jax.ShapeDtypeStruct((B, Fo), jnp.float32),
        grid=(1,),
        in_specs=[pl.BlockSpec((B, F), lambda i: (0, 0)),
                  pl.BlockSpec((1, F), lambda i: (0, 0)),
                  pl.BlockSpec((1, F), lambda i: (0, 0)),
                  pl.BlockSpec((F, Fo), lambda i: (0, 0)),
                  pl.BlockSpec((1, Fo), lambda i: (0, 0))],
        out_specs=pl.BlockSpec((B, Fo), lambda i: (0, 0)),
        compiler_params=pltpu.CompilerParams(
            dimension_semantics=("arbitrary",),
            vmem_limit_bytes=VMEM_LIMIT_BYTES),
    )(s_flat, scale_f, shift_f, w, b)


# ----------------------------- parameters ------------------------------------

def init_raw_params(key, cfg):
    """Raw f32 parameters in PyTorch layout (also used by the pure-JAX reference)."""
    K = cfg['kernel_size']
    keys = iter(jax.random.split(key, 128))

    def conv_w(cin, cout, k):
        std = 1.0 / (cin * k) ** 0.5
        return std * jax.random.normal(next(keys), (cout, cin, k), jnp.float32)

    def bn(ch):
        return dict(gamma=1.0 + 0.1 * jax.random.normal(next(keys), (ch,), jnp.float32),
                    beta=0.1 * jax.random.normal(next(keys), (ch,), jnp.float32),
                    mean=0.1 * jax.random.normal(next(keys), (ch,), jnp.float32),
                    var=0.5 + jax.random.uniform(next(keys), (ch,), jnp.float32))

    raw = {}
    st = cfg['stem']
    raw['stem_w'] = conv_w(st['in_ch'], st['out_ch'], K)
    raw['stem_bn'] = bn(st['out_ch'])
    raw['blocks'] = []
    for b in cfg['blocks']:
        p = dict(w1=conv_w(b['fin'], b['fout'], K), bn1=bn(b['fout']),
                 w2=conv_w(b['fout'], b['fout'], K), bn2=bn(b['fout']))
        if b['fin'] != b['fout']:
            p['wskip'] = conv_w(b['fin'], b['fout'], 1)
        raw['blocks'].append(p)
    c_last, l_last, n_cls = cfg['c_last'], cfg['l_last'], cfg['n_classes']
    raw['lin_w'] = 0.05 * jax.random.normal(next(keys), (n_cls, c_last * l_last), jnp.float32)
    raw['lin_b'] = 0.01 * jax.random.normal(next(keys), (n_cls,), jnp.float32)
    return raw


def pack_params(raw, cfg):
    """Pad/fold/permute raw params once at init into the kernel-friendly layout."""
    def conv_w_packed(w):                       # (cout, cin, k) -> (k, cp_in, cp_out) bf16
        cout, cin, k = w.shape
        cp_in, cp_out = _pad_lanes(cin), _pad_lanes(cout)
        wp = jnp.zeros((k, cp_in, cp_out), jnp.float32)
        wp = wp.at[:, :cin, :cout].set(jnp.transpose(w, (2, 1, 0)))
        return wp.astype(jnp.bfloat16)

    def bn_affine(bnp):                         # folded eval-mode BN -> (scale, shift) (1, cp)
        ch = bnp['gamma'].shape[0]
        scale = bnp['gamma'] / jnp.sqrt(bnp['var'] + BN_EPS)
        shift = bnp['beta'] - bnp['mean'] * scale
        cp = _pad_lanes(ch)
        # Padded lanes use scale=1 / shift=0 so they stay exactly zero through the network.
        return (jnp.ones((1, cp), jnp.float32).at[0, :ch].set(scale),
                jnp.zeros((1, cp), jnp.float32).at[0, :ch].set(shift))

    p = {'stem_w': conv_w_packed(raw['stem_w'])}
    p['stem_scale'], p['stem_shift'] = bn_affine(raw['stem_bn'])
    p['blocks'] = []
    for rb in raw['blocks']:
        bp = {'w1': conv_w_packed(rb['w1'])}
        bp['bn1_scale'], bp['bn1_shift'] = bn_affine(rb['bn1'])
        bp['w2'] = conv_w_packed(rb['w2'])
        bp['bn2_scale'], bp['bn2_shift'] = bn_affine(rb['bn2'])
        if 'wskip' in rb:
            bp['wskip'] = conv_w_packed(rb['wskip'])[0]        # (cp_in, cp_out)
        p['blocks'].append(bp)

    # Classifier: PyTorch flattens (B, C, L) channel-major; our activation flattens length-major
    # over (L, Cp).  Permute + lane-pad the weight rows once so the forward needs no transpose.
    c_last, l_last = cfg['c_last'], cfg['l_last']
    cp_last = _pad_lanes(c_last)
    n_cls = cfg['n_classes']
    fo = _pad_lanes(n_cls)
    w = raw['lin_w'].T.reshape(c_last, l_last, n_cls)          # (c, l, n)
    w = jnp.transpose(w, (1, 0, 2))                            # (l, c, n)
    w3 = jnp.zeros((l_last, cp_last, fo), jnp.float32).at[:, :c_last, :n_cls].set(w)
    p['lin_w'] = w3.reshape(l_last * cp_last, fo).astype(jnp.bfloat16)
    p['lin_b'] = jnp.zeros((1, fo), jnp.float32).at[0, :n_cls].set(raw['lin_b'])

    # Last block's bn2 affine, tiled over the flattened (l, c) feature axis for the head kernel.
    last_scale, last_shift = bn_affine(raw['blocks'][-1]['bn2'])
    p['head_scale'] = jnp.tile(last_scale, (1, l_last))        # (1, l_last*cp_last)
    p['head_shift'] = jnp.tile(last_shift, (1, l_last))
    return p


# ----------------------------- forward ---------------------------------------

def resnet1d_forward(params, cfg, x_ncl):
    """x_ncl: (B, C, L) like the PyTorch module. Returns (B, n_classes)."""
    B, C, _ = x_ncl.shape
    K = cfg['kernel_size']
    cp_raw = _pad_lanes(C)

    # NCL -> (B, L, Cp): length on sublanes, channels zero-padded onto the 128-lane axis.
    x = jnp.transpose(x_ncl, (0, 2, 1)).astype(jnp.float32)
    x = jnp.pad(x, ((0, 0), (0, 0), (0, cp_raw - C)))

    # Fused stem + block 0 -> pre-activation s0 (bf16).
    s = first_block_pallas(x, params, cfg, K)
    prev_scale = params['blocks'][0]['bn2_scale']
    prev_shift = params['blocks'][0]['bn2_shift']

    # Remaining blocks: each consumes s_prev + previous bn2 affine, emits its own s (bf16).
    for bc, bp in zip(cfg['blocks'][1:], params['blocks'][1:]):
        s = resblock_pallas(s, prev_scale, prev_shift, bp, bc, K)
        prev_scale, prev_shift = bp['bn2_scale'], bp['bn2_shift']

    # Head: last bn2 + ReLU + flatten + Linear fused into one call.  The reshape is a free
    # contiguous HBM view; lin_w rows were permuted/padded at init to match this order.
    sf = s.reshape(B, -1)
    out = head_pallas(sf, params['head_scale'], params['head_shift'],
                      params['lin_w'], params['lin_b'])
    return out[:, :cfg['n_classes']]


# ----------------------------- pure-JAX f32 reference ------------------------

def reference_forward(raw, cfg, x_ncl):
    def conv1d(x, w, stride, pad):
        return jax.lax.conv_general_dilated(
            x, w, window_strides=(stride,), padding=[(pad, pad)],
            dimension_numbers=('NCH', 'OIH', 'NCH'))

    def bn(x, p):
        inv = p['gamma'] / jnp.sqrt(p['var'] + BN_EPS)
        return x * inv[None, :, None] + (p['beta'] - p['mean'] * inv)[None, :, None]

    st = cfg['stem']
    x = bn(conv1d(x_ncl, raw['stem_w'], st['stride'], st['pad']), raw['stem_bn'])
    y = x
    for bc, rp in zip(cfg['blocks'], raw['blocks']):
        ys = y
        if bc['ds'] > 1:
            ys = jax.lax.reduce_window(ys, -jnp.inf, jax.lax.max,
                                       (1, 1, bc['ds']), (1, 1, bc['ds']), 'VALID')
        if 'wskip' in rp:
            ys = conv1d(ys, rp['wskip'], 1, 0)
        h = jnp.maximum(bn(conv1d(x, rp['w1'], 1, bc['pad1']), rp['bn1']), 0.0)
        h = conv1d(h, rp['w2'], bc['ds'], bc['pad2'])
        s = h + ys
        y = s
        x = jnp.maximum(bn(s, rp['bn2']), 0.0)
    xf = x.reshape(x.shape[0], -1)
    return xf @ raw['lin_w'].T + raw['lin_b']


# ----------------------------- main -------------------------------------------

if __name__ == "__main__":
    # Small, self-consistent ResNet1d configuration.
    N_CHANNELS, N_SAMPLES = 4, 64
    NET_FILTER_SIZE = [8, 16]
    NET_SEQ_LENGTH = [32, 16]
    N_CLASSES = 3
    KERNEL_SIZE = 5           # must be odd

    cfg = build_config(N_CHANNELS, N_SAMPLES, NET_FILTER_SIZE, NET_SEQ_LENGTH,
                       N_CLASSES, KERNEL_SIZE)

    key = jax.random.PRNGKey(0)
    pkey, xkey = jax.random.split(key)
    raw = init_raw_params(pkey, cfg)
    params = pack_params(raw, cfg)

    # PyTorch-layout input (B, C, L)
    x = jax.random.normal(xkey, (2, N_CHANNELS, N_SAMPLES), dtype=jnp.float32)

    fwd = jax.jit(lambda p, xx: resnet1d_forward(p, cfg, xx))
    out = jax.block_until_ready(fwd(params, x))
    assert out.shape == (2, cfg['n_classes']), out.shape
    assert bool(jnp.all(jnp.isfinite(out)))

    # Tolerance-asserted pure-JAX f32 reference (bf16 MXU operands / bf16 inter-block carry
    # introduce small, expected drift).
    ref = reference_forward(raw, cfg, x)
    err = float(jnp.max(jnp.abs(out - ref)))
    tol = 0.05 + 0.05 * float(jnp.max(jnp.abs(ref)))
    assert err < tol, (err, tol)

    print("KERNEL_OK")
</pallas_src>

<mosaic_0001>
module attributes {stable_mosaic.version = 11 : i64} {
  func.func @kernel(%arg0: i32, %arg1: memref<1x32x128xbf16, #tpu.memory_space<vmem>>, %arg2: memref<1x128xf32, #tpu.memory_space<vmem>>, %arg3: memref<1x128xf32, #tpu.memory_space<vmem>>, %arg4: memref<5x128x128xbf16, #tpu.memory_space<vmem>>, %arg5: memref<1x128xf32, #tpu.memory_space<vmem>>, %arg6: memref<1x128xf32, #tpu.memory_space<vmem>>, %arg7: memref<5x128x128xbf16, #tpu.memory_space<vmem>>, %arg8: memref<128x128xbf16, #tpu.memory_space<vmem>>, %arg9: memref<1x16x128xbf16, #tpu.memory_space<vmem>>, %arg10: memref<36x128xf32, #tpu.memory_space<vmem>>, %arg11: memref<36x128xf32, #tpu.memory_space<vmem>>, %arg12: memref<32x128xf32, #tpu.memory_space<vmem>>) attributes {dimension_semantics = [#tpu.dimension_semantics<parallel>], iteration_bounds = array<i64: 2>, scalar_prefetch = 0 : i64, scratch_operands = 3 : i64, tpu.core_type = #tpu.core_type<tc>, window_params = [{transform_indices = @transform_0, window_bounds = array<i64: 1, 32, 128>}, {pipeline_mode = #tpu.pipeline_mode<synchronous>, transform_indices = @transform_1, window_bounds = array<i64: 1, 128>}, {pipeline_mode = #tpu.pipeline_mode<synchronous>, transform_indices = @transform_2, window_bounds = array<i64: 1, 128>}, {pipeline_mode = #tpu.pipeline_mode<synchronous>, transform_indices = @transform_3, window_bounds = array<i64: 5, 128, 128>}, {pipeline_mode = #tpu.pipeline_mode<synchronous>, transform_indices = @transform_4, window_bounds = array<i64: 1, 128>}, {pipeline_mode = #tpu.pipeline_mode<synchronous>, transform_indices = @transform_5, window_bounds = array<i64: 1, 128>}, {pipeline_mode = #tpu.pipeline_mode<synchronous>, transform_indices = @transform_6, window_bounds = array<i64: 5, 128, 128>}, {pipeline_mode = #tpu.pipeline_mode<synchronous>, transform_indices = @transform_7, window_bounds = array<i64: 128, 128>}, {transform_indices = @transform_8, window_bounds = array<i64: 1, 16, 128>}]} {
    %cst = arith.constant 0.000000e+00 : f32
    %0 = vector.broadcast %cst : f32 to vector<2x128xf32>
    %c0 = arith.constant 0 : index
    %c0_0 = arith.constant 0 : index
    %1 = vector.load %arg10[%c0, %c0_0] : memref<36x128xf32, #tpu.memory_space<vmem>>, vector<2x128xf32>
    tpu.vector_store %arg10[%c0, %c0_0], %0 {strides = array<i32>} : memref<36x128xf32, #tpu.memory_space<vmem>>, vector<2x128xf32>,
    %cst_1 = arith.constant 0.000000e+00 : f32
    %2 = vector.broadcast %cst_1 : f32 to vector<2x128xf32>
    %c34 = arith.constant 34 : index
    %c0_2 = arith.constant 0 : index
    %3 = vector.load %arg10[%c34, %c0_2] : memref<36x128xf32, #tpu.memory_space<vmem>>, vector<2x128xf32>
    tpu.vector_store %arg10[%c34, %c0_2], %2 {strides = array<i32>} : memref<36x128xf32, #tpu.memory_space<vmem>>, vector<2x128xf32>,
    %cst_3 = arith.constant 0.000000e+00 : f32
    %4 = vector.broadcast %cst_3 : f32 to vector<2x128xf32>
    %c0_4 = arith.constant 0 : index
    %c0_5 = arith.constant 0 : index
    %5 = vector.load %arg11[%c0_4, %c0_5] : memref<36x128xf32, #tpu.memory_space<vmem>>, vector<2x128xf32>
    tpu.vector_store %arg11[%c0_4, %c0_5], %4 {strides = array<i32>} : memref<36x128xf32, #tpu.memory_space<vmem>>, vector<2x128xf32>,
    %cst_6 = arith.constant 0.000000e+00 : f32
    %6 = vector.broadcast %cst_6 : f32 to vector<2x128xf32>
    %c34_7 = arith.constant 34 : index
    %c0_8 = arith.constant 0 : index
    %7 = vector.load %arg11[%c34_7, %c0_8] : memref<36x128xf32, #tpu.memory_space<vmem>>, vector<2x128xf32>
    tpu.vector_store %arg11[%c34_7, %c0_8], %6 {strides = array<i32>} : memref<36x128xf32, #tpu.memory_space<vmem>>, vector<2x128xf32>,
    %c0_9 = arith.constant 0 : index
    %c0_10 = arith.constant 0 : index
    %c0_11 = arith.constant 0 : index
    %8 = vector.load %arg1[%c0_9, %c0_10, %c0_11] : memref<1x32x128xbf16, #tpu.memory_space<vmem>>, vector<1x32x128xbf16>
    %9 = vector.shape_cast %8 : vector<1x32x128xbf16> to vector<32x128xbf16>
    %10 = arith.extf %9 : vector<32x128xbf16> to vector<32x128xf32>
    %c0_12 = arith.constant 0 : index
    %c0_13 = arith.constant 0 : index
    %11 = vector.load %arg2[%c0_12, %c0_13] : memref<1x128xf32, #tpu.memory_space<vmem>>, vector<1x128xf32>
    %12 = vector.broadcast %11 : vector<1x128xf32> to vector<32x128xf32>
    %13 = arith.mulf %10, %12 : vector<32x128xf32>
    %c0_14 = arith.constant 0 : index
    %c0_15 = arith.constant 0 : index
    %14 = vector.load %arg3[%c0_14, %c0_15] : memref<1x128xf32, #tpu.memory_space<vmem>>, vector<1x128xf32>
    %15 = vector.broadcast %14 : vector<1x128xf32> to vector<32x128xf32>
    %16 = arith.addf %13, %15 : vector<32x128xf32>
    %cst_16 = arith.constant 0.000000e+00 : f32
    %17 = vector.broadcast %cst_16 : f32 to vector<32x128xf32>
    %18 = arith.maximumf %16, %17 : vector<32x128xf32>
    %c2 = arith.constant 2 : index
    %c0_17 = arith.constant 0 : index
    %19 = vector.load %arg10[%c2, %c0_17] : memref<36x128xf32, #tpu.memory_space<vmem>>, vector<32x128xf32>
    tpu.vector_store %arg10[%c2, %c0_17], %18 {strides = array<i32>} : memref<36x128xf32, #tpu.memory_space<vmem>>, vector<32x128xf32>,
    %cst_18 = arith.constant 0.000000e+00 : f32
    %20 = vector.broadcast %cst_18 : f32 to vector<32x128xf32>
    %c0_19 = arith.constant 0 : index
    %c0_20 = arith.constant 0 : index
    %21 = vector.load %arg10[%c0_19, %c0_20] : memref<36x128xf32, #tpu.memory_space<vmem>>, vector<32x128xf32>
    %22 = arith.truncf %21 : vector<32x128xf32> to vector<32x128xbf16>
    %c0_21 = arith.constant 0 : index
    %c0_22 = arith.constant 0 : index
    %c0_23 = arith.constant 0 : index
    %23 = vector.load %arg4[%c0_21, %c0_22, %c0_23] : memref<5x128x128xbf16, #tpu.memory_space<vmem>>, vector<1x128x128xbf16>
    %24 = vector.shape_cast %23 : vector<1x128x128xbf16> to vector<128x128xbf16>
    %cst_24 = arith.constant dense<0.000000e+00> : vector<32x128xf32>
    %25 = tpu.matmul %22, %24, %cst_24 {dimension_numbers = #tpu.dot_dimension_numbers<[1], [0], [0], [1], [0, 0, 1, 1], [], []>} : vector<32x128xbf16>, vector<128x128xbf16>, vector<32x128xf32> -> vector<32x128xf32>
    %26 = arith.addf %20, %25 : vector<32x128xf32>
    %c1 = arith.constant 1 : index
    %c0_25 = arith.constant 0 : index
    %27 = vector.load %arg10[%c1, %c0_25] : memref<36x128xf32, #tpu.memory_space<vmem>>, vector<32x128xf32>
    %28 = arith.truncf %27 : vector<32x128xf32> to vector<32x128xbf16>
    %c1_26 = arith.constant 1 : index
    %c0_27 = arith.constant 0 : index
    %c0_28 = arith.constant 0 : index
    %29 = vector.load %arg4[%c1_26, %c0_27, %c0_28] : memref<5x128x128xbf16, #tpu.memory_space<vmem>>, vector<1x128x128xbf16>
    %30 = vector.shape_cast %29 : vector<1x128x128xbf16> to vector<128x128xbf16>
    %cst_29 = arith.constant dense<0.000000e+00> : vector<32x128xf32>
    %31 = tpu.matmul %28, %30, %cst_29 {dimension_numbers = #tpu.dot_dimension_numbers<[1], [0], [0], [1], [0, 0, 1, 1], [], []>} : vector<32x128xbf16>, vector<128x128xbf16>, vector<32x128xf32> -> vector<32x128xf32>
    %32 = arith.addf %26, %31 : vector<32x128xf32>
    %c2_30 = arith.constant 2 : index
    %c0_31 = arith.constant 0 : index
    %33 = vector.load %arg10[%c2_30, %c0_31] : memref<36x128xf32, #tpu.memory_space<vmem>>, vector<32x128xf32>
    %34 = arith.truncf %33 : vector<32x128xf32> to vector<32x128xbf16>
    %c2_32 = arith.constant 2 : index
    %c0_33 = arith.constant 0 : index
    %c0_34 = arith.constant 0 : index
    %35 = vector.load %arg4[%c2_32, %c0_33, %c0_34] : memref<5x128x128xbf16, #tpu.memory_space<vmem>>, vector<1x128x128xbf16>
    %36 = vector.shape_cast %35 : vector<1x128x128xbf16> to vector<128x128xbf16>
    %cst_35 = arith.constant dense<0.000000e+00> : vector<32x128xf32>
    %37 = tpu.matmul %34, %36, %cst_35 {dimension_numbers = #tpu.dot_dimension_numbers<[1], [0], [0], [1], [0, 0, 1, 1], [], []>} : vector<32x128xbf16>, vector<128x128xbf16>, vector<32x128xf32> -> vector<32x128xf32>
    %38 = arith.addf %32, %37 : vector<32x128xf32>
    %c3 = arith.constant 3 : index
    %c0_36 = arith.constant 0 : index
    %39 = vector.load %arg10[%c3, %c0_36] : memref<36x128xf32, #tpu.memory_space<vmem>>, vector<32x128xf32>
    %40 = arith.truncf %39 : vector<32x128xf32> to vector<32x128xbf16>
    %c3_37 = arith.constant 3 : index
    %c0_38 = arith.constant 0 : index
    %c0_39 = arith.constant 0 : index
    %41 = vector.load %arg4[%c3_37, %c0_38, %c0_39] : memref<5x128x128xbf16, #tpu.memory_space<vmem>>, vector<1x128x128xbf16>
    %42 = vector.shape_cast %41 : vector<1x128x128xbf16> to vector<128x128xbf16>
    %cst_40 = arith.constant dense<0.000000e+00> : vector<32x128xf32>
    %43 = tpu.matmul %40, %42, %cst_40 {dimension_numbers = #tpu.dot_dimension_numbers<[1], [0], [0], [1], [0, 0, 1, 1], [], []>} : vector<32x128xbf16>, vector<128x128xbf16>, vector<32x128xf32> -> vector<32x128xf32>
    %44 = arith.addf %38, %43 : vector<32x128xf32>
    %c4 = arith.constant 4 : index
    %c0_41 = arith.constant 0 : index
    %45 = vector.load %arg10[%c4, %c0_41] : memref<36x128xf32, #tpu.memory_space<vmem>>, vector<32x128xf32>
    %46 = arith.truncf %45 : vector<32x128xf32> to vector<32x128xbf16>
    %c4_42 = arith.constant 4 : index
    %c0_43 = arith.constant 0 : index
    %c0_44 = arith.constant 0 : index
    %47 = vector.load %arg4[%c4_42, %c0_43, %c0_44] : memref<5x128x128xbf16, #tpu.memory_space<vmem>>, vector<1x128x128xbf16>
    %48 = vector.shape_cast %47 : vector<1x128x128xbf16> to vector<128x128xbf16>
    %cst_45 = arith.constant dense<0.000000e+00> : vector<32x128xf32>
    %49 = tpu.matmul %46, %48, %cst_45 {dimension_numbers = #tpu.dot_dimension_numbers<[1], [0], [0], [1], [0, 0, 1, 1], [], []>} : vector<32x128xbf16>, vector<128x128xbf16>, vector<32x128xf32> -> vector<32x128xf32>
    %50 = arith.addf %44, %49 : vector<32x128xf32>
    %c0_46 = arith.constant 0 : index
    %c0_47 = arith.constant 0 : index
    %51 = vector.load %arg5[%c0_46, %c0_47] : memref<1x128xf32, #tpu.memory_space<vmem>>, vector<1x128xf32>
    %52 = vector.broadcast %51 : vector<1x128xf32> to vector<32x128xf32>
    %53 = arith.mulf %50, %52 : vector<32x128xf32>
    %c0_48 = arith.constant 0 : index
    %c0_49 = arith.constant 0 : index
    %54 = vector.load %arg6[%c0_48, %c0_49] : memref<1x128xf32, #tpu.memory_space<vmem>>, vector<1x128xf32>
    %55 = vector.broadcast %54 : vector<1x128xf32> to vector<32x128xf32>
    %56 = arith.addf %53, %55 : vector<32x128xf32>
    %cst_50 = arith.constant 0.000000e+00 : f32
    %57 = vector.broadcast %cst_50 : f32 to vector<32x128xf32>
    %58 = arith.maximumf %56, %57 : vector<32x128xf32>
    %c2_51 = arith.constant 2 : index
    %c0_52 = arith.constant 0 : index
    %59 = vector.load %arg11[%c2_51, %c0_52] : memref<36x128xf32, #tpu.memory_space<vmem>>, vector<32x128xf32>
    tpu.vector_store %arg11[%c2_51, %c0_52], %58 {strides = array<i32>} : memref<36x128xf32, #tpu.memory_space<vmem>>, vector<32x128xf32>,
    %cst_53 = arith.constant 0.000000e+00 : f32
    %60 = vector.broadcast %cst_53 : f32 to vector<16x128xf32>
    %c0_54 = arith.constant 0 : index
    %c0_55 = arith.constant 0 : index
    %61 = tpu.strided_load %arg11[%c0_54, %c0_55] {strides = array<i32: 2, 1>} : memref<36x128xf32, #tpu.memory_space<vmem>>, vector<16x128xf32>
    %62 = arith.truncf %61 : vector<16x128xf32> to vector<16x128xbf16>
    %c0_56 = arith.constant 0 : index
    %c0_57 = arith.constant 0 : index
    %c0_58 = arith.constant 0 : index
    %63 = vector.load %arg7[%c0_56, %c0_57, %c0_58] : memref<5x128x128xbf16, #tpu.memory_space<vmem>>, vector<1x128x128xbf16>
    %64 = vector.shape_cast %63 : vector<1x128x128xbf16> to vector<128x128xbf16>
    %cst_59 = arith.constant dense<0.000000e+00> : vector<16x128xf32>
    %65 = tpu.matmul %62, %64, %cst_59 {dimension_numbers = #tpu.dot_dimension_numbers<[1], [0], [0], [1], [0, 0, 1, 1], [], []>} : vector<16x128xbf16>, vector<128x128xbf16>, vector<16x128xf32> -> vector<16x128xf32>
    %66 = arith.addf %60, %65 : vector<16x128xf32>
    %c1_60 = arith.constant 1 : index
    %c0_61 = arith.constant 0 : index
    %67 = tpu.strided_load %arg11[%c1_60, %c0_61] {strides = array<i32: 2, 1>} : memref<36x128xf32, #tpu.memory_space<vmem>>, vector<16x128xf32>
    %68 = arith.truncf %67 : vector<16x128xf32> to vector<16x128xbf16>
    %c1_62 = arith.constant 1 : index
    %c0_63 = arith.constant 0 : index
    %c0_64 = arith.constant 0 : index
    %69 = vector.load %arg7[%c1_62, %c0_63, %c0_64] : memref<5x128x128xbf16, #tpu.memory_space<vmem>>, vector<1x128x128xbf16>
    %70 = vector.shape_cast %69 : vector<1x128x128xbf16> to vector<128x128xbf16>
    %cst_65 = arith.constant dense<0.000000e+00> : vector<16x128xf32>
    %71 = tpu.matmul %68, %70, %cst_65 {dimension_numbers = #tpu.dot_dimension_numbers<[1], [0], [0], [1], [0, 0, 1, 1], [], []>} : vector<16x128xbf16>, vector<128x128xbf16>, vector<16x128xf32> -> vector<16x128xf32>
    %72 = arith.addf %66, %71 : vector<16x128xf32>
    %c2_66 = arith.constant 2 : index
    %c0_67 = arith.constant 0 : index
    %73 = tpu.strided_load %arg11[%c2_66, %c0_67] {strides = array<i32: 2, 1>} : memref<36x128xf32, #tpu.memory_space<vmem>>, vector<16x128xf32>
    %74 = arith.truncf %73 : vector<16x128xf32> to vector<16x128xbf16>
    %c2_68 = arith.constant 2 : index
    %c0_69 = arith.constant 0 : index
    %c0_70 = arith.constant 0 : index
    %75 = vector.load %arg7[%c2_68, %c0_69, %c0_70] : memref<5x128x128xbf16, #tpu.memory_space<vmem>>, vector<1x128x128xbf16>
    %76 = vector.shape_cast %75 : vector<1x128x128xbf16> to vector<128x128xbf16>
    %cst_71 = arith.constant dense<0.000000e+00> : vector<16x128xf32>
    %77 = tpu.matmul %74, %76, %cst_71 {dimension_numbers = #tpu.dot_dimension_numbers<[1], [0], [0], [1], [0, 0, 1, 1], [], []>} : vector<16x128xbf16>, vector<128x128xbf16>, vector<16x128xf32> -> vector<16x128xf32>
    %78 = arith.addf %72, %77 : vector<16x128xf32>
    %c3_72 = arith.constant 3 : index
    %c0_73 = arith.constant 0 : index
    %79 = tpu.strided_load %arg11[%c3_72, %c0_73] {strides = array<i32: 2, 1>} : memref<36x128xf32, #tpu.memory_space<vmem>>, vector<16x128xf32>
    %80 = arith.truncf %79 : vector<16x128xf32> to vector<16x128xbf16>
    %c3_74 = arith.constant 3 : index
    %c0_75 = arith.constant 0 : index
    %c0_76 = arith.constant 0 : index
    %81 = vector.load %arg7[%c3_74, %c0_75, %c0_76] : memref<5x128x128xbf16, #tpu.memory_space<vmem>>, vector<1x128x128xbf16>
    %82 = vector.shape_cast %81 : vector<1x128x128xbf16> to vector<128x128xbf16>
    %cst_77 = arith.constant dense<0.000000e+00> : vector<16x128xf32>
    %83 = tpu.matmul %80, %82, %cst_77 {dimension_numbers = #tpu.dot_dimension_numbers<[1], [0], [0], [1], [0, 0, 1, 1], [], []>} : vector<16x128xbf16>, vector<128x128xbf16>, vector<16x128xf32> -> vector<16x128xf32>
    %84 = arith.addf %78, %83 : vector<16x128xf32>
    %c4_78 = arith.constant 4 : index
    %c0_79 = arith.constant 0 : index
    %85 = tpu.strided_load %arg11[%c4_78, %c0_79] {strides = array<i32: 2, 1>} : memref<36x128xf32, #tpu.memory_space<vmem>>, vector<16x128xf32>
    %86 = arith.truncf %85 : vector<16x128xf32> to vector<16x128xbf16>
    %c4_80 = arith.constant 4 : index
    %c0_81 = arith.constant 0 : index
    %c0_82 = arith.constant 0 : index
    %87 = vector.load %arg7[%c4_80, %c0_81, %c0_82] : memref<5x128x128xbf16, #tpu.memory_space<vmem>>, vector<1x128x128xbf16>
    %88 = vector.shape_cast %87 : vector<1x128x128xbf16> to vector<128x128xbf16>
    %cst_83 = arith.constant dense<0.000000e+00> : vector<16x128xf32>
    %89 = tpu.matmul %86, %88, %cst_83 {dimension_numbers = #tpu.dot_dimension_numbers<[1], [0], [0], [1], [0, 0, 1, 1], [], []>} : vector<16x128xbf16>, vector<128x128xbf16>, vector<16x128xf32> -> vector<16x128xf32>
    %90 = arith.addf %84, %89 : vector<16x128xf32>
    %c0_84 = arith.constant 0 : index
    %c0_85 = arith.constant 0 : index
    %91 = vector.load %arg12[%c0_84, %c0_85] : memref<32x128xf32, #tpu.memory_space<vmem>>, vector<32x128xf32>
    tpu.vector_store %arg12[%c0_84, %c0_85], %10 {strides = array<i32>} : memref<32x128xf32, #tpu.memory_space<vmem>>, vector<32x128xf32>,
    %c0_86 = arith.constant 0 : index
    %c0_87 = arith.constant 0 : index
    %92 = tpu.strided_load %arg12[%c0_86, %c0_87] {strides = array<i32: 2, 1>} : memref<32x128xf32, #tpu.memory_space<vmem>>, vector<16x128xf32>
    %c1_88 = arith.constant 1 : index
    %c0_89 = arith.constant 0 : index
    %93 = tpu.strided_load %arg12[%c1_88, %c0_89] {strides = array<i32: 2, 1>} : memref<32x128xf32, #tpu.memory_space<vmem>>, vector<16x128xf32>
    %94 = arith.maximumf %92, %93 : vector<16x128xf32>
    %95 = arith.truncf %94 : vector<16x128xf32> to vector<16x128xbf16>
    %c0_90 = arith.constant 0 : index
    %c0_91 = arith.constant 0 : index
    %96 = vector.load %arg8[%c0_90, %c0_91] : memref<128x128xbf16, #tpu.memory_space<vmem>>, vector<128x128xbf16>
    %cst_92 = arith.constant dense<0.000000e+00> : vector<16x128xf32>
    %97 = tpu.matmul %95, %96, %cst_92 {dimension_numbers = #tpu.dot_dimension_numbers<[1], [0], [0], [1], [0, 0, 1, 1], [], []>} : vector<16x128xbf16>, vector<128x128xbf16>, vector<16x128xf32> -> vector<16x128xf32>
    %98 = arith.addf %90, %97 : vector<16x128xf32>
    %99 = arith.truncf %98 : vector<16x128xf32> to vector<16x128xbf16>
    %c0_93 = arith.constant 0 : index
    %c0_94 = arith.constant 0 : index
    %c0_95 = arith.constant 0 : index
    %100 = vector.load %arg9[%c0_93, %c0_94, %c0_95] : memref<1x16x128xbf16, #tpu.memory_space<vmem>>, vector<1x16x128xbf16>
    %101 = vector.shape_cast %100 : vector<1x16x128xbf16> to vector<16x128xbf16>
    %102 = vector.shape_cast %99 : vector<16x128xbf16> to vector<1x16x128xbf16>
    tpu.vector_store %arg9[%c0_93, %c0_94, %c0_95], %102 {strides = array<i32>} : memref<1x16x128xbf16, #tpu.memory_space<vmem>>, vector<1x16x128xbf16>,
    return
  }
  func.func @transform_0(%arg0: i32) -> (i32, i32, i32) {
    %c0_i32 = arith.constant 0 : i32
    %c0_i32_0 = arith.constant 0 : i32
    %c0_i32_1 = arith.constant 0 : i32
    return %arg0, %c0_i32, %c0_i32_0 : i32, i32, i32
  }
  func.func @transform_1(%arg0: i32) -> (i32, i32) {
    %c0_i32 = arith.constant 0 : i32
    %c0_i32_0 = arith.constant 0 : i32
    %c0_i32_1 = arith.constant 0 : i32
    return %c0_i32, %c0_i32_0 : i32, i32
  }
  func.func @transform_2(%arg0: i32) -> (i32, i32) {
    %c0_i32 = arith.constant 0 : i32
    %c0_i32_0 = arith.constant 0 : i32
    %c0_i32_1 = arith.constant 0 : i32
    return %c0_i32, %c0_i32_0 : i32, i32
  }
  func.func @transform_3(%arg0: i32) -> (i32, i32, i32) {
    %c0_i32 = arith.constant 0 : i32
    %c0_i32_0 = arith.constant 0 : i32
    %c0_i32_1 = arith.constant 0 : i32
    %c0_i32_2 = arith.constant 0 : i32
    return %c0_i32, %c0_i32_0, %c0_i32_1 : i32, i32, i32
  }
  func.func @transform_4(%arg0: i32) -> (i32, i32) {
    %c0_i32 = arith.constant 0 : i32
    %c0_i32_0 = arith.constant 0 : i32
    %c0_i32_1 = arith.constant 0 : i32
    return %c0_i32, %c0_i32_0 : i32, i32
  }
  func.func @transform_5(%arg0: i32) -> (i32, i32) {
    %c0_i32 = arith.constant 0 : i32
    %c0_i32_0 = arith.constant 0 : i32
    %c0_i32_1 = arith.constant 0 : i32
    return %c0_i32, %c0_i32_0 : i32, i32
  }
  func.func @transform_6(%arg0: i32) -> (i32, i32, i32) {
    %c0_i32 = arith.constant 0 : i32
    %c0_i32_0 = arith.constant 0 : i32
    %c0_i32_1 = arith.constant 0 : i32
    %c0_i32_2 = arith.constant 0 : i32
    return %c0_i32, %c0_i32_0, %c0_i32_1 : i32, i32, i32
  }
  func.func @transform_7(%arg0: i32) -> (i32, i32) {
    %c0_i32 = arith.constant 0 : i32
    %c0_i32_0 = arith.constant 0 : i32
    %c0_i32_1 = arith.constant 0 : i32
    return %c0_i32, %c0_i32_0 : i32, i32
  }
  func.func @transform_8(%arg0: i32) -> (i32, i32, i32) {
    %c0_i32 = arith.constant 0 : i32
    %c0_i32_0 = arith.constant 0 : i32
    %c0_i32_1 = arith.constant 0 : i32
    return %arg0, %c0_i32, %c0_i32_0 : i32, i32, i32
  }
}

module attributes {stable_mosaic.version = 11 : i64} {
  func.func @kernel(%arg0: i32, %arg1: memref<1x64x128xf32, #tpu.memory_space<vmem>>, %arg2: memref<5x128x128xbf16, #tpu.memory_space<vmem>>, %arg3: memref<1x128xf32, #tpu.memory_space<vmem>>, %arg4: memref<1x128xf32, #tpu.memory_space<vmem>>, %arg5: memref<5x128x128xbf16, #tpu.memory_space<vmem>>, %arg6: memref<1x128xf32, #tpu.memory_space<vmem>>, %arg7: memref<1x128xf32, #tpu.memory_space<vmem>>, %arg8: memref<5x128x128xbf16, #tpu.memory_space<vmem>>, %arg9: memref<1x32x128xbf16, #tpu.memory_space<vmem>>, %arg10: memref<68x128xf32, #tpu.memory_space<vmem>>, %arg11: memref<36x128xf32, #tpu.memory_space<vmem>>, %arg12: memref<36x128xf32, #tpu.memory_space<vmem>>) attributes {dimension_semantics = [#tpu.dimension_semantics<parallel>], iteration_bounds = array<i64: 2>, scalar_prefetch = 0 : i64, scratch_operands = 3 : i64, tpu.core_type = #tpu.core_type<tc>, window_params = [{transform_indices = @transform_0, window_bounds = array<i64: 1, 64, 128>}, {pipeline_mode = #tpu.pipeline_mode<synchronous>, transform_indices = @transform_1, window_bounds = array<i64: 5, 128, 128>}, {pipeline_mode = #tpu.pipeline_mode<synchronous>, transform_indices = @transform_2, window_bounds = array<i64: 1, 128>}, {pipeline_mode = #tpu.pipeline_mode<synchronous>, transform_indices = @transform_3, window_bounds = array<i64: 1, 128>}, {pipeline_mode = #tpu.pipeline_mode<synchronous>, transform_indices = @transform_4, window_bounds = array<i64: 5, 128, 128>}, {pipeline_mode = #tpu.pipeline_mode<synchronous>, transform_indices = @transform_5, window_bounds = array<i64: 1, 128>}, {pipeline_mode = #tpu.pipeline_mode<synchronous>, transform_indices = @transform_6, window_bounds = array<i64: 1, 128>}, {pipeline_mode = #tpu.pipeline_mode<synchronous>, transform_indices = @transform_7, window_bounds = array<i64: 5, 128, 128>}, {transform_indices = @transform_8, window_bounds = array<i64: 1, 32, 128>}]} {
    %cst = arith.constant 0.000000e+00 : f32
    %0 = vector.broadcast %cst : f32 to vector<2x128xf32>
    %c0 = arith.constant 0 : index
    %c0_0 = arith.constant 0 : index
    %1 = vector.load %arg10[%c0, %c0_0] : memref<68x128xf32, #tpu.memory_space<vmem>>, vector<2x128xf32>
    tpu.vector_store %arg10[%c0, %c0_0], %0 {strides = array<i32>} : memref<68x128xf32, #tpu.memory_space<vmem>>, vector<2x128xf32>,
    %cst_1 = arith.constant 0.000000e+00 : f32
    %2 = vector.broadcast %cst_1 : f32 to vector<2x128xf32>
    %c66 = arith.constant 66 : index
    %c0_2 = arith.constant 0 : index
    %3 = vector.load %arg10[%c66, %c0_2] : memref<68x128xf32, #tpu.memory_space<vmem>>, vector<2x128xf32>
    tpu.vector_store %arg10[%c66, %c0_2], %2 {strides = array<i32>} : memref<68x128xf32, #tpu.memory_space<vmem>>, vector<2x128xf32>,
    %cst_3 = arith.constant 0.000000e+00 : f32
    %4 = vector.broadcast %cst_3 : f32 to vector<2x128xf32>
    %c0_4 = arith.constant 0 : index
    %c0_5 = arith.constant 0 : index
    %5 = vector.load %arg11[%c0_4, %c0_5] : memref<36x128xf32, #tpu.memory_space<vmem>>, vector<2x128xf32>
    tpu.vector_store %arg11[%c0_4, %c0_5], %4 {strides = array<i32>} : memref<36x128xf32, #tpu.memory_space<vmem>>, vector<2x128xf32>,
    %cst_6 = arith.constant 0.000000e+00 : f32
    %6 = vector.broadcast %cst_6 : f32 to vector<2x128xf32>
    %c34 = arith.constant 34 : index
    %c0_7 = arith.constant 0 : index
    %7 = vector.load %arg11[%c34, %c0_7] : memref<36x128xf32, #tpu.memory_space<vmem>>, vector<2x128xf32>
    tpu.vector_store %arg11[%c34, %c0_7], %6 {strides = array<i32>} : memref<36x128xf32, #tpu.memory_space<vmem>>, vector<2x128xf32>,
    %cst_8 = arith.constant 0.000000e+00 : f32
    %8 = vector.broadcast %cst_8 : f32 to vector<2x128xf32>
    %c0_9 = arith.constant 0 : index
    %c0_10 = arith.constant 0 : index
    %9 = vector.load %arg12[%c0_9, %c0_10] : memref<36x128xf32, #tpu.memory_space<vmem>>, vector<2x128xf32>
    tpu.vector_store %arg12[%c0_9, %c0_10], %8 {strides = array<i32>} : memref<36x128xf32, #tpu.memory_space<vmem>>, vector<2x128xf32>,
    %cst_11 = arith.constant 0.000000e+00 : f32
    %10 = vector.broadcast %cst_11 : f32 to vector<2x128xf32>
    %c34_12 = arith.constant 34 : index
    %c0_13 = arith.constant 0 : index
    %11 = vector.load %arg12[%c34_12, %c0_13] : memref<36x128xf32, #tpu.memory_space<vmem>>, vector<2x128xf32>
    tpu.vector_store %arg12[%c34_12, %c0_13], %10 {strides = array<i32>} : memref<36x128xf32, #tpu.memory_space<vmem>>, vector<2x128xf32>,
    %c0_14 = arith.constant 0 : index
    %c0_15 = arith.constant 0 : index
    %c0_16 = arith.constant 0 : index
    %12 = vector.load %arg1[%c0_14, %c0_15, %c0_16] : memref<1x64x128xf32, #tpu.memory_space<vmem>>, vector<1x64x128xf32>
    %13 = vector.shape_cast %12 : vector<1x64x128xf32> to vector<64x128xf32>
    %c2 = arith.constant 2 : index
    %c0_17 = arith.constant 0 : index
    %14 = vector.load %arg10[%c2, %c0_17] : memref<68x128xf32, #tpu.memory_space<vmem>>, vector<64x128xf32>
    tpu.vector_store %arg10[%c2, %c0_17], %13 {strides = array<i32>} : memref<68x128xf32, #tpu.memory_space<vmem>>, vector<64x128xf32>,
    %cst_18 = arith.constant 0.000000e+00 : f32
    %15 = vector.broadcast %cst_18 : f32 to vector<32x128xf32>
    %c0_19 = arith.constant 0 : index
    %c0_20 = arith.constant 0 : index
    %16 = tpu.strided_load %arg10[%c0_19, %c0_20] {strides = array<i32: 2, 1>} : memref<68x128xf32, #tpu.memory_space<vmem>>, vector<32x128xf32>
    %17 = arith.truncf %16 : vector<32x128xf32> to vector<32x128xbf16>
    %c0_21 = arith.constant 0 : index
    %c0_22 = arith.constant 0 : index
    %c0_23 = arith.constant 0 : index
    %18 = vector.load %arg2[%c0_21, %c0_22, %c0_23] : memref<5x128x128xbf16, #tpu.memory_space<vmem>>, vector<1x128x128xbf16>
    %19 = vector.shape_cast %18 : vector<1x128x128xbf16> to vector<128x128xbf16>
    %cst_24 = arith.constant dense<0.000000e+00> : vector<32x128xf32>
    %20 = tpu.matmul %17, %19, %cst_24 {dimension_numbers = #tpu.dot_dimension_numbers<[1], [0], [0], [1], [0, 0, 1, 1], [], []>} : vector<32x128xbf16>, vector<128x128xbf16>, vector<32x128xf32> -> vector<32x128xf32>
    %21 = arith.addf %15, %20 : vector<32x128xf32>
    %c1 = arith.constant 1 : index
    %c0_25 = arith.constant 0 : index
    %22 = tpu.strided_load %arg10[%c1, %c0_25] {strides = array<i32: 2, 1>} : memref<68x128xf32, #tpu.memory_space<vmem>>, vector<32x128xf32>
    %23 = arith.truncf %22 : vector<32x128xf32> to vector<32x128xbf16>
    %c1_26 = arith.constant 1 : index
    %c0_27 = arith.constant 0 : index
    %c0_28 = arith.constant 0 : index
    %24 = vector.load %arg2[%c1_26, %c0_27, %c0_28] : memref<5x128x128xbf16, #tpu.memory_space<vmem>>, vector<1x128x128xbf16>
    %25 = vector.shape_cast %24 : vector<1x128x128xbf16> to vector<128x128xbf16>
    %cst_29 = arith.constant dense<0.000000e+00> : vector<32x128xf32>
    %26 = tpu.matmul %23, %25, %cst_29 {dimension_numbers = #tpu.dot_dimension_numbers<[1], [0], [0], [1], [0, 0, 1, 1], [], []>} : vector<32x128xbf16>, vector<128x128xbf16>, vector<32x128xf32> -> vector<32x128xf32>
    %27 = arith.addf %21, %26 : vector<32x128xf32>
    %c2_30 = arith.constant 2 : index
    %c0_31 = arith.constant 0 : index
    %28 = tpu.strided_load %arg10[%c2_30, %c0_31] {strides = array<i32: 2, 1>} : memref<68x128xf32, #tpu.memory_space<vmem>>, vector<32x128xf32>
    %29 = arith.truncf %28 : vector<32x128xf32> to vector<32x128xbf16>
    %c2_32 = arith.constant 2 : index
    %c0_33 = arith.constant 0 : index
    %c0_34 = arith.constant 0 : index
    %30 = vector.load %arg2[%c2_32, %c0_33, %c0_34] : memref<5x128x128xbf16, #tpu.memory_space<vmem>>, vector<1x128x128xbf16>
    %31 = vector.shape_cast %30 : vector<1x128x128xbf16> to vector<128x128xbf16>
    %cst_35 = arith.constant dense<0.000000e+00> : vector<32x128xf32>
    %32 = tpu.matmul %29, %31, %cst_35 {dimension_numbers = #tpu.dot_dimension_numbers<[1], [0], [0], [1], [0, 0, 1, 1], [], []>} : vector<32x128xbf16>, vector<128x128xbf16>, vector<32x128xf32> -> vector<32x128xf32>
    %33 = arith.addf %27, %32 : vector<32x128xf32>
    %c3 = arith.constant 3 : index
    %c0_36 = arith.constant 0 : index
    %34 = tpu.strided_load %arg10[%c3, %c0_36] {strides = array<i32: 2, 1>} : memref<68x128xf32, #tpu.memory_space<vmem>>, vector<32x128xf32>
    %35 = arith.truncf %34 : vector<32x128xf32> to vector<32x128xbf16>
    %c3_37 = arith.constant 3 : index
    %c0_38 = arith.constant 0 : index
    %c0_39 = arith.constant 0 : index
    %36 = vector.load %arg2[%c3_37, %c0_38, %c0_39] : memref<5x128x128xbf16, #tpu.memory_space<vmem>>, vector<1x128x128xbf16>
    %37 = vector.shape_cast %36 : vector<1x128x128xbf16> to vector<128x128xbf16>
    %cst_40 = arith.constant dense<0.000000e+00> : vector<32x128xf32>
    %38 = tpu.matmul %35, %37, %cst_40 {dimension_numbers = #tpu.dot_dimension_numbers<[1], [0], [0], [1], [0, 0, 1, 1], [], []>} : vector<32x128xbf16>, vector<128x128xbf16>, vector<32x128xf32> -> vector<32x128xf32>
    %39 = arith.addf %33, %38 : vector<32x128xf32>
    %c4 = arith.constant 4 : index
    %c0_41 = arith.constant 0 : index
    %40 = tpu.strided_load %arg10[%c4, %c0_41] {strides = array<i32: 2, 1>} : memref<68x128xf32, #tpu.memory_space<vmem>>, vector<32x128xf32>
    %41 = arith.truncf %40 : vector<32x128xf32> to vector<32x128xbf16>
    %c4_42 = arith.constant 4 : index
    %c0_43 = arith.constant 0 : index
    %c0_44 = arith.constant 0 : index
    %42 = vector.load %arg2[%c4_42, %c0_43, %c0_44] : memref<5x128x128xbf16, #tpu.memory_space<vmem>>, vector<1x128x128xbf16>
    %43 = vector.shape_cast %42 : vector<1x128x128xbf16> to vector<128x128xbf16>
    %cst_45 = arith.constant dense<0.000000e+00> : vector<32x128xf32>
    %44 = tpu.matmul %41, %43, %cst_45 {dimension_numbers = #tpu.dot_dimension_numbers<[1], [0], [0], [1], [0, 0, 1, 1], [], []>} : vector<32x128xbf16>, vector<128x128xbf16>, vector<32x128xf32> -> vector<32x128xf32>
    %45 = arith.addf %39, %44 : vector<32x128xf32>
    %c0_46 = arith.constant 0 : index
    %c0_47 = arith.constant 0 : index
    %46 = vector.load %arg3[%c0_46, %c0_47] : memref<1x128xf32, #tpu.memory_space<vmem>>, vector<1x128xf32>
    %47 = vector.broadcast %46 : vector<1x128xf32> to vector<32x128xf32>
    %48 = arith.mulf %45, %47 : vector<32x128xf32>
    %c0_48 = arith.constant 0 : index
    %c0_49 = arith.constant 0 : index
    %49 = vector.load %arg4[%c0_48, %c0_49] : memref<1x128xf32, #tpu.memory_space<vmem>>, vector<1x128xf32>
    %50 = vector.broadcast %49 : vector<1x128xf32> to vector<32x128xf32>
    %51 = arith.addf %48, %50 : vector<32x128xf32>
    %c2_50 = arith.constant 2 : index
    %c0_51 = arith.constant 0 : index
    %52 = vector.load %arg11[%c2_50, %c0_51] : memref<36x128xf32, #tpu.memory_space<vmem>>, vector<32x128xf32>
    tpu.vector_store %arg11[%c2_50, %c0_51], %51 {strides = array<i32>} : memref<36x128xf32, #tpu.memory_space<vmem>>, vector<32x128xf32>,
    %cst_52 = arith.constant 0.000000e+00 : f32
    %53 = vector.broadcast %cst_52 : f32 to vector<32x128xf32>
    %c0_53 = arith.constant 0 : index
    %c0_54 = arith.constant 0 : index
    %54 = vector.load %arg11[%c0_53, %c0_54] : memref<36x128xf32, #tpu.memory_space<vmem>>, vector<32x128xf32>
    %55 = arith.truncf %54 : vector<32x128xf32> to vector<32x128xbf16>
    %c0_55 = arith.constant 0 : index
    %c0_56 = arith.constant 0 : index
    %c0_57 = arith.constant 0 : index
    %56 = vector.load %arg5[%c0_55, %c0_56, %c0_57] : memref<5x128x128xbf16, #tpu.memory_space<vmem>>, vector<1x128x128xbf16>
    %57 = vector.shape_cast %56 : vector<1x128x128xbf16> to vector<128x128xbf16>
    %cst_58 = arith.constant dense<0.000000e+00> : vector<32x128xf32>
    %58 = tpu.matmul %55, %57, %cst_58 {dimension_numbers = #tpu.dot_dimension_numbers<[1], [0], [0], [1], [0, 0, 1, 1], [], []>} : vector<32x128xbf16>, vector<128x128xbf16>, vector<32x128xf32> -> vector<32x128xf32>
    %59 = arith.addf %53, %58 : vector<32x128xf32>
    %c1_59 = arith.constant 1 : index
    %c0_60 = arith.constant 0 : index
    %60 = vector.load %arg11[%c1_59, %c0_60] : memref<36x128xf32, #tpu.memory_space<vmem>>, vector<32x128xf32>
    %61 = arith.truncf %60 : vector<32x128xf32> to vector<32x128xbf16>
    %c1_61 = arith.constant 1 : index
    %c0_62 = arith.constant 0 : index
    %c0_63 = arith.constant 0 : index
    %62 = vector.load %arg5[%c1_61, %c0_62, %c0_63] : memref<5x128x128xbf16, #tpu.memory_space<vmem>>, vector<1x128x128xbf16>
    %63 = vector.shape_cast %62 : vector<1x128x128xbf16> to vector<128x128xbf16>
    %cst_64 = arith.constant dense<0.000000e+00> : vector<32x128xf32>
    %64 = tpu.matmul %61, %63, %cst_64 {dimension_numbers = #tpu.dot_dimension_numbers<[1], [0], [0], [1], [0, 0, 1, 1], [], []>} : vector<32x128xbf16>, vector<128x128xbf16>, vector<32x128xf32> -> vector<32x128xf32>
    %65 = arith.addf %59, %64 : vector<32x128xf32>
    %c2_65 = arith.constant 2 : index
    %c0_66 = arith.constant 0 : index
    %66 = vector.load %arg11[%c2_65, %c0_66] : memref<36x128xf32, #tpu.memory_space<vmem>>, vector<32x128xf32>
    %67 = arith.truncf %66 : vector<32x128xf32> to vector<32x128xbf16>
    %c2_67 = arith.constant 2 : index
    %c0_68 = arith.constant 0 : index
    %c0_69 = arith.constant 0 : index
    %68 = vector.load %arg5[%c2_67, %c0_68, %c0_69] : memref<5x128x128xbf16, #tpu.memory_space<vmem>>, vector<1x128x128xbf16>
    %69 = vector.shape_cast %68 : vector<1x128x128xbf16> to vector<128x128xbf16>
    %cst_70 = arith.constant dense<0.000000e+00> : vector<32x128xf32>
    %70 = tpu.matmul %67, %69, %cst_70 {dimension_numbers = #tpu.dot_dimension_numbers<[1], [0], [0], [1], [0, 0, 1, 1], [], []>} : vector<32x128xbf16>, vector<128x128xbf16>, vector<32x128xf32> -> vector<32x128xf32>
    %71 = arith.addf %65, %70 : vector<32x128xf32>
    %c3_71 = arith.constant 3 : index
    %c0_72 = arith.constant 0 : index
    %72 = vector.load %arg11[%c3_71, %c0_72] : memref<36x128xf32, #tpu.memory_space<vmem>>, vector<32x128xf32>
    %73 = arith.truncf %72 : vector<32x128xf32> to vector<32x128xbf16>
    %c3_73 = arith.constant 3 : index
    %c0_74 = arith.constant 0 : index
    %c0_75 = arith.constant 0 : index
    %74 = vector.load %arg5[%c3_73, %c0_74, %c0_75] : memref<5x128x128xbf16, #tpu.memory_space<vmem>>, vector<1x128x128xbf16>
    %75 = vector.shape_cast %74 : vector<1x128x128xbf16> to vector<128x128xbf16>
    %cst_76 = arith.constant dense<0.000000e+00> : vector<32x128xf32>
    %76 = tpu.matmul %73, %75, %cst_76 {dimension_numbers = #tpu.dot_dimension_numbers<[1], [0], [0], [1], [0, 0, 1, 1], [], []>} : vector<32x128xbf16>, vector<128x128xbf16>, vector<32x128xf32> -> vector<32x128xf32>
    %77 = arith.addf %71, %76 : vector<32x128xf32>
    %c4_77 = arith.constant 4 : index
    %c0_78 = arith.constant 0 : index
    %78 = vector.load %arg11[%c4_77, %c0_78] : memref<36x128xf32, #tpu.memory_space<vmem>>, vector<32x128xf32>
    %79 = arith.truncf %78 : vector<32x128xf32> to vector<32x128xbf16>
    %c4_79 = arith.constant 4 : index
    %c0_80 = arith.constant 0 : index
    %c0_81 = arith.constant 0 : index
    %80 = vector.load %arg5[%c4_79, %c0_80, %c0_81] : memref<5x128x128xbf16, #tpu.memory_space<vmem>>, vector<1x128x128xbf16>
    %81 = vector.shape_cast %80 : vector<1x128x128xbf16> to vector<128x128xbf16>
    %cst_82 = arith.constant dense<0.000000e+00> : vector<32x128xf32>
    %82 = tpu.matmul %79, %81, %cst_82 {dimension_numbers = #tpu.dot_dimension_numbers<[1], [0], [0], [1], [0, 0, 1, 1], [], []>} : vector<32x128xbf16>, vector<128x128xbf16>, vector<32x128xf32> -> vector<32x128xf32>
    %83 = arith.addf %77, %82 : vector<32x128xf32>
    %c0_83 = arith.constant 0 : index
    %c0_84 = arith.constant 0 : index
    %84 = vector.load %arg6[%c0_83, %c0_84] : memref<1x128xf32, #tpu.memory_space<vmem>>, vector<1x128xf32>
    %85 = vector.broadcast %84 : vector<1x128xf32> to vector<32x128xf32>
    %86 = arith.mulf %83, %85 : vector<32x128xf32>
    %c0_85 = arith.constant 0 : index
    %c0_86 = arith.constant 0 : index
    %87 = vector.load %arg7[%c0_85, %c0_86] : memref<1x128xf32, #tpu.memory_space<vmem>>, vector<1x128xf32>
    %88 = vector.broadcast %87 : vector<1x128xf32> to vector<32x128xf32>
    %89 = arith.addf %86, %88 : vector<32x128xf32>
    %cst_87 = arith.constant 0.000000e+00 : f32
    %90 = vector.broadcast %cst_87 : f32 to vector<32x128xf32>
    %91 = arith.maximumf %89, %90 : vector<32x128xf32>
    %c2_88 = arith.constant 2 : index
    %c0_89 = arith.constant 0 : index
    %92 = vector.load %arg12[%c2_88, %c0_89] : memref<36x128xf32, #tpu.memory_space<vmem>>, vector<32x128xf32>
    tpu.vector_store %arg12[%c2_88, %c0_89], %91 {strides = array<i32>} : memref<36x128xf32, #tpu.memory_space<vmem>>, vector<32x128xf32>,
    %cst_90 = arith.constant 0.000000e+00 : f32
    %93 = vector.broadcast %cst_90 : f32 to vector<32x128xf32>
    %c0_91 = arith.constant 0 : index
    %c0_92 = arith.constant 0 : index
    %94 = vector.load %arg12[%c0_91, %c0_92] : memref<36x128xf32, #tpu.memory_space<vmem>>, vector<32x128xf32>
    %95 = arith.truncf %94 : vector<32x128xf32> to vector<32x128xbf16>
    %c0_93 = arith.constant 0 : index
    %c0_94 = arith.constant 0 : index
    %c0_95 = arith.constant 0 : index
    %96 = vector.load %arg8[%c0_93, %c0_94, %c0_95] : memref<5x128x128xbf16, #tpu.memory_space<vmem>>, vector<1x128x128xbf16>
    %97 = vector.shape_cast %96 : vector<1x128x128xbf16> to vector<128x128xbf16>
    %cst_96 = arith.constant dense<0.000000e+00> : vector<32x128xf32>
    %98 = tpu.matmul %95, %97, %cst_96 {dimension_numbers = #tpu.dot_dimension_numbers<[1], [0], [0], [1], [0, 0, 1, 1], [], []>} : vector<32x128xbf16>, vector<128x128xbf16>, vector<32x128xf32> -> vector<32x128xf32>
    %99 = arith.addf %93, %98 : vector<32x128xf32>
    %c1_97 = arith.constant 1 : index
    %c0_98 = arith.constant 0 : index
    %100 = vector.load %arg12[%c1_97, %c0_98] : memref<36x128xf32, #tpu.memory_space<vmem>>, vector<32x128xf32>
    %101 = arith.truncf %100 : vector<32x128xf32> to vector<32x128xbf16>
    %c1_99 = arith.constant 1 : index
    %c0_100 = arith.constant 0 : index
    %c0_101 = arith.constant 0 : index
    %102 = vector.load %arg8[%c1_99, %c0_100, %c0_101] : memref<5x128x128xbf16, #tpu.memory_space<vmem>>, vector<1x128x128xbf16>
    %103 = vector.shape_cast %102 : vector<1x128x128xbf16> to vector<128x128xbf16>
    %cst_102 = arith.constant dense<0.000000e+00> : vector<32x128xf32>
    %104 = tpu.matmul %101, %103, %cst_102 {dimension_numbers = #tpu.dot_dimension_numbers<[1], [0], [0], [1], [0, 0, 1, 1], [], []>} : vector<32x128xbf16>, vector<128x128xbf16>, vector<32x128xf32> -> vector<32x128xf32>
    %105 = arith.addf %99, %104 : vector<32x128xf32>
    %c2_103 = arith.constant 2 : index
    %c0_104 = arith.constant 0 : index
    %106 = vector.load %arg12[%c2_103, %c0_104] : memref<36x128xf32, #tpu.memory_space<vmem>>, vector<32x128xf32>
    %107 = arith.truncf %106 : vector<32x128xf32> to vector<32x128xbf16>
    %c2_105 = arith.constant 2 : index
    %c0_106 = arith.constant 0 : index
    %c0_107 = arith.constant 0 : index
    %108 = vector.load %arg8[%c2_105, %c0_106, %c0_107] : memref<5x128x128xbf16, #tpu.memory_space<vmem>>, vector<1x128x128xbf16>
    %109 = vector.shape_cast %108 : vector<1x128x128xbf16> to vector<128x128xbf16>
    %cst_108 = arith.constant dense<0.000000e+00> : vector<32x128xf32>
    %110 = tpu.matmul %107, %109, %cst_108 {dimension_numbers = #tpu.dot_dimension_numbers<[1], [0], [0], [1], [0, 0, 1, 1], [], []>} : vector<32x128xbf16>, vector<128x128xbf16>, vector<32x128xf32> -> vector<32x128xf32>
    %111 = arith.addf %105, %110 : vector<32x128xf32>
    %c3_109 = arith.constant 3 : index
    %c0_110 = arith.constant 0 : index
    %112 = vector.load %arg12[%c3_109, %c0_110] : memref<36x128xf32, #tpu.memory_space<vmem>>, vector<32x128xf32>
    %113 = arith.truncf %112 : vector<32x128xf32> to vector<32x128xbf16>
    %c3_111 = arith.constant 3 : index
    %c0_112 = arith.constant 0 : index
    %c0_113 = arith.constant 0 : index
    %114 = vector.load %arg8[%c3_111, %c0_112, %c0_113] : memref<5x128x128xbf16, #tpu.memory_space<vmem>>, vector<1x128x128xbf16>
    %115 = vector.shape_cast %114 : vector<1x128x128xbf16> to vector<128x128xbf16>
    %cst_114 = arith.constant dense<0.000000e+00> : vector<32x128xf32>
    %116 = tpu.matmul %113, %115, %cst_114 {dimension_numbers = #tpu.dot_dimension_numbers<[1], [0], [0], [1], [0, 0, 1, 1], [], []>} : vector<32x128xbf16>, vector<128x128xbf16>, vector<32x128xf32> -> vector<32x128xf32>
    %117 = arith.addf %111, %116 : vector<32x128xf32>
    %c4_115 = arith.constant 4 : index
    %c0_116 = arith.constant 0 : index
    %118 = vector.load %arg12[%c4_115, %c0_116] : memref<36x128xf32, #tpu.memory_space<vmem>>, vector<32x128xf32>
    %119 = arith.truncf %118 : vector<32x128xf32> to vector<32x128xbf16>
    %c4_117 = arith.constant 4 : index
    %c0_118 = arith.constant 0 : index
    %c0_119 = arith.constant 0 : index
    %120 = vector.load %arg8[%c4_117, %c0_118, %c0_119] : memref<5x128x128xbf16, #tpu.memory_space<vmem>>, vector<1x128x128xbf16>
    %121 = vector.shape_cast %120 : vector<1x128x128xbf16> to vector<128x128xbf16>
    %cst_120 = arith.constant dense<0.000000e+00> : vector<32x128xf32>
    %122 = tpu.matmul %119, %121, %cst_120 {dimension_numbers = #tpu.dot_dimension_numbers<[1], [0], [0], [1], [0, 0, 1, 1], [], []>} : vector<32x128xbf16>, vector<128x128xbf16>, vector<32x128xf32> -> vector<32x128xf32>
    %123 = arith.addf %117, %122 : vector<32x128xf32>
    %124 = arith.addf %123, %51 : vector<32x128xf32>
    %125 = arith.truncf %124 : vector<32x128xf32> to vector<32x128xbf16>
    %c0_121 = arith.constant 0 : index
    %c0_122 = arith.constant 0 : index
    %c0_123 = arith.constant 0 : index
    %126 = vector.load %arg9[%c0_121, %c0_122, %c0_123] : memref<1x32x128xbf16, #tpu.memory_space<vmem>>, vector<1x32x128xbf16>
    %127 = vector.shape_cast %126 : vector<1x32x128xbf16> to vector<32x128xbf16>
    %128 = vector.shape_cast %125 : vector<32x128xbf16> to vector<1x32x128xbf16>
    tpu.vector_store %arg9[%c0_121, %c0_122, %c0_123], %128 {strides = array<i32>} : memref<1x32x128xbf16, #tpu.memory_space<vmem>>, vector<1x32x128xbf16>,
    return
  }
  func.func @transform_0(%arg0: i32) -> (i32, i32, i32) {
    %c0_i32 = arith.constant 0 : i32
    %c0_i32_0 = arith.constant 0 : i32
    %c0_i32_1 = arith.constant 0 : i32
    return %arg0, %c0_i32, %c0_i32_0 : i32, i32, i32
  }
  func.func @transform_1(%arg0: i32) -> (i32, i32, i32) {
    %c0_i32 = arith.constant 0 : i32
    %c0_i32_0 = arith.constant 0 : i32
    %c0_i32_1 = arith.constant 0 : i32
    %c0_i32_2 = arith.constant 0 : i32
    return %c0_i32, %c0_i32_0, %c0_i32_1 : i32, i32, i32
  }
  func.func @transform_2(%arg0: i32) -> (i32, i32) {
    %c0_i32 = arith.constant 0 : i32
    %c0_i32_0 = arith.constant 0 : i32
    %c0_i32_1 = arith.constant 0 : i32
    return %c0_i32, %c0_i32_0 : i32, i32
  }
  func.func @transform_3(%arg0: i32) -> (i32, i32) {
    %c0_i32 = arith.constant 0 : i32
    %c0_i32_0 = arith.constant 0 : i32
    %c0_i32_1 = arith.constant 0 : i32
    return %c0_i32, %c0_i32_0 : i32, i32
  }
  func.func @transform_4(%arg0: i32) -> (i32, i32, i32) {
    %c0_i32 = arith.constant 0 : i32
    %c0_i32_0 = arith.constant 0 : i32
    %c0_i32_1 = arith.constant 0 : i32
    %c0_i32_2 = arith.constant 0 : i32
    return %c0_i32, %c0_i32_0, %c0_i32_1 : i32, i32, i32
  }
  func.func @transform_5(%arg0: i32) -> (i32, i32) {
    %c0_i32 = arith.constant 0 : i32
    %c0_i32_0 = arith.constant 0 : i32
    %c0_i32_1 = arith.constant 0 : i32
    return %c0_i32, %c0_i32_0 : i32, i32
  }
  func.func @transform_6(%arg0: i32) -> (i32, i32) {
    %c0_i32 = arith.constant 0 : i32
    %c0_i32_0 = arith.constant 0 : i32
    %c0_i32_1 = arith.constant 0 : i32
    return %c0_i32, %c0_i32_0 : i32, i32
  }
  func.func @transform_7(%arg0: i32) -> (i32, i32, i32) {
    %c0_i32 = arith.constant 0 : i32
    %c0_i32_0 = arith.constant 0 : i32
    %c0_i32_1 = arith.constant 0 : i32
    %c0_i32_2 = arith.constant 0 : i32
    return %c0_i32, %c0_i32_0, %c0_i32_1 : i32, i32, i32
  }
  func.func @transform_8(%arg0: i32) -> (i32, i32, i32) {
    %c0_i32 = arith.constant 0 : i32
    %c0_i32_0 = arith.constant 0 : i32
    %c0_i32_1 = arith.constant 0 : i32
    return %arg0, %c0_i32, %c0_i32_0 : i32, i32, i32
  }
}

module attributes {stable_mosaic.version = 11 : i64} {
  func.func @kernel(%arg0: i32, %arg1: memref<2x2048xbf16, #tpu.memory_space<vmem>>, %arg2: memref<1x2048xf32, #tpu.memory_space<vmem>>, %arg3: memref<1x2048xf32, #tpu.memory_space<vmem>>, %arg4: memref<2048x128xbf16, #tpu.memory_space<vmem>>, %arg5: memref<1x128xf32, #tpu.memory_space<vmem>>, %arg6: memref<2x128xf32, #tpu.memory_space<vmem>>) attributes {dimension_semantics = [#tpu.dimension_semantics<arbitrary>], iteration_bounds = array<i64: 1>, scalar_prefetch = 0 : i64, scratch_operands = 0 : i64, tpu.core_type = #tpu.core_type<tc>, window_params = [{pipeline_mode = #tpu.pipeline_mode<synchronous>, transform_indices = @transform_0, window_bounds = array<i64: 2, 2048>}, {pipeline_mode = #tpu.pipeline_mode<synchronous>, transform_indices = @transform_1, window_bounds = array<i64: 1, 2048>}, {pipeline_mode = #tpu.pipeline_mode<synchronous>, transform_indices = @transform_2, window_bounds = array<i64: 1, 2048>}, {pipeline_mode = #tpu.pipeline_mode<synchronous>, transform_indices = @transform_3, window_bounds = array<i64: 2048, 128>}, {pipeline_mode = #tpu.pipeline_mode<synchronous>, transform_indices = @transform_4, window_bounds = array<i64: 1, 128>}, {pipeline_mode = #tpu.pipeline_mode<synchronous>, transform_indices = @transform_5, window_bounds = array<i64: 2, 128>}]} {
    %c0 = arith.constant 0 : index
    %c0_0 = arith.constant 0 : index
    %0 = vector.load %arg1[%c0, %c0_0] : memref<2x2048xbf16, #tpu.memory_space<vmem>>, vector<2x2048xbf16>
    %1 = arith.extf %0 : vector<2x2048xbf16> to vector<2x2048xf32>
    %c0_1 = arith.constant 0 : index
    %c0_2 = arith.constant 0 : index
    %2 = vector.load %arg2[%c0_1, %c0_2] : memref<1x2048xf32, #tpu.memory_space<vmem>>, vector<1x2048xf32>
    %3 = vector.broadcast %2 : vector<1x2048xf32> to vector<2x2048xf32>
    %4 = arith.mulf %1, %3 : vector<2x2048xf32>
    %c0_3 = arith.constant 0 : index
    %c0_4 = arith.constant 0 : index
    %5 = vector.load %arg3[%c0_3, %c0_4] : memref<1x2048xf32, #tpu.memory_space<vmem>>, vector<1x2048xf32>
    %6 = vector.broadcast %5 : vector<1x2048xf32> to vector<2x2048xf32>
    %7 = arith.addf %4, %6 : vector<2x2048xf32>
    %cst = arith.constant 0.000000e+00 : f32
    %8 = vector.broadcast %cst : f32 to vector<2x2048xf32>
    %9 = arith.maximumf %7, %8 : vector<2x2048xf32>
    %10 = arith.truncf %9 : vector<2x2048xf32> to vector<2x2048xbf16>
    %c0_5 = arith.constant 0 : index
    %c0_6 = arith.constant 0 : index
    %11 = vector.load %arg4[%c0_5, %c0_6] : memref<2048x128xbf16, #tpu.memory_space<vmem>>, vector<2048x128xbf16>
    %cst_7 = arith.constant dense<0.000000e+00> : vector<2x128xf32>
    %12 = tpu.matmul %10, %11, %cst_7 {dimension_numbers = #tpu.dot_dimension_numbers<[1], [0], [0], [1], [0, 0, 1, 1], [], []>} : vector<2x2048xbf16>, vector<2048x128xbf16>, vector<2x128xf32> -> vector<2x128xf32>
    %c0_8 = arith.constant 0 : index
    %c0_9 = arith.constant 0 : index
    %13 = vector.load %arg5[%c0_8, %c0_9] : memref<1x128xf32, #tpu.memory_space<vmem>>, vector<1x128xf32>
    %14 = vector.broadcast %13 : vector<1x128xf32> to vector<2x128xf32>
    %15 = arith.addf %12, %14 : vector<2x128xf32>
    %c0_10 = arith.constant 0 : index
    %c0_11 = arith.constant 0 : index
    %16 = vector.load %arg6[%c0_10, %c0_11] : memref<2x128xf32, #tpu.memory_space<vmem>>, vector<2x128xf32>
    tpu.vector_store %arg6[%c0_10, %c0_11], %15 {strides = array<i32>} : memref<2x128xf32, #tpu.memory_space<vmem>>, vector<2x128xf32>,
    return
  }
  func.func @transform_0(%arg0: i32) -> (i32, i32) {
    %c0_i32 = arith.constant 0 : i32
    %c0_i32_0 = arith.constant 0 : i32
    %c0_i32_1 = arith.constant 0 : i32
    return %c0_i32, %c0_i32_0 : i32, i32
  }
  func.func @transform_1(%arg0: i32) -> (i32, i32) {
    %c0_i32 = arith.constant 0 : i32
    %c0_i32_0 = arith.constant 0 : i32
    %c0_i32_1 = arith.constant 0 : i32
    return %c0_i32, %c0_i32_0 : i32, i32
  }
  func.func @transform_2(%arg0: i32) -> (i32, i32) {
    %c0_i32 = arith.constant 0 : i32
    %c0_i32_0 = arith.constant 0 : i32
    %c0_i32_1 = arith.constant 0 : i32
    return %c0_i32, %c0_i32_0 : i32, i32
  }
  func.func @transform_3(%arg0: i32) -> (i32, i32) {
    %c0_i32 = arith.constant 0 : i32
    %c0_i32_0 = arith.constant 0 : i32
    %c0_i32_1 = arith.constant 0 : i32
    return %c0_i32, %c0_i32_0 : i32, i32
  }
  func.func @transform_4(%arg0: i32) -> (i32, i32) {
    %c0_i32 = arith.constant 0 : i32
    %c0_i32_0 = arith.constant 0 : i32
    %c0_i32_1 = arith.constant 0 : i32
    return %c0_i32, %c0_i32_0 : i32, i32
  }
  func.func @transform_5(%arg0: i32) -> (i32, i32) {
    %c0_i32 = arith.constant 0 : i32
    %c0_i32_0 = arith.constant 0 : i32
    %c0_i32_1 = arith.constant 0 : i32
    return %c0_i32, %c0_i32_0 : i32, i32
  }
}

</mosaic_0001>

<llo_original>
// kernel: _lambda_.4
$region0: #{_lambda_.4}
  #allocation0 [shape = 'u32[]', space=smem, size = 0x4, offset = 0x4, fixed_abs, tag = 'smem constant byte address 0x4 - core index']
  #allocation1 [shape = 'u32[144,128]{1,0:T(1,128)}', space=vmem, size = 0x12000, scoped, tag = 'internal scratch']
  #allocation2 [shape = 'f32[36,128]{1,0:T(8,128)}', space=vmem, size = 0x5000, scoped, tag = 'scratch operand']
  #allocation3 [shape = 'f32[36,128]{1,0:T(8,128)}', space=vmem, size = 0x5000, scoped, tag = 'scratch operand']
  #allocation4 [shape = 'f32[32,128]{1,0:T(8,128)}', space=vmem, size = 0x4000, scoped, tag = 'scratch operand']
  %s0 = inlined_call_operand.vmem [shape: bf16[2,32,128], index: 0, kind: input, shape index: {}]
  %s1 = inlined_call_operand.vmem [shape: f32[1,128], index: 1, kind: input, shape index: {}]
  %s2 = inlined_call_operand.vmem [shape: f32[1,128], index: 2, kind: input, shape index: {}]
  %s3 = inlined_call_operand.vmem [shape: bf16[5,128,128], index: 3, kind: input, shape index: {}]
  %s4 = inlined_call_operand.vmem [shape: f32[1,128], index: 4, kind: input, shape index: {}]
  %s5 = inlined_call_operand.vmem [shape: f32[1,128], index: 5, kind: input, shape index: {}]
  %s6 = inlined_call_operand.hbm [shape: bf16[5,128,128], index: 6, kind: input, shape index: {}]
  %s7 = inlined_call_operand.vmem [shape: bf16[128,128], index: 7, kind: input, shape index: {}]
  %s8 = inlined_call_operand.vmem [shape: bf16[2,16,128], index: 8, kind: output, shape index: {}]
  %s9 = sld [smem:[#allocation0]]
  $region69: #{_lambda_.4} parent=0
    _
  %s11 = ssub.s32 1, %s9
  %s12 = scalar_select 0, %s11, %s9
  $region1: #{_lambda_.4} parent=0
    #allocation5 [shape = 'u8[163840]{0}', space=vmem, size = 0x28000, scoped, tag = 'input window, operand 6, single buffered']
    #allocation6 [shape = 's32[2]{0}', space=sflag, size = 0x8, scoped, tag = 'scoped memory for _lambda_.4']
    %13 = vsyncpa [#allocation6], 0
    loop: start=0, step=1, limit=4
    $region2: #{_lambda_.4} parent=1 // loop_pre_header
      _
    $region3: #{_lambda_.4} parent=1 // loop_header
      %s15 = sphi 0, %s19
      %p16 = scmp.ge.s32.totalorder %s15, 4
      %s25 = sphi 0, %s27
      %s28 = sphi 0, %s25
      %s29 = sphi 0, %s28
      %s45 = sphi 0, %s29
      %s49 = sphi 0, %s49
      %s51 = sphi 0, %s49
      %s52 = sphi 0, %s51
      %s66 = sphi 0, %s52
      %s70 = sphi 0, %s70
      %s72 = sphi 0, %s70
      %s73 = sphi 0, %s72
      %s87 = sphi 0, %s73
      %s91 = sphi 0, %s91
      %s93 = sphi 0, %s91
      %s94 = sphi 0, %s93
      %s108 = sphi 0, %s94
      %s112 = sphi 0, %s112
      %s114 = sphi 0, %s112
      %s115 = sphi 0, %s114
      %s129 = sphi 0, %s115
      %s133 = sphi 0, %s133
      %s135 = sphi 0, %s133
      %s136 = sphi 0, %s135
      %s150 = sphi 0, %s136
      %s154 = sphi 0, %s154
      %s156 = sphi 0, %s154
      %s157 = sphi 0, %s156
      %s171 = sphi 0, %s157
      %s175 = sphi 0, %s175
      %s177 = sphi 0, %s175
      %s178 = sphi 0, %s177
      %s192 = sphi 0, %s178
      %s198 = sphi 0, %s200
      %s201 = sphi 0, %s198
      %s202 = sphi 0, %s201
      %s218 = sphi 0, %s202
    $region4: #{_lambda_.4} parent=1 // loop_header_branch
      %18 = sbr.rel (%p16) target = $region8
    $region5: #{_lambda_.4} parent=1 // loop_body
      %s20 = ssub.s32 %s15, 1
      %s21 = ssub.s32 %s15, 2
      %s22 = sadd.s32 %s15, 1
      %s23 = ssub.s32 %s15, %s22
      %p24 = scmp.eq.s32.totalorder %s23, 0
      %s26 = sadd.s32 %s25, 1
      %s27 = scalar_select %p24, %s25, %s26
      %p30 = pneg %p24
      %p31 = scmp.eq.s32.totalorder %s15, 1
      %p32 = por %p30, %p31
      %p33 = scmp.ne.s32.totalorder %s25, %s28
      %p34 = scmp.eq.s32.totalorder %s15, 0
      %p35 = por %p33, %p34
      %p36 = scmp.ne.s32.totalorder %s25, %s28
      %p37 = scmp.eq.s32.totalorder %s20, 1
      %p38 = por %p36, %p37
      %p39 = scmp.ne.s32.totalorder %s28, %s29
      %p40 = scmp.eq.s32.totalorder %s20, 0
      %p41 = por %p39, %p40
      %p42 = scmp.ne.s32.totalorder %s28, %s29
      %p43 = scmp.eq.s32.totalorder %s21, 1
      %p44 = por %p42, %p43
      %p46 = scmp.ne.s32.totalorder %s29, %s45
      %p47 = scmp.eq.s32.totalorder %s21, 0
      %p48 = por %p46, %p47
      %s50 = sadd.s32 %s49, 1
      %p53 = scmp.eq.s32.totalorder %s15, 1
      %p54 = scmp.ne.s32.totalorder %s49, %s51
      %p55 = scmp.eq.s32.totalorder %s15, 0
      %p56 = por %p54, %p55
      %p57 = scmp.ne.s32.totalorder %s49, %s51
      %p58 = scmp.eq.s32.totalorder %s20, 1
      %p59 = por %p57, %p58
      %p60 = scmp.ne.s32.totalorder %s51, %s52
      %p61 = scmp.eq.s32.totalorder %s20, 0
      %p62 = por %p60, %p61
      %p63 = scmp.ne.s32.totalorder %s51, %s52
      %p64 = scmp.eq.s32.totalorder %s21, 1
      %p65 = por %p63, %p64
      %p67 = scmp.ne.s32.totalorder %s52, %s66
      %p68 = scmp.eq.s32.totalorder %s21, 0
      %p69 = por %p67, %p68
      %s71 = sadd.s32 %s70, 1
      %p74 = scmp.eq.s32.totalorder %s15, 1
      %p75 = scmp.ne.s32.totalorder %s70, %s72
      %p76 = scmp.eq.s32.totalorder %s15, 0
      %p77 = por %p75, %p76
      %p78 = scmp.ne.s32.totalorder %s70, %s72
      %p79 = scmp.eq.s32.totalorder %s20, 1
      %p80 = por %p78, %p79
      %p81 = scmp.ne.s32.totalorder %s72, %s73
      %p82 = scmp.eq.s32.totalorder %s20, 0
      %p83 = por %p81, %p82
      %p84 = scmp.ne.s32.totalorder %s72, %s73
      %p85 = scmp.eq.s32.totalorder %s21, 1
      %p86 = por %p84, %p85
      %p88 = scmp.ne.s32.totalorder %s73, %s87
      %p89 = scmp.eq.s32.totalorder %s21, 0
      %p90 = por %p88, %p89
      %s92 = sadd.s32 %s91, 1
      %p95 = scmp.eq.s32.totalorder %s15, 1
      %p96 = scmp.ne.s32.totalorder %s91, %s93
      %p97 = scmp.eq.s32.totalorder %s15, 0
      %p98 = por %p96, %p97
      %p99 = scmp.ne.s32.totalorder %s91, %s93
      %p100 = scmp.eq.s32.totalorder %s20, 1
      %p101 = por %p99, %p100
      %p102 = scmp.ne.s32.totalorder %s93, %s94
      %p103 = scmp.eq.s32.totalorder %s20, 0
      %p104 = por %p102, %p103
      %p105 = scmp.ne.s32.totalorder %s93, %s94
      %p106 = scmp.eq.s32.totalorder %s21, 1
      %p107 = por %p105, %p106
      %p109 = scmp.ne.s32.totalorder %s94, %s108
      %p110 = scmp.eq.s32.totalorder %s21, 0
      %p111 = por %p109, %p110
      %s113 = sadd.s32 %s112, 1
      %p116 = scmp.eq.s32.totalorder %s15, 1
      %p117 = scmp.ne.s32.totalorder %s112, %s114
      %p118 = scmp.eq.s32.totalorder %s15, 0
      %p119 = por %p117, %p118
      %p120 = scmp.ne.s32.totalorder %s112, %s114
      %p121 = scmp.eq.s32.totalorder %s20, 1
      %p122 = por %p120, %p121
      %p123 = scmp.ne.s32.totalorder %s114, %s115
      %p124 = scmp.eq.s32.totalorder %s20, 0
      %p125 = por %p123, %p124
      %p126 = scmp.ne.s32.totalorder %s114, %s115
      %p127 = scmp.eq.s32.totalorder %s21, 1
      %p128 = por %p126, %p127
      %p130 = scmp.ne.s32.totalorder %s115, %s129
      %p131 = scmp.eq.s32.totalorder %s21, 0
      %p132 = por %p130, %p131
      %s134 = sadd.s32 %s133, 1
      %p137 = scmp.eq.s32.totalorder %s15, 1
      %p138 = scmp.ne.s32.totalorder %s133, %s135
      %p139 = scmp.eq.s32.totalorder %s15, 0
      %p140 = por %p138, %p139
      %p141 = scmp.ne.s32.totalorder %s133, %s135
      %p142 = scmp.eq.s32.totalorder %s20, 1
      %p143 = por %p141, %p142
      %p144 = scmp.ne.s32.totalorder %s135, %s136
      %p145 = scmp.eq.s32.totalorder %s20, 0
      %p146 = por %p144, %p145
      %p147 = scmp.ne.s32.totalorder %s135, %s136
      %p148 = scmp.eq.s32.totalorder %s21, 1
      %p149 = por %p147, %p148
      %p151 = scmp.ne.s32.totalorder %s136, %s150
      %p152 = scmp.eq.s32.totalorder %s21, 0
      %p153 = por %p151, %p152
      %s155 = sadd.s32 %s154, 1
      %p158 = scmp.eq.s32.totalorder %s15, 1
      %p159 = scmp.ne.s32.totalorder %s154, %s156
      %p160 = scmp.eq.s32.totalorder %s15, 0
      %p161 = por %p159, %p160
      %p162 = scmp.ne.s32.totalorder %s154, %s156
      %p163 = scmp.eq.s32.totalorder %s20, 1
      %p164 = por %p162, %p163
      %p165 = scmp.ne.s32.totalorder %s156, %s157
      %p166 = scmp.eq.s32.totalorder %s20, 0
      %p167 = por %p165, %p166
      %p168 = scmp.ne.s32.totalorder %s156, %s157
      %p169 = scmp.eq.s32.totalorder %s21, 1
      %p170 = por %p168, %p169
      %p172 = scmp.ne.s32.totalorder %s157, %s171
      %p173 = scmp.eq.s32.totalorder %s21, 0
      %p174 = por %p172, %p173
      %s176 = sadd.s32 %s175, 1
      %p179 = scmp.eq.s32.totalorder %s15, 1
      %p180 = scmp.ne.s32.totalorder %s175, %s177
      %p181 = scmp.eq.s32.totalorder %s15, 0
      %p182 = por %p180, %p181
      %p183 = scmp.ne.s32.totalorder %s175, %s177
      %p184 = scmp.eq.s32.totalorder %s20, 1
      %p185 = por %p183, %p184
      %p186 = scmp.ne.s32.totalorder %s177, %s178
      %p187 = scmp.eq.s32.totalorder %s20, 0
      %p188 = por %p186, %p187
      %p189 = scmp.ne.s32.totalorder %s177, %s178
      %p190 = scmp.eq.s32.totalorder %s21, 1
      %p191 = por %p189, %p190
      %p193 = scmp.ne.s32.totalorder %s178, %s192
      %p194 = scmp.eq.s32.totalorder %s21, 0
      %p195 = por %p193, %p194
      %s196 = ssub.s32 %s15, %s22
      %p197 = scmp.eq.s32.totalorder %s196, 0
      %s199 = sadd.s32 %s198, 1
      %s200 = scalar_select %p197, %s198, %s199
      %p203 = pneg %p197
      %p204 = scmp.eq.s32.totalorder %s15, 1
      %p205 = por %p203, %p204
      %p206 = scmp.ne.s32.totalorder %s198, %s201
      %p207 = scmp.eq.s32.totalorder %s15, 0
      %p208 = por %p206, %p207
      %p209 = scmp.ne.s32.totalorder %s198, %s201
      %p210 = scmp.eq.s32.totalorder %s20, 1
      %p211 = por %p209, %p210
      %p212 = scmp.ne.s32.totalorder %s201, %s202
      %p213 = scmp.eq.s32.totalorder %s20, 0
      %p214 = por %p212, %p213
      %p215 = scmp.ne.s32.totalorder %s201, %s202
      %p216 = scmp.eq.s32.totalorder %s21, 1
      %p217 = por %p215, %p216
      %p219 = scmp.ne.s32.totalorder %s202, %s218
      %p220 = scmp.eq.s32.totalorder %s21, 0
      %p221 = por %p219, %p220
      %p222 = scmp.le.s32.totalorder 1, %s15
      %p223 = scmp.lt.s32.totalorder %s15, 3
      %p224 = pnand %p222, %p223
      %p225 = pneg %p224
      // Predicated region
      $region9: #{_lambda_.4} parent=5 // pred_check
        _
      $region10: #{_lambda_.4} parent=5 // pred_check_branch
        %227 = sbr.rel (%p224) target = $region12
      $region11: #{_lambda_.4} parent=5 // pred_region
        %s228 = ssub.s32 %s15, 1
        // Predicated region
        $region13: #{_lambda_.4} parent=11 // pred_check
          %p229 = pneg %p62
        $region14: #{_lambda_.4} parent=11 // pred_check_branch
          %231 = sbr.rel (%p229) target = $region16
        $region15: #{_lambda_.4} parent=11 // pred_region
          _
        $region16: #{_lambda_.4} parent=11 // pred_fallthru
          _
        // Predicated region
        $region17: #{_lambda_.4} parent=11 // pred_check
          %p232 = pneg %p83
        $region18: #{_lambda_.4} parent=11 // pred_check_branch
          %234 = sbr.rel (%p232) target = $region20
        $region19: #{_lambda_.4} parent=11 // pred_region
          _
        $region20: #{_lambda_.4} parent=11 // pred_fallthru
          _
        // Predicated region
        $region21: #{_lambda_.4} parent=11 // pred_check
          %p235 = pneg %p104
        $region22: #{_lambda_.4} parent=11 // pred_check_branch
          %237 = sbr.rel (%p235) target = $region24
        $region23: #{_lambda_.4} parent=11 // pred_region
          _
        $region24: #{_lambda_.4} parent=11 // pred_fallthru
          _
        // Predicated region
        $region25: #{_lambda_.4} parent=11 // pred_check
          %p238 = pneg %p125
        $region26: #{_lambda_.4} parent=11 // pred_check_branch
          %240 = sbr.rel (%p238) target = $region28
        $region27: #{_lambda_.4} parent=11 // pred_region
          _
        $region28: #{_lambda_.4} parent=11 // pred_fallthru
          _
        // Predicated region
        $region29: #{_lambda_.4} parent=11 // pred_check
          %p241 = pneg %p146
        $region30: #{_lambda_.4} parent=11 // pred_check_branch
          %243 = sbr.rel (%p241) target = $region32
        $region31: #{_lambda_.4} parent=11 // pred_region
          _
        $region32: #{_lambda_.4} parent=11 // pred_fallthru
          _
        // Predicated region
        $region33: #{_lambda_.4} parent=11 // pred_check
          %p244 = pneg %p167
        $region34: #{_lambda_.4} parent=11 // pred_check_branch
          %246 = sbr.rel (%p244) target = $region36
        $region35: #{_lambda_.4} parent=11 // pred_region
          %s248 = ssub.s32 5120, 5120
          %249 = vsyncadd [#allocation6], %s248
          %s250 = sshll.u32 [#allocation5], 4
          %s251 = int_to_ptr.vmem [resolvable:$true] %s250
          %256 = dma.hbm_to_vmem [thread:$0]  %s6, 5120, %s251, [#allocation6], 64, 64, 4
        $region36: #{_lambda_.4} parent=11 // pred_fallthru
          _
        // Predicated region
        $region37: #{_lambda_.4} parent=11 // pred_check
          %p257 = pneg %p188
        $region38: #{_lambda_.4} parent=11 // pred_check_branch
          %259 = sbr.rel (%p257) target = $region40
        $region39: #{_lambda_.4} parent=11 // pred_region
          _
        $region40: #{_lambda_.4} parent=11 // pred_fallthru
          _
      $region12: #{_lambda_.4} parent=5 // pred_fallthru
        _
      %p260 = scmp.lt.s32.totalorder %s15, 2
      // Predicated region
      $region41: #{_lambda_.4} parent=5 // pred_check
        %p261 = pneg %p260
      $region42: #{_lambda_.4} parent=5 // pred_check_branch
        %263 = sbr.rel (%p261) target = $region44
      $region43: #{_lambda_.4} parent=5 // pred_region
        // Predicated region
        $region45: #{_lambda_.4} parent=43 // pred_check
          %p264 = pneg %p35
        $region46: #{_lambda_.4} parent=43 // pred_check_branch
          %266 = sbr.rel (%p264) target = $region48
        $region47: #{_lambda_.4} parent=43 // pred_region
          %p267 = scmp.lt.s32.totalorder %s15, 1
          %s268 = scalar_select %p267, %s15, 1
          %s269 = smul.addr %s268, 4
          %s270 = smul.addr %s269, 4
          %s271 = scalar_lea.vmem %s0, %s270
        $region48: #{_lambda_.4} parent=43 // pred_fallthru
          _
      $region44: #{_lambda_.4} parent=5 // pred_fallthru
        _
      %p272 = scmp.le.s32.totalorder 1, %s15
      %p273 = scmp.lt.s32.totalorder %s15, 3
      %p274 = pnand %p272, %p273
      %p275 = pneg %p274
      // Predicated region
      $region49: #{_lambda_.4} parent=5 // pred_check
        _
      $region50: #{_lambda_.4} parent=5 // pred_check_branch
        %277 = sbr.rel (%p274) target = $region52
      $region51: #{_lambda_.4} parent=5 // pred_region
        %s278 = ssub.s32 %s15, 1
        // Predicated region
        $region53: #{_lambda_.4} parent=51 // pred_check
          %p279 = pneg %p167
        $region54: #{_lambda_.4} parent=51 // pred_check_branch
          %281 = sbr.rel (%p279) target = $region56
        $region55: #{_lambda_.4} parent=51 // pred_region
          %282 = dma.done [#allocation6], 5120
        $region56: #{_lambda_.4} parent=51 // pred_fallthru
          _
        %p283 = scmp.lt.s32.totalorder %s20, 1
        %s284 = scalar_select %p283, %s20, 1
        %s285 = smul.addr %s284, 4
        %s286 = smul.addr %s285, 4
        %s287 = scalar_lea.vmem %s0, %s286
        %p288 = pneg %p41
        %p289 = pneg %p38
        %p290 = pneg %p62
        %p291 = pneg %p59
        %p292 = pneg %p83
        %p293 = pneg %p80
        %p294 = pneg %p104
        %p295 = pneg %p101
        %p296 = pneg %p125
        %p297 = pneg %p122
        %p298 = pneg %p146
        %p299 = pneg %p143
        %p300 = pneg %p167
        %p301 = pneg %p164
        %p302 = pneg %p188
        %p303 = pneg %p185
        %p304 = pneg %p214
        %p305 = pneg %p211
        %p306 = scmp.lt.s32.totalorder %s20, 1
        %s307 = scalar_select %p306, %s20, 1
        %s308 = smul.addr %s307, 2
        %s309 = smul.addr %s308, 4
        %s310 = scalar_lea.vmem %s8, %s309
        %p311 = scmp.lt.s32.totalorder %s20, 1
        %s312 = scalar_select %p311, %s20, 1
        %s313 = smul.addr %s312, 4
        %s314 = smul.addr %s313, 4
        %s315 = scalar_lea.vmem %s0, %s314
        %p316 = scmp.lt.s32.totalorder %s20, 1
        %s317 = scalar_select %p316, %s20, 1
        %s318 = smul.addr %s317, 2
        %s319 = smul.addr %s318, 4
        %s320 = scalar_lea.vmem %s8, %s319
        %322 = vst [vmem:[#allocation2] sm:$0x3] 0.0
        %323 = vst [vmem:[#allocation2 + $0x22] sm:$0x3] 0.0
        %324 = vst [vmem:[#allocation3] sm:$0x3] 0.0
        %325 = vst [vmem:[#allocation3 + $0x22] sm:$0x3] 0.0
        %v326 = vld [vmem:[%s315] sm:$0xf]
        %v327 = vld [vmem:[%s315 + $0x4] sm:$0xf]
        %v328 = vld [vmem:[%s315 + $0x8] sm:$0xf]
        %v329 = vld [vmem:[%s315 + $0xc] sm:$0xf]
        %v330 = vunpack.c.l.bf16 %v326
        %v331 = vunpack.c.l.bf16 %v327
        %v332 = vunpack.c.l.bf16 %v328
        %v333 = vunpack.c.l.bf16 %v329
        %v334 = vld [vmem:[%s1] sm:$0x1]
        %v336 = vlaneseq
        %v337 = vshrl.u32 %v336, 7
        %v338 = vsub.s32 0, %v337
        %v339 = vrot.slane %v334, %v338
        %v341 = vmul.f32 %v330, %v339
        %v342 = vmul.f32 %v331, %v339
        %v343 = vmul.f32 %v332, %v339
        %v344 = vmul.f32 %v333, %v339
        %v345 = vld [vmem:[%s2] sm:$0x1]
        %v347 = vlaneseq
        %v348 = vshrl.u32 %v347, 7
        %v349 = vsub.s32 0, %v348
        %v350 = vrot.slane %v345, %v349
        %v352 = vadd.f32 %v341, %v350
        %v353 = vadd.f32 %v342, %v350
        %v354 = vadd.f32 %v343, %v350
        %v355 = vadd.f32 %v344, %v350
        %v356 = vmax.f32 %v352, 0.0
        %v357 = vmax.f32 %v353, 0.0
        %v358 = vmax.f32 %v354, 0.0
        %v359 = vmax.f32 %v355, 0.0
        %360 = vst [vmem:[#allocation2 + $0x2] sm:$0xff] %v356
        %361 = vst [vmem:[#allocation2 + $0xa] sm:$0xff] %v357
        %362 = vst [vmem:[#allocation2 + $0x12] sm:$0xff] %v358
        %363 = vst [vmem:[#allocation2 + $0x1a] sm:$0xff] %v359
        %v364 = vld [vmem:[#allocation2] sm:$0xff]
        %v365 = vld [vmem:[#allocation2 + $0x8] sm:$0xff]
        %v366 = vld [vmem:[#allocation2 + $0x10] sm:$0xff]
        %v367 = vld [vmem:[#allocation2 + $0x18] sm:$0xff]
        %v368 = vpack.c.bf16 %v365, %v364
        %v369 = vpack.c.bf16 %v367, %v366
        %v370 = vld [vmem:[%s3] sm:$0xf]
        %v371 = vld [vmem:[%s3 + $0x4] sm:$0xf]
        %v372 = vld [vmem:[%s3 + $0x8] sm:$0xf]
        %v373 = vld [vmem:[%s3 + $0xc] sm:$0xf]
        %v374 = vld [vmem:[%s3 + $0x10] sm:$0xf]
        %v375 = vld [vmem:[%s3 + $0x14] sm:$0xf]
        %v376 = vld [vmem:[%s3 + $0x18] sm:$0xf]
        %v377 = vld [vmem:[%s3 + $0x1c] sm:$0xf]
        %v378 = vld [vmem:[%s3 + $0x20] sm:$0xf]
        %v379 = vld [vmem:[%s3 + $0x24] sm:$0xf]
        %v380 = vld [vmem:[%s3 + $0x28] sm:$0xf]
        %v381 = vld [vmem:[%s3 + $0x2c] sm:$0xf]
        %v382 = vld [vmem:[%s3 + $0x30] sm:$0xf]
        %v383 = vld [vmem:[%s3 + $0x34] sm:$0xf]
        %v384 = vld [vmem:[%s3 + $0x38] sm:$0xf]
        %v385 = vld [vmem:[%s3 + $0x3c] sm:$0xf]
        %v386 = vld [vmem:[#allocation2 + $0x1] sm:$0xff]
        %v387 = vld [vmem:[#allocation2 + $0x9] sm:$0xff]
        %v388 = vld [vmem:[#allocation2 + $0x11] sm:$0xff]
        %v389 = vld [vmem:[#allocation2 + $0x19] sm:$0xff]
        %v390 = vpack.c.bf16 %v387, %v386
        %v391 = vpack.c.bf16 %v389, %v388
        %s392 = scalar_lea.vmem %s3, 64
        %v393 = vld [vmem:[%s392] sm:$0xf]
        %v394 = vld [vmem:[%s392 + $0x4] sm:$0xf]
        %v395 = vld [vmem:[%s392 + $0x8] sm:$0xf]
        %v396 = vld [vmem:[%s392 + $0xc] sm:$0xf]
        %v397 = vld [vmem:[%s392 + $0x10] sm:$0xf]
        %v398 = vld [vmem:[%s392 + $0x14] sm:$0xf]
        %v399 = vld [vmem:[%s392 + $0x18] sm:$0xf]
        %v400 = vld [vmem:[%s392 + $0x1c] sm:$0xf]
        %v401 = vld [vmem:[%s392 + $0x20] sm:$0xf]
        %v402 = vld [vmem:[%s392 + $0x24] sm:$0xf]
        %v403 = vld [vmem:[%s392 + $0x28] sm:$0xf]
        %v404 = vld [vmem:[%s392 + $0x2c] sm:$0xf]
        %v405 = vld [vmem:[%s392 + $0x30] sm:$0xf]
        %v406 = vld [vmem:[%s392 + $0x34] sm:$0xf]
        %v407 = vld [vmem:[%s392 + $0x38] sm:$0xf]
        %v408 = vld [vmem:[%s392 + $0x3c] sm:$0xf]
        %v425 = vunpack.c.l.b16 %v393
        %v426 = vunpack.c.l.b16 %v394
        %v427 = vunpack.c.l.b16 %v395
        %v428 = vunpack.c.l.b16 %v396
        %v429 = vunpack.c.l.b16 %v397
        %v430 = vunpack.c.l.b16 %v398
        %v431 = vunpack.c.l.b16 %v399
        %v432 = vunpack.c.l.b16 %v400
        %v433 = vunpack.c.l.b16 %v401
        %v434 = vunpack.c.l.b16 %v402
        %v435 = vunpack.c.l.b16 %v403
        %v436 = vunpack.c.l.b16 %v404
        %v437 = vunpack.c.l.b16 %v405
        %v438 = vunpack.c.l.b16 %v406
        %v439 = vunpack.c.l.b16 %v407
        %v440 = vunpack.c.l.b16 %v408
        %v441 = vpack.c.b16 %v426, %v425
        %v442 = vpack.c.b16 %v428, %v427
        %v443 = vpack.c.b16 %v430, %v429
        %v444 = vpack.c.b16 %v432, %v431
        %v445 = vpack.c.b16 %v434, %v433
        %v446 = vpack.c.b16 %v436, %v435
        %v447 = vpack.c.b16 %v438, %v437
        %v448 = vpack.c.b16 %v440, %v439
        %457 = vmatprep.subr.bf16.mxu0 0
        %458 = vmatpush1.bf16.msra.mxu0 %v441
        %459 = vmatprep.subr.bf16.mxu0 0
        %460 = vmatpush1.bf16.msra.mxu0 %v442
        %461 = vmatprep.subr.bf16.mxu0 0
        %462 = vmatpush1.bf16.msra.mxu0 %v443
        %463 = vmatprep.subr.bf16.mxu0 0
        %464 = vmatpush1.bf16.msra.mxu0 %v444
        %465 = vmatprep.subr.bf16.mxu0 0
        %466 = vmatpush1.bf16.msra.mxu0 %v445
        %467 = vmatprep.subr.bf16.mxu0 0
        %468 = vmatpush1.bf16.msra.mxu0 %v446
        %469 = vmatprep.subr.bf16.mxu0 0
        %470 = vmatpush1.bf16.msra.mxu0 %v447
        %471 = vmatprep.subr.bf16.mxu0 0
        %472 = vmatpush1.bf16.msra.mxu0 %v448
        %473 = vmatprep.subr.bf16.mxu0 0
        %474 = vmatpush1.bf16.msra.mxu0 0
        %475 = vmatprep.subr.bf16.mxu0 0
        %476 = vmatpush1.bf16.msra.mxu0 0
        %477 = vmatprep.subr.bf16.mxu0 0
        %478 = vmatpush1.bf16.msra.mxu0 0
        %479 = vmatprep.subr.bf16.mxu0 0
        %480 = vmatpush1.bf16.msra.mxu0 0
        %481 = vmatprep.subr.bf16.mxu0 0
        %482 = vmatpush1.bf16.msra.mxu0 0
        %483 = vmatprep.subr.bf16.mxu0 0
        %484 = vmatpush1.bf16.msra.mxu0 0
        %485 = vmatprep.subr.bf16.mxu0 0
        %486 = vmatpush1.bf16.msra.mxu0 0
        %487 = vmatprep.subr.bf16.mxu0 0
        %488 = vmatpush1.bf16.msra.mxu0 0
        %489 = vmatprep.mubr.bf16.mxu0 0
        %490 = vmatmul.mubr.bf16.gmra.mrb[0].mxu0 %v390
        %v491 = vpop.f32.mrb[0].mxu0
        %v492 = vadd.f32 0.0, %v491
        %v493 = vpop.f32.mrb[0].mxu0
        %v494 = vpop.f32.mrb[0].mxu0
        %v495 = vadd.f32 0.0, %v494
        %v496 = vpop.f32.mrb[0].mxu0
        %497 = vmatprep.mubr.bf16.mxu0 0
        %498 = vmatmul.mubr.bf16.gmra.mrb[0].mxu0 %v391
        %v499 = vpop.f32.mrb[0].mxu0
        %v500 = vadd.f32 0.0, %v499
        %v501 = vpop.f32.mrb[0].mxu0
        %v502 = vpop.f32.mrb[0].mxu0
        %v503 = vadd.f32 0.0, %v502
        %v504 = vpop.f32.mrb[0].mxu0
        %505 = vdwg.mxu0
        %v522 = vunpack.c.l.b16 %v370
        %v523 = vunpack.c.l.b16 %v371
        %v524 = vunpack.c.l.b16 %v372
        %v525 = vunpack.c.l.b16 %v373
        %v526 = vunpack.c.l.b16 %v374
        %v527 = vunpack.c.l.b16 %v375
        %v528 = vunpack.c.l.b16 %v376
        %v529 = vunpack.c.l.b16 %v377
        %v530 = vunpack.c.l.b16 %v378
        %v531 = vunpack.c.l.b16 %v379
        %v532 = vunpack.c.l.b16 %v380
        %v533 = vunpack.c.l.b16 %v381
        %v534 = vunpack.c.l.b16 %v382
        %v535 = vunpack.c.l.b16 %v383
        %v536 = vunpack.c.l.b16 %v384
        %v537 = vunpack.c.l.b16 %v385
        %v538 = vpack.c.b16 %v523, %v522
        %v539 = vpack.c.b16 %v525, %v524
        %v540 = vpack.c.b16 %v527, %v526
        %v541 = vpack.c.b16 %v529, %v528
        %v542 = vpack.c.b16 %v531, %v530
        %v543 = vpack.c.b16 %v533, %v532
        %v544 = vpack.c.b16 %v535, %v534
        %v545 = vpack.c.b16 %v537, %v536
        %554 = vmatprep.subr.bf16.mxu0 0
        %555 = vmatpush1.bf16.msra.mxu0 %v538
        %556 = vmatprep.subr.bf16.mxu0 0
        %557 = vmatpush1.bf16.msra.mxu0 %v539
        %558 = vmatprep.subr.bf16.mxu0 0
        %559 = vmatpush1.bf16.msra.mxu0 %v540
        %560 = vmatprep.subr.bf16.mxu0 0
        %561 = vmatpush1.bf16.msra.mxu0 %v541
        %562 = vmatprep.subr.bf16.mxu0 0
        %563 = vmatpush1.bf16.msra.mxu0 %v542
        %564 = vmatprep.subr.bf16.mxu0 0
        %565 = vmatpush1.bf16.msra.mxu0 %v543
        %566 = vmatprep.subr.bf16.mxu0 0
        %567 = vmatpush1.bf16.msra.mxu0 %v544
        %568 = vmatprep.subr.bf16.mxu0 0
        %569 = vmatpush1.bf16.msra.mxu0 %v545
        %570 = vmatprep.subr.bf16.mxu0 0
        %571 = vmatpush1.bf16.msra.mxu0 0
        %572 = vmatprep.subr.bf16.mxu0 0
        %573 = vmatpush1.bf16.msra.mxu0 0
        %574 = vmatprep.subr.bf16.mxu0 0
        %575 = vmatpush1.bf16.msra.mxu0 0
        %576 = vmatprep.subr.bf16.mxu0 0
        %577 = vmatpush1.bf16.msra.mxu0 0
        %578 = vmatprep.subr.bf16.mxu0 0
        %579 = vmatpush1.bf16.msra.mxu0 0
        %580 = vmatprep.subr.bf16.mxu0 0
        %581 = vmatpush1.bf16.msra.mxu0 0
        %582 = vmatprep.subr.bf16.mxu0 0
        %583 = vmatpush1.bf16.msra.mxu0 0
        %584 = vmatprep.subr.bf16.mxu0 0
        %585 = vmatpush1.bf16.msra.mxu0 0
        %586 = vmatprep.mubr.bf16.mxu0 0
        %587 = vmatmul.mubr.bf16.gmra.mrb[0].mxu0 %v368
        %v588 = vpop.f32.mrb[0].mxu0
        %v589 = vadd.f32 %v492, %v588
        %v590 = vpop.f32.mrb[0].mxu0
        %v591 = vpop.f32.mrb[0].mxu0
        %v592 = vadd.f32 %v495, %v591
        %v593 = vpop.f32.mrb[0].mxu0
        %594 = vmatprep.mubr.bf16.mxu0 0
        %595 = vmatmul.mubr.bf16.gmra.mrb[0].mxu0 %v369
        %v596 = vpop.f32.mrb[0].mxu0
        %v597 = vadd.f32 %v500, %v596
        %v598 = vpop.f32.mrb[0].mxu0
        %v599 = vpop.f32.mrb[0].mxu0
        %v600 = vadd.f32 %v503, %v599
        %v601 = vpop.f32.mrb[0].mxu0
        %602 = vdwg.mxu0
        %v603 = vld [vmem:[#allocation2 + $0x2] sm:$0xff]
        %v604 = vld [vmem:[#allocation2 + $0xa] sm:$0xff]
        %v605 = vld [vmem:[#allocation2 + $0x12] sm:$0xff]
        %v606 = vld [vmem:[#allocation2 + $0x1a] sm:$0xff]
        %v607 = vpack.c.bf16 %v604, %v603
        %v608 = vpack.c.bf16 %v606, %v605
        %s609 = scalar_lea.vmem %s3, 128
        %v610 = vld [vmem:[%s609] sm:$0xf]
        %v611 = vld [vmem:[%s609 + $0x4] sm:$0xf]
        %v612 = vld [vmem:[%s609 + $0x8] sm:$0xf]
        %v613 = vld [vmem:[%s609 + $0xc] sm:$0xf]
        %v614 = vld [vmem:[%s609 + $0x10] sm:$0xf]
        %v615 = vld [vmem:[%s609 + $0x14] sm:$0xf]
        %v616 = vld [vmem:[%s609 + $0x18] sm:$0xf]
        %v617 = vld [vmem:[%s609 + $0x1c] sm:$0xf]
        %v618 = vld [vmem:[%s609 + $0x20] sm:$0xf]
        %v619 = vld [vmem:[%s609 + $0x24] sm:$0xf]
        %v620 = vld [vmem:[%s609 + $0x28] sm:$0xf]
        %v621 = vld [vmem:[%s609 + $0x2c] sm:$0xf]
        %v622 = vld [vmem:[%s609 + $0x30] sm:$0xf]
        %v623 = vld [vmem:[%s609 + $0x34] sm:$0xf]
        %v624 = vld [vmem:[%s609 + $0x38] sm:$0xf]
        %v625 = vld [vmem:[%s609 + $0x3c] sm:$0xf]
        %v642 = vunpack.c.l.b16 %v610
        %v643 = vunpack.c.l.b16 %v611
        %v644 = vunpack.c.l.b16 %v612
        %v645 = vunpack.c.l.b16 %v613
        %v646 = vunpack.c.l.b16 %v614
        %v647 = vunpack.c.l.b16 %v615
        %v648 = vunpack.c.l.b16 %v616
        %v649 = vunpack.c.l.b16 %v617
        %v650 = vunpack.c.l.b16 %v618
        %v651 = vunpack.c.l.b16 %v619
        %v652 = vunpack.c.l.b16 %v620
        %v653 = vunpack.c.l.b16 %v621
        %v654 = vunpack.c.l.b16 %v622
        %v655 = vunpack.c.l.b16 %v623
        %v656 = vunpack.c.l.b16 %v624
        %v657 = vunpack.c.l.b16 %v625
        %v658 = vpack.c.b16 %v643, %v642
        %v659 = vpack.c.b16 %v645, %v644
        %v660 = vpack.c.b16 %v647, %v646
        %v661 = vpack.c.b16 %v649, %v648
        %v662 = vpack.c.b16 %v651, %v650
        %v663 = vpack.c.b16 %v653, %v652
        %v664 = vpack.c.b16 %v655, %v654
        %v665 = vpack.c.b16 %v657, %v656
        %674 = vmatprep.subr.bf16.mxu0 0
        %675 = vmatpush1.bf16.msra.mxu0 %v658
        %676 = vmatprep.subr.bf16.mxu0 0
        %677 = vmatpush1.bf16.msra.mxu0 %v659
        %678 = vmatprep.subr.bf16.mxu0 0
        %679 = vmatpush1.bf16.msra.mxu0 %v660
        %680 = vmatprep.subr.bf16.mxu0 0
        %681 = vmatpush1.bf16.msra.mxu0 %v661
        %682 = vmatprep.subr.bf16.mxu0 0
        %683 = vmatpush1.bf16.msra.mxu0 %v662
        %684 = vmatprep.subr.bf16.mxu0 0
        %685 = vmatpush1.bf16.msra.mxu0 %v663
        %686 = vmatprep.subr.bf16.mxu0 0
        %687 = vmatpush1.bf16.msra.mxu0 %v664
        %688 = vmatprep.subr.bf16.mxu0 0
        %689 = vmatpush1.bf16.msra.mxu0 %v665
        %690 = vmatprep.subr.bf16.mxu0 0
        %691 = vmatpush1.bf16.msra.mxu0 0
        %692 = vmatprep.subr.bf16.mxu0 0
        %693 = vmatpush1.bf16.msra.mxu0 0
        %694 = vmatprep.subr.bf16.mxu0 0
        %695 = vmatpush1.bf16.msra.mxu0 0
        %696 = vmatprep.subr.bf16.mxu0 0
        %697 = vmatpush1.bf16.msra.mxu0 0
        %698 = vmatprep.subr.bf16.mxu0 0
        %699 = vmatpush1.bf16.msra.mxu0 0
        %700 = vmatprep.subr.bf16.mxu0 0
        %701 = vmatpush1.bf16.msra.mxu0 0
        %702 = vmatprep.subr.bf16.mxu0 0
        %703 = vmatpush1.bf16.msra.mxu0 0
        %704 = vmatprep.subr.bf16.mxu0 0
        %705 = vmatpush1.bf16.msra.mxu0 0
        %706 = vmatprep.mubr.bf16.mxu0 0
        %707 = vmatmul.mubr.bf16.gmra.mrb[0].mxu0 %v607
        %v708 = vpop.f32.mrb[0].mxu0
        %v709 = vadd.f32 0.0, %v708
        %v710 = vpop.f32.mrb[0].mxu0
        %v711 = vpop.f32.mrb[0].mxu0
        %v712 = vadd.f32 0.0, %v711
        %v713 = vpop.f32.mrb[0].mxu0
        %714 = vmatprep.mubr.bf16.mxu0 0
        %715 = vmatmul.mubr.bf16.gmra.mrb[0].mxu0 %v608
        %v716 = vpop.f32.mrb[0].mxu0
        %v717 = vadd.f32 0.0, %v716
        %v718 = vpop.f32.mrb[0].mxu0
        %v719 = vpop.f32.mrb[0].mxu0
        %v720 = vadd.f32 0.0, %v719
        %v721 = vpop.f32.mrb[0].mxu0
        %722 = vdwg.mxu0
        %v723 = vadd.f32 %v589, %v709
        %v724 = vadd.f32 %v592, %v712
        %v725 = vadd.f32 %v597, %v717
        %v726 = vadd.f32 %v600, %v720
        %v727 = vld [vmem:[#allocation2 + $0x3] sm:$0xff]
        %v728 = vld [vmem:[#allocation2 + $0xb] sm:$0xff]
        %v729 = vld [vmem:[#allocation2 + $0x13] sm:$0xff]
        %v730 = vld [vmem:[#allocation2 + $0x1b] sm:$0xff]
        %v731 = vpack.c.bf16 %v728, %v727
        %v732 = vpack.c.bf16 %v730, %v729
        %s733 = scalar_lea.vmem %s3, 192
        %v734 = vld [vmem:[%s733] sm:$0xf]
        %v735 = vld [vmem:[%s733 + $0x4] sm:$0xf]
        %v736 = vld [vmem:[%s733 + $0x8] sm:$0xf]
        %v737 = vld [vmem:[%s733 + $0xc] sm:$0xf]
        %v738 = vld [vmem:[%s733 + $0x10] sm:$0xf]
        %v739 = vld [vmem:[%s733 + $0x14] sm:$0xf]
        %v740 = vld [vmem:[%s733 + $0x18] sm:$0xf]
        %v741 = vld [vmem:[%s733 + $0x1c] sm:$0xf]
        %v742 = vld [vmem:[%s733 + $0x20] sm:$0xf]
        %v743 = vld [vmem:[%s733 + $0x24] sm:$0xf]
        %v744 = vld [vmem:[%s733 + $0x28] sm:$0xf]
        %v745 = vld [vmem:[%s733 + $0x2c] sm:$0xf]
        %v746 = vld [vmem:[%s733 + $0x30] sm:$0xf]
        %v747 = vld [vmem:[%s733 + $0x34] sm:$0xf]
        %v748 = vld [vmem:[%s733 + $0x38] sm:$0xf]
        %v749 = vld [vmem:[%s733 + $0x3c] sm:$0xf]
        %v766 = vunpack.c.l.b16 %v734
        %v767 = vunpack.c.l.b16 %v735
        %v768 = vunpack.c.l.b16 %v736
        %v769 = vunpack.c.l.b16 %v737
        %v770 = vunpack.c.l.b16 %v738
        %v771 = vunpack.c.l.b16 %v739
        %v772 = vunpack.c.l.b16 %v740
        %v773 = vunpack.c.l.b16 %v741
        %v774 = vunpack.c.l.b16 %v742
        %v775 = vunpack.c.l.b16 %v743
        %v776 = vunpack.c.l.b16 %v744
        %v777 = vunpack.c.l.b16 %v745
        %v778 = vunpack.c.l.b16 %v746
        %v779 = vunpack.c.l.b16 %v747
        %v780 = vunpack.c.l.b16 %v748
        %v781 = vunpack.c.l.b16 %v749
        %v782 = vpack.c.b16 %v767, %v766
        %v783 = vpack.c.b16 %v769, %v768
        %v784 = vpack.c.b16 %v771, %v770
        %v785 = vpack.c.b16 %v773, %v772
        %v786 = vpack.c.b16 %v775, %v774
        %v787 = vpack.c.b16 %v777, %v776
        %v788 = vpack.c.b16 %v779, %v778
        %v789 = vpack.c.b16 %v781, %v780
        %798 = vmatprep.subr.bf16.mxu0 0
        %799 = vmatpush1.bf16.msra.mxu0 %v782
        %800 = vmatprep.subr.bf16.mxu0 0
        %801 = vmatpush1.bf16.msra.mxu0 %v783
        %802 = vmatprep.subr.bf16.mxu0 0
        %803 = vmatpush1.bf16.msra.mxu0 %v784
        %804 = vmatprep.subr.bf16.mxu0 0
        %805 = vmatpush1.bf16.msra.mxu0 %v785
        %806 = vmatprep.subr.bf16.mxu0 0
        %807 = vmatpush1.bf16.msra.mxu0 %v786
        %808 = vmatprep.subr.bf16.mxu0 0
        %809 = vmatpush1.bf16.msra.mxu0 %v787
        %810 = vmatprep.subr.bf16.mxu0 0
        %811 = vmatpush1.bf16.msra.mxu0 %v788
        %812 = vmatprep.subr.bf16.mxu0 0
        %813 = vmatpush1.bf16.msra.mxu0 %v789
        %814 = vmatprep.subr.bf16.mxu0 0
        %815 = vmatpush1.bf16.msra.mxu0 0
        %816 = vmatprep.subr.bf16.mxu0 0
        %817 = vmatpush1.bf16.msra.mxu0 0
        %818 = vmatprep.subr.bf16.mxu0 0
        %819 = vmatpush1.bf16.msra.mxu0 0
        %820 = vmatprep.subr.bf16.mxu0 0
        %821 = vmatpush1.bf16.msra.mxu0 0
        %822 = vmatprep.subr.bf16.mxu0 0
        %823 = vmatpush1.bf16.msra.mxu0 0
        %824 = vmatprep.subr.bf16.mxu0 0
        %825 = vmatpush1.bf16.msra.mxu0 0
        %826 = vmatprep.subr.bf16.mxu0 0
        %827 = vmatpush1.bf16.msra.mxu0 0
        %828 = vmatprep.subr.bf16.mxu0 0
        %829 = vmatpush1.bf16.msra.mxu0 0
        %830 = vmatprep.mubr.bf16.mxu0 0
        %831 = vmatmul.mubr.bf16.gmra.mrb[0].mxu0 %v731
        %v832 = vpop.f32.mrb[0].mxu0
        %v833 = vadd.f32 0.0, %v832
        %v834 = vpop.f32.mrb[0].mxu0
        %v835 = vpop.f32.mrb[0].mxu0
        %v836 = vadd.f32 0.0, %v835
        %v837 = vpop.f32.mrb[0].mxu0
        %838 = vmatprep.mubr.bf16.mxu0 0
        %839 = vmatmul.mubr.bf16.gmra.mrb[0].mxu0 %v732
        %v840 = vpop.f32.mrb[0].mxu0
        %v841 = vadd.f32 0.0, %v840
        %v842 = vpop.f32.mrb[0].mxu0
        %v843 = vpop.f32.mrb[0].mxu0
        %v844 = vadd.f32 0.0, %v843
        %v845 = vpop.f32.mrb[0].mxu0
        %846 = vdwg.mxu0
        %v847 = vadd.f32 %v723, %v833
        %v848 = vadd.f32 %v724, %v836
        %v849 = vadd.f32 %v725, %v841
        %v850 = vadd.f32 %v726, %v844
        %v851 = vld [vmem:[#allocation2 + $0x4] sm:$0xff]
        %v852 = vld [vmem:[#allocation2 + $0xc] sm:$0xff]
        %v853 = vld [vmem:[#allocation2 + $0x14] sm:$0xff]
        %v854 = vld [vmem:[#allocation2 + $0x1c] sm:$0xff]
        %v855 = vpack.c.bf16 %v852, %v851
        %v856 = vpack.c.bf16 %v854, %v853
        %s857 = scalar_lea.vmem %s3, 256
        %v858 = vld [vmem:[%s857] sm:$0xf]
        %v859 = vld [vmem:[%s857 + $0x4] sm:$0xf]
        %v860 = vld [vmem:[%s857 + $0x8] sm:$0xf]
        %v861 = vld [vmem:[%s857 + $0xc] sm:$0xf]
        %v862 = vld [vmem:[%s857 + $0x10] sm:$0xf]
        %v863 = vld [vmem:[%s857 + $0x14] sm:$0xf]
        %v864 = vld [vmem:[%s857 + $0x18] sm:$0xf]
        %v865 = vld [vmem:[%s857 + $0x1c] sm:$0xf]
        %v866 = vld [vmem:[%s857 + $0x20] sm:$0xf]
        %v867 = vld [vmem:[%s857 + $0x24] sm:$0xf]
        %v868 = vld [vmem:[%s857 + $0x28] sm:$0xf]
        %v869 = vld [vmem:[%s857 + $0x2c] sm:$0xf]
        %v870 = vld [vmem:[%s857 + $0x30] sm:$0xf]
        %v871 = vld [vmem:[%s857 + $0x34] sm:$0xf]
        %v872 = vld [vmem:[%s857 + $0x38] sm:$0xf]
        %v873 = vld [vmem:[%s857 + $0x3c] sm:$0xf]
        %v890 = vunpack.c.l.b16 %v858
        %v891 = vunpack.c.l.b16 %v859
        %v892 = vunpack.c.l.b16 %v860
        %v893 = vunpack.c.l.b16 %v861
        %v894 = vunpack.c.l.b16 %v862
        %v895 = vunpack.c.l.b16 %v863
        %v896 = vunpack.c.l.b16 %v864
        %v897 = vunpack.c.l.b16 %v865
        %v898 = vunpack.c.l.b16 %v866
        %v899 = vunpack.c.l.b16 %v867
        %v900 = vunpack.c.l.b16 %v868
        %v901 = vunpack.c.l.b16 %v869
        %v902 = vunpack.c.l.b16 %v870
        %v903 = vunpack.c.l.b16 %v871
        %v904 = vunpack.c.l.b16 %v872
        %v905 = vunpack.c.l.b16 %v873
        %v906 = vpack.c.b16 %v891, %v890
        %v907 = vpack.c.b16 %v893, %v892
        %v908 = vpack.c.b16 %v895, %v894
        %v909 = vpack.c.b16 %v897, %v896
        %v910 = vpack.c.b16 %v899, %v898
        %v911 = vpack.c.b16 %v901, %v900
        %v912 = vpack.c.b16 %v903, %v902
        %v913 = vpack.c.b16 %v905, %v904
        %922 = vmatprep.subr.bf16.mxu0 0
        %923 = vmatpush1.bf16.msra.mxu0 %v906
        %924 = vmatprep.subr.bf16.mxu0 0
        %925 = vmatpush1.bf16.msra.mxu0 %v907
        %926 = vmatprep.subr.bf16.mxu0 0
        %927 = vmatpush1.bf16.msra.mxu0 %v908
        %928 = vmatprep.subr.bf16.mxu0 0
        %929 = vmatpush1.bf16.msra.mxu0 %v909
        %930 = vmatprep.subr.bf16.mxu0 0
        %931 = vmatpush1.bf16.msra.mxu0 %v910
        %932 = vmatprep.subr.bf16.mxu0 0
        %933 = vmatpush1.bf16.msra.mxu0 %v911
        %934 = vmatprep.subr.bf16.mxu0 0
        %935 = vmatpush1.bf16.msra.mxu0 %v912
        %936 = vmatprep.subr.bf16.mxu0 0
        %937 = vmatpush1.bf16.msra.mxu0 %v913
        %938 = vmatprep.subr.bf16.mxu0 0
        %939 = vmatpush1.bf16.msra.mxu0 0
        %940 = vmatprep.subr.bf16.mxu0 0
        %941 = vmatpush1.bf16.msra.mxu0 0
        %942 = vmatprep.subr.bf16.mxu0 0
        %943 = vmatpush1.bf16.msra.mxu0 0
        %944 = vmatprep.subr.bf16.mxu0 0
        %945 = vmatpush1.bf16.msra.mxu0 0
        %946 = vmatprep.subr.bf16.mxu0 0
        %947 = vmatpush1.bf16.msra.mxu0 0
        %948 = vmatprep.subr.bf16.mxu0 0
        %949 = vmatpush1.bf16.msra.mxu0 0
        %950 = vmatprep.subr.bf16.mxu0 0
        %951 = vmatpush1.bf16.msra.mxu0 0
        %952 = vmatprep.subr.bf16.mxu0 0
        %953 = vmatpush1.bf16.msra.mxu0 0
        %954 = vmatprep.mubr.bf16.mxu0 0
        %955 = vmatmul.mubr.bf16.gmra.mrb[0].mxu0 %v855
        %v956 = vpop.f32.mrb[0].mxu0
        %v957 = vadd.f32 0.0, %v956
        %v958 = vpop.f32.mrb[0].mxu0
        %v959 = vpop.f32.mrb[0].mxu0
        %v960 = vadd.f32 0.0, %v959
        %v961 = vpop.f32.mrb[0].mxu0
        %962 = vmatprep.mubr.bf16.mxu0 0
        %963 = vmatmul.mubr.bf16.gmra.mrb[0].mxu0 %v856
        %v964 = vpop.f32.mrb[0].mxu0
        %v965 = vadd.f32 0.0, %v964
        %v966 = vpop.f32.mrb[0].mxu0
        %v967 = vpop.f32.mrb[0].mxu0
        %v968 = vadd.f32 0.0, %v967
        %v969 = vpop.f32.mrb[0].mxu0
        %970 = vdwg.mxu0
        %v971 = vadd.f32 %v847, %v957
        %v972 = vadd.f32 %v848, %v960
        %v973 = vadd.f32 %v849, %v965
        %v974 = vadd.f32 %v850, %v968
        %v975 = vld [vmem:[%s4] sm:$0x1]
        %v977 = vlaneseq
        %v978 = vshrl.u32 %v977, 7
        %v979 = vsub.s32 0, %v978
        %v980 = vrot.slane %v975, %v979
        %v982 = vmul.f32 %v971, %v980
        %v983 = vmul.f32 %v972, %v980
        %v984 = vmul.f32 %v973, %v980
        %v985 = vmul.f32 %v974, %v980
        %v986 = vld [vmem:[%s5] sm:$0x1]
        %v988 = vlaneseq
        %v989 = vshrl.u32 %v988, 7
        %v990 = vsub.s32 0, %v989
        %v991 = vrot.slane %v986, %v990
        %v993 = vadd.f32 %v982, %v991
        %v994 = vadd.f32 %v983, %v991
        %v995 = vadd.f32 %v984, %v991
        %v996 = vadd.f32 %v985, %v991
        %v997 = vmax.f32 %v993, 0.0
        %v998 = vmax.f32 %v994, 0.0
        %v999 = vmax.f32 %v995, 0.0
        %v1000 = vmax.f32 %v996, 0.0
        %1001 = vst [vmem:[#allocation3 + $0x2] sm:$0xff] %v997
        %1002 = vst [vmem:[#allocation3 + $0xa] sm:$0xff] %v998
        %1003 = vst [vmem:[#allocation3 + $0x12] sm:$0xff] %v999
        %1004 = vst [vmem:[#allocation3 + $0x1a] sm:$0xff] %v1000
        %v1005 = vld [vmem:[#allocation3] ss:$2 sm:$0xff]
        %s1006 = scalar_lea.vmem [#allocation3], 16
        %v1007 = vld [vmem:[%s1006] ss:$2 sm:$0xff]
        %v1008 = vpack.c.bf16 %v1007, %v1005
        %v1009 = vld [vmem:[#allocation5] sm:$0xf]
        %v1010 = vld [vmem:[#allocation5 + $0x4] sm:$0xf]
        %v1011 = vld [vmem:[#allocation5 + $0x8] sm:$0xf]
        %v1012 = vld [vmem:[#allocation5 + $0xc] sm:$0xf]
        %v1013 = vld [vmem:[#allocation5 + $0x10] sm:$0xf]
        %v1014 = vld [vmem:[#allocation5 + $0x14] sm:$0xf]
        %v1015 = vld [vmem:[#allocation5 + $0x18] sm:$0xf]
        %v1016 = vld [vmem:[#allocation5 + $0x1c] sm:$0xf]
        %v1017 = vld [vmem:[#allocation5 + $0x20] sm:$0xf]
        %v1018 = vld [vmem:[#allocation5 + $0x24] sm:$0xf]
        %v1019 = vld [vmem:[#allocation5 + $0x28] sm:$0xf]
        %v1020 = vld [vmem:[#allocation5 + $0x2c] sm:$0xf]
        %v1021 = vld [vmem:[#allocation5 + $0x30] sm:$0xf]
        %v1022 = vld [vmem:[#allocation5 + $0x34] sm:$0xf]
        %v1023 = vld [vmem:[#allocation5 + $0x38] sm:$0xf]
        %v1024 = vld [vmem:[#allocation5 + $0x3c] sm:$0xf]
        %s1025 = scalar_lea.vmem [#allocation3], 1
        %v1026 = vld [vmem:[%s1025] ss:$2 sm:$0xff]
        %s1027 = scalar_lea.vmem [#allocation3], 17
        %v1028 = vld [vmem:[%s1027] ss:$2 sm:$0xff]
        %v1029 = vpack.c.bf16 %v1028, %v1026
        %s1030 = scalar_lea.vmem [#allocation5], 64
        %v1031 = vld [vmem:[%s1030] sm:$0xf]
        %v1032 = vld [vmem:[%s1030 + $0x4] sm:$0xf]
        %v1033 = vld [vmem:[%s1030 + $0x8] sm:$0xf]
        %v1034 = vld [vmem:[%s1030 + $0xc] sm:$0xf]
        %v1035 = vld [vmem:[%s1030 + $0x10] sm:$0xf]
        %v1036 = vld [vmem:[%s1030 + $0x14] sm:$0xf]
        %v1037 = vld [vmem:[%s1030 + $0x18] sm:$0xf]
        %v1038 = vld [vmem:[%s1030 + $0x1c] sm:$0xf]
        %v1039 = vld [vmem:[%s1030 + $0x20] sm:$0xf]
        %v1040 = vld [vmem:[%s1030 + $0x24] sm:$0xf]
        %v1041 = vld [vmem:[%s1030 + $0x28] sm:$0xf]
        %v1042 = vld [vmem:[%s1030 + $0x2c] sm:$0xf]
        %v1043 = vld [vmem:[%s1030 + $0x30] sm:$0xf]
        %v1044 = vld [vmem:[%s1030 + $0x34] sm:$0xf]
        %v1045 = vld [vmem:[%s1030 + $0x38] sm:$0xf]
        %v1046 = vld [vmem:[%s1030 + $0x3c] sm:$0xf]
        %v1063 = vunpack.c.l.b16 %v1031
        %v1064 = vunpack.c.l.b16 %v1032
        %v1065 = vunpack.c.l.b16 %v1033
        %v1066 = vunpack.c.l.b16 %v1034
        %v1067 = vunpack.c.l.b16 %v1035
        %v1068 = vunpack.c.l.b16 %v1036
        %v1069 = vunpack.c.l.b16 %v1037
        %v1070 = vunpack.c.l.b16 %v1038
        %v1071 = vunpack.c.l.b16 %v1039
        %v1072 = vunpack.c.l.b16 %v1040
        %v1073 = vunpack.c.l.b16 %v1041
        %v1074 = vunpack.c.l.b16 %v1042
        %v1075 = vunpack.c.l.b16 %v1043
        %v1076 = vunpack.c.l.b16 %v1044
        %v1077 = vunpack.c.l.b16 %v1045
        %v1078 = vunpack.c.l.b16 %v1046
        %v1079 = vpack.c.b16 %v1064, %v1063
        %v1080 = vpack.c.b16 %v1066, %v1065
        %v1081 = vpack.c.b16 %v1068, %v1067
        %v1082 = vpack.c.b16 %v1070, %v1069
        %v1083 = vpack.c.b16 %v1072, %v1071
        %v1084 = vpack.c.b16 %v1074, %v1073
        %v1085 = vpack.c.b16 %v1076, %v1075
        %v1086 = vpack.c.b16 %v1078, %v1077
        %1095 = vmatprep.subr.bf16.mxu0 0
        %1096 = vmatpush1.bf16.msra.mxu0 %v1079
        %1097 = vmatprep.subr.bf16.mxu0 0
        %1098 = vmatpush1.bf16.msra.mxu0 %v1080
        %1099 = vmatprep.subr.bf16.mxu0 0
        %1100 = vmatpush1.bf16.msra.mxu0 %v1081
        %1101 = vmatprep.subr.bf16.mxu0 0
        %1102 = vmatpush1.bf16.msra.mxu0 %v1082
        %1103 = vmatprep.subr.bf16.mxu0 0
        %1104 = vmatpush1.bf16.msra.mxu0 %v1083
        %1105 = vmatprep.subr.bf16.mxu0 0
        %1106 = vmatpush1.bf16.msra.mxu0 %v1084
        %1107 = vmatprep.subr.bf16.mxu0 0
        %1108 = vmatpush1.bf16.msra.mxu0 %v1085
        %1109 = vmatprep.subr.bf16.mxu0 0
        %1110 = vmatpush1.bf16.msra.mxu0 %v1086
        %1111 = vmatprep.subr.bf16.mxu0 0
        %1112 = vmatpush1.bf16.msra.mxu0 0
        %1113 = vmatprep.subr.bf16.mxu0 0
        %1114 = vmatpush1.bf16.msra.mxu0 0
        %1115 = vmatprep.subr.bf16.mxu0 0
        %1116 = vmatpush1.bf16.msra.mxu0 0
        %1117 = vmatprep.subr.bf16.mxu0 0
        %1118 = vmatpush1.bf16.msra.mxu0 0
        %1119 = vmatprep.subr.bf16.mxu0 0
        %1120 = vmatpush1.bf16.msra.mxu0 0
        %1121 = vmatprep.subr.bf16.mxu0 0
        %1122 = vmatpush1.bf16.msra.mxu0 0
        %1123 = vmatprep.subr.bf16.mxu0 0
        %1124 = vmatpush1.bf16.msra.mxu0 0
        %1125 = vmatprep.subr.bf16.mxu0 0
        %1126 = vmatpush1.bf16.msra.mxu0 0
        %1127 = vmatprep.mubr.bf16.mxu0 0
        %1128 = vmatmul.mubr.bf16.gmra.mrb[0].mxu0 %v1029
        %v1129 = vpop.f32.mrb[0].mxu0
        %v1130 = vadd.f32 0.0, %v1129
        %v1131 = vpop.f32.mrb[0].mxu0
        %v1132 = vpop.f32.mrb[0].mxu0
        %v1133 = vadd.f32 0.0, %v1132
        %v1134 = vpop.f32.mrb[0].mxu0
        %1135 = vdwg.mxu0
        %v1152 = vunpack.c.l.b16 %v1009
        %v1153 = vunpack.c.l.b16 %v1010
        %v1154 = vunpack.c.l.b16 %v1011
        %v1155 = vunpack.c.l.b16 %v1012
        %v1156 = vunpack.c.l.b16 %v1013
        %v1157 = vunpack.c.l.b16 %v1014
        %v1158 = vunpack.c.l.b16 %v1015
        %v1159 = vunpack.c.l.b16 %v1016
        %v1160 = vunpack.c.l.b16 %v1017
        %v1161 = vunpack.c.l.b16 %v1018
        %v1162 = vunpack.c.l.b16 %v1019
        %v1163 = vunpack.c.l.b16 %v1020
        %v1164 = vunpack.c.l.b16 %v1021
        %v1165 = vunpack.c.l.b16 %v1022
        %v1166 = vunpack.c.l.b16 %v1023
        %v1167 = vunpack.c.l.b16 %v1024
        %v1168 = vpack.c.b16 %v1153, %v1152
        %v1169 = vpack.c.b16 %v1155, %v1154
        %v1170 = vpack.c.b16 %v1157, %v1156
        %v1171 = vpack.c.b16 %v1159, %v1158
        %v1172 = vpack.c.b16 %v1161, %v1160
        %v1173 = vpack.c.b16 %v1163, %v1162
        %v1174 = vpack.c.b16 %v1165, %v1164
        %v1175 = vpack.c.b16 %v1167, %v1166
        %1184 = vmatprep.subr.bf16.mxu0 0
        %1185 = vmatpush1.bf16.msra.mxu0 %v1168
        %1186 = vmatprep.subr.bf16.mxu0 0
        %1187 = vmatpush1.bf16.msra.mxu0 %v1169
        %1188 = vmatprep.subr.bf16.mxu0 0
        %1189 = vmatpush1.bf16.msra.mxu0 %v1170
        %1190 = vmatprep.subr.bf16.mxu0 0
        %1191 = vmatpush1.bf16.msra.mxu0 %v1171
        %1192 = vmatprep.subr.bf16.mxu0 0
        %1193 = vmatpush1.bf16.msra.mxu0 %v1172
        %1194 = vmatprep.subr.bf16.mxu0 0
        %1195 = vmatpush1.bf16.msra.mxu0 %v1173
        %1196 = vmatprep.subr.bf16.mxu0 0
        %1197 = vmatpush1.bf16.msra.mxu0 %v1174
        %1198 = vmatprep.subr.bf16.mxu0 0
        %1199 = vmatpush1.bf16.msra.mxu0 %v1175
        %1200 = vmatprep.subr.bf16.mxu0 0
        %1201 = vmatpush1.bf16.msra.mxu0 0
        %1202 = vmatprep.subr.bf16.mxu0 0
        %1203 = vmatpush1.bf16.msra.mxu0 0
        %1204 = vmatprep.subr.bf16.mxu0 0
        %1205 = vmatpush1.bf16.msra.mxu0 0
        %1206 = vmatprep.subr.bf16.mxu0 0
        %1207 = vmatpush1.bf16.msra.mxu0 0
        %1208 = vmatprep.subr.bf16.mxu0 0
        %1209 = vmatpush1.bf16.msra.mxu0 0
        %1210 = vmatprep.subr.bf16.mxu0 0
        %1211 = vmatpush1.bf16.msra.mxu0 0
        %1212 = vmatprep.subr.bf16.mxu0 0
        %1213 = vmatpush1.bf16.msra.mxu0 0
        %1214 = vmatprep.subr.bf16.mxu0 0
        %1215 = vmatpush1.bf16.msra.mxu0 0
        %1216 = vmatprep.mubr.bf16.mxu0 0
        %1217 = vmatmul.mubr.bf16.gmra.mrb[0].mxu0 %v1008
        %v1218 = vpop.f32.mrb[0].mxu0
        %v1219 = vadd.f32 %v1130, %v1218
        %v1220 = vpop.f32.mrb[0].mxu0
        %v1221 = vpop.f32.mrb[0].mxu0
        %v1222 = vadd.f32 %v1133, %v1221
        %v1223 = vpop.f32.mrb[0].mxu0
        %1224 = vdwg.mxu0
        %s1225 = scalar_lea.vmem [#allocation3], 2
        %v1226 = vld [vmem:[%s1225] ss:$2 sm:$0xff]
        %s1227 = scalar_lea.vmem [#allocation3], 18
        %v1228 = vld [vmem:[%s1227] ss:$2 sm:$0xff]
        %v1229 = vpack.c.bf16 %v1228, %v1226
        %s1230 = scalar_lea.vmem [#allocation5], 128
        %v1231 = vld [vmem:[%s1230] sm:$0xf]
        %v1232 = vld [vmem:[%s1230 + $0x4] sm:$0xf]
        %v1233 = vld [vmem:[%s1230 + $0x8] sm:$0xf]
        %v1234 = vld [vmem:[%s1230 + $0xc] sm:$0xf]
        %v1235 = vld [vmem:[%s1230 + $0x10] sm:$0xf]
        %v1236 = vld [vmem:[%s1230 + $0x14] sm:$0xf]
        %v1237 = vld [vmem:[%s1230 + $0x18] sm:$0xf]
        %v1238 = vld [vmem:[%s1230 + $0x1c] sm:$0xf]
        %v1239 = vld [vmem:[%s1230 + $0x20] sm:$0xf]
        %v1240 = vld [vmem:[%s1230 + $0x24] sm:$0xf]
        %v1241 = vld [vmem:[%s1230 + $0x28] sm:$0xf]
        %v1242 = vld [vmem:[%s1230 + $0x2c] sm:$0xf]
        %v1243 = vld [vmem:[%s1230 + $0x30] sm:$0xf]
        %v1244 = vld [vmem:[%s1230 + $0x34] sm:$0xf]
        %v1245 = vld [vmem:[%s1230 + $0x38] sm:$0xf]
        %v1246 = vld [vmem:[%s1230 + $0x3c] sm:$0xf]
        %v1263 = vunpack.c.l.b16 %v1231
        %v1264 = vunpack.c.l.b16 %v1232
        %v1265 = vunpack.c.l.b16 %v1233
        %v1266 = vunpack.c.l.b16 %v1234
        %v1267 = vunpack.c.l.b16 %v1235
        %v1268 = vunpack.c.l.b16 %v1236
        %v1269 = vunpack.c.l.b16 %v1237
        %v1270 = vunpack.c.l.b16 %v1238
        %v1271 = vunpack.c.l.b16 %v1239
        %v1272 = vunpack.c.l.b16 %v1240
        %v1273 = vunpack.c.l.b16 %v1241
        %v1274 = vunpack.c.l.b16 %v1242
        %v1275 = vunpack.c.l.b16 %v1243
        %v1276 = vunpack.c.l.b16 %v1244
        %v1277 = vunpack.c.l.b16 %v1245
        %v1278 = vunpack.c.l.b16 %v1246
        %v1279 = vpack.c.b16 %v1264, %v1263
        %v1280 = vpack.c.b16 %v1266, %v1265
        %v1281 = vpack.c.b16 %v1268, %v1267
        %v1282 = vpack.c.b16 %v1270, %v1269
        %v1283 = vpack.c.b16 %v1272, %v1271
        %v1284 = vpack.c.b16 %v1274, %v1273
        %v1285 = vpack.c.b16 %v1276, %v1275
        %v1286 = vpack.c.b16 %v1278, %v1277
        %1295 = vmatprep.subr.bf16.mxu0 0
        %1296 = vmatpush1.bf16.msra.mxu0 %v1279
        %1297 = vmatprep.subr.bf16.mxu0 0
        %1298 = vmatpush1.bf16.msra.mxu0 %v1280
        %1299 = vmatprep.subr.bf16.mxu0 0
        %1300 = vmatpush1.bf16.msra.mxu0 %v1281
        %1301 = vmatprep.subr.bf16.mxu0 0
        %1302 = vmatpush1.bf16.msra.mxu0 %v1282
        %1303 = vmatprep.subr.bf16.mxu0 0
        %1304 = vmatpush1.bf16.msra.mxu0 %v1283
        %1305 = vmatprep.subr.bf16.mxu0 0
        %1306 = vmatpush1.bf16.msra.mxu0 %v1284
        %1307 = vmatprep.subr.bf16.mxu0 0
        %1308 = vmatpush1.bf16.msra.mxu0 %v1285
        %1309 = vmatprep.subr.bf16.mxu0 0
        %1310 = vmatpush1.bf16.msra.mxu0 %v1286
        %1311 = vmatprep.subr.bf16.mxu0 0
        %1312 = vmatpush1.bf16.msra.mxu0 0
        %1313 = vmatprep.subr.bf16.mxu0 0
        %1314 = vmatpush1.bf16.msra.mxu0 0
        %1315 = vmatprep.subr.bf16.mxu0 0
        %1316 = vmatpush1.bf16.msra.mxu0 0
        %1317 = vmatprep.subr.bf16.mxu0 0
        %1318 = vmatpush1.bf16.msra.mxu0 0
        %1319 = vmatprep.subr.bf16.mxu0 0
        %1320 = vmatpush1.bf16.msra.mxu0 0
        %1321 = vmatprep.subr.bf16.mxu0 0
        %1322 = vmatpush1.bf16.msra.mxu0 0
        %1323 = vmatprep.subr.bf16.mxu0 0
        %1324 = vmatpush1.bf16.msra.mxu0 0
        %1325 = vmatprep.subr.bf16.mxu0 0
        %1326 = vmatpush1.bf16.msra.mxu0 0
        %1327 = vmatprep.mubr.bf16.mxu0 0
        %1328 = vmatmul.mubr.bf16.gmra.mrb[0].mxu0 %v1229
        %v1329 = vpop.f32.mrb[0].mxu0
        %v1330 = vadd.f32 0.0, %v1329
        %v1331 = vpop.f32.mrb[0].mxu0
        %v1332 = vpop.f32.mrb[0].mxu0
        %v1333 = vadd.f32 0.0, %v1332
        %v1334 = vpop.f32.mrb[0].mxu0
        %1335 = vdwg.mxu0
        %v1336 = vadd.f32 %v1219, %v1330
        %v1337 = vadd.f32 %v1222, %v1333
        %s1338 = scalar_lea.vmem [#allocation3], 3
        %v1339 = vld [vmem:[%s1338] ss:$2 sm:$0xff]
        %s1340 = scalar_lea.vmem [#allocation3], 19
        %v1341 = vld [vmem:[%s1340] ss:$2 sm:$0xff]
        %v1342 = vpack.c.bf16 %v1341, %v1339
        %s1343 = scalar_lea.vmem [#allocation5], 192
        %v1344 = vld [vmem:[%s1343] sm:$0xf]
        %v1345 = vld [vmem:[%s1343 + $0x4] sm:$0xf]
        %v1346 = vld [vmem:[%s1343 + $0x8] sm:$0xf]
        %v1347 = vld [vmem:[%s1343 + $0xc] sm:$0xf]
        %v1348 = vld [vmem:[%s1343 + $0x10] sm:$0xf]
        %v1349 = vld [vmem:[%s1343 + $0x14] sm:$0xf]
        %v1350 = vld [vmem:[%s1343 + $0x18] sm:$0xf]
        %v1351 = vld [vmem:[%s1343 + $0x1c] sm:$0xf]
        %v1352 = vld [vmem:[%s1343 + $0x20] sm:$0xf]
        %v1353 = vld [vmem:[%s1343 + $0x24] sm:$0xf]
        %v1354 = vld [vmem:[%s1343 + $0x28] sm:$0xf]
        %v1355 = vld [vmem:[%s1343 + $0x2c] sm:$0xf]
        %v1356 = vld [vmem:[%s1343 + $0x30] sm:$0xf]
        %v1357 = vld [vmem:[%s1343 + $0x34] sm:$0xf]
        %v1358 = vld [vmem:[%s1343 + $0x38] sm:$0xf]
        %v1359 = vld [vmem:[%s1343 + $0x3c] sm:$0xf]
        %v1376 = vunpack.c.l.b16 %v1344
        %v1377 = vunpack.c.l.b16 %v1345
        %v1378 = vunpack.c.l.b16 %v1346
        %v1379 = vunpack.c.l.b16 %v1347
        %v1380 = vunpack.c.l.b16 %v1348
        %v1381 = vunpack.c.l.b16 %v1349
        %v1382 = vunpack.c.l.b16 %v1350
        %v1383 = vunpack.c.l.b16 %v1351
        %v1384 = vunpack.c.l.b16 %v1352
        %v1385 = vunpack.c.l.b16 %v1353
        %v1386 = vunpack.c.l.b16 %v1354
        %v1387 = vunpack.c.l.b16 %v1355
        %v1388 = vunpack.c.l.b16 %v1356
        %v1389 = vunpack.c.l.b16 %v1357
        %v1390 = vunpack.c.l.b16 %v1358
        %v1391 = vunpack.c.l.b16 %v1359
        %v1392 = vpack.c.b16 %v1377, %v1376
        %v1393 = vpack.c.b16 %v1379, %v1378
        %v1394 = vpack.c.b16 %v1381, %v1380
        %v1395 = vpack.c.b16 %v1383, %v1382
        %v1396 = vpack.c.b16 %v1385, %v1384
        %v1397 = vpack.c.b16 %v1387, %v1386
        %v1398 = vpack.c.b16 %v1389, %v1388
        %v1399 = vpack.c.b16 %v1391, %v1390
        %1408 = vmatprep.subr.bf16.mxu0 0
        %1409 = vmatpush1.bf16.msra.mxu0 %v1392
        %1410 = vmatprep.subr.bf16.mxu0 0
        %1411 = vmatpush1.bf16.msra.mxu0 %v1393
        %1412 = vmatprep.subr.bf16.mxu0 0
        %1413 = vmatpush1.bf16.msra.mxu0 %v1394
        %1414 = vmatprep.subr.bf16.mxu0 0
        %1415 = vmatpush1.bf16.msra.mxu0 %v1395
        %1416 = vmatprep.subr.bf16.mxu0 0
        %1417 = vmatpush1.bf16.msra.mxu0 %v1396
        %1418 = vmatprep.subr.bf16.mxu0 0
        %1419 = vmatpush1.bf16.msra.mxu0 %v1397
        %1420 = vmatprep.subr.bf16.mxu0 0
        %1421 = vmatpush1.bf16.msra.mxu0 %v1398
        %1422 = vmatprep.subr.bf16.mxu0 0
        %1423 = vmatpush1.bf16.msra.mxu0 %v1399
        %1424 = vmatprep.subr.bf16.mxu0 0
        %1425 = vmatpush1.bf16.msra.mxu0 0
        %1426 = vmatprep.subr.bf16.mxu0 0
        %1427 = vmatpush1.bf16.msra.mxu0 0
        %1428 = vmatprep.subr.bf16.mxu0 0
        %1429 = vmatpush1.bf16.msra.mxu0 0
        %1430 = vmatprep.subr.bf16.mxu0 0
        %1431 = vmatpush1.bf16.msra.mxu0 0
        %1432 = vmatprep.subr.bf16.mxu0 0
        %1433 = vmatpush1.bf16.msra.mxu0 0
        %1434 = vmatprep.subr.bf16.mxu0 0
        %1435 = vmatpush1.bf16.msra.mxu0 0
        %1436 = vmatprep.subr.bf16.mxu0 0
        %1437 = vmatpush1.bf16.msra.mxu0 0
        %1438 = vmatprep.subr.bf16.mxu0 0
        %1439 = vmatpush1.bf16.msra.mxu0 0
        %1440 = vmatprep.mubr.bf16.mxu0 0
        %1441 = vmatmul.mubr.bf16.gmra.mrb[0].mxu0 %v1342
        %v1442 = vpop.f32.mrb[0].mxu0
        %v1443 = vadd.f32 0.0, %v1442
        %v1444 = vpop.f32.mrb[0].mxu0
        %v1445 = vpop.f32.mrb[0].mxu0
        %v1446 = vadd.f32 0.0, %v1445
        %v1447 = vpop.f32.mrb[0].mxu0
        %1448 = vdwg.mxu0
        %v1449 = vadd.f32 %v1336, %v1443
        %v1450 = vadd.f32 %v1337, %v1446
        %s1451 = scalar_lea.vmem [#allocation3], 4
        %v1452 = vld [vmem:[%s1451] ss:$2 sm:$0xff]
        %s1453 = scalar_lea.vmem [#allocation3], 20
        %v1454 = vld [vmem:[%s1453] ss:$2 sm:$0xff]
        %v1455 = vpack.c.bf16 %v1454, %v1452
        %s1456 = scalar_lea.vmem [#allocation5], 256
        %v1457 = vld [vmem:[%s1456] sm:$0xf]
        %v1458 = vld [vmem:[%s1456 + $0x4] sm:$0xf]
        %v1459 = vld [vmem:[%s1456 + $0x8] sm:$0xf]
        %v1460 = vld [vmem:[%s1456 + $0xc] sm:$0xf]
        %v1461 = vld [vmem:[%s1456 + $0x10] sm:$0xf]
        %v1462 = vld [vmem:[%s1456 + $0x14] sm:$0xf]
        %v1463 = vld [vmem:[%s1456 + $0x18] sm:$0xf]
        %v1464 = vld [vmem:[%s1456 + $0x1c] sm:$0xf]
        %v1465 = vld [vmem:[%s1456 + $0x20] sm:$0xf]
        %v1466 = vld [vmem:[%s1456 + $0x24] sm:$0xf]
        %v1467 = vld [vmem:[%s1456 + $0x28] sm:$0xf]
        %v1468 = vld [vmem:[%s1456 + $0x2c] sm:$0xf]
        %v1469 = vld [vmem:[%s1456 + $0x30] sm:$0xf]
        %v1470 = vld [vmem:[%s1456 + $0x34] sm:$0xf]
        %v1471 = vld [vmem:[%s1456 + $0x38] sm:$0xf]
        %v1472 = vld [vmem:[%s1456 + $0x3c] sm:$0xf]
        %v1489 = vunpack.c.l.b16 %v1457
        %v1490 = vunpack.c.l.b16 %v1458
        %v1491 = vunpack.c.l.b16 %v1459
        %v1492 = vunpack.c.l.b16 %v1460
        %v1493 = vunpack.c.l.b16 %v1461
        %v1494 = vunpack.c.l.b16 %v1462
        %v1495 = vunpack.c.l.b16 %v1463
        %v1496 = vunpack.c.l.b16 %v1464
        %v1497 = vunpack.c.l.b16 %v1465
        %v1498 = vunpack.c.l.b16 %v1466
        %v1499 = vunpack.c.l.b16 %v1467
        %v1500 = vunpack.c.l.b16 %v1468
        %v1501 = vunpack.c.l.b16 %v1469
        %v1502 = vunpack.c.l.b16 %v1470
        %v1503 = vunpack.c.l.b16 %v1471
        %v1504 = vunpack.c.l.b16 %v1472
        %v1505 = vpack.c.b16 %v1490, %v1489
        %v1506 = vpack.c.b16 %v1492, %v1491
        %v1507 = vpack.c.b16 %v1494, %v1493
        %v1508 = vpack.c.b16 %v1496, %v1495
        %v1509 = vpack.c.b16 %v1498, %v1497
        %v1510 = vpack.c.b16 %v1500, %v1499
        %v1511 = vpack.c.b16 %v1502, %v1501
        %v1512 = vpack.c.b16 %v1504, %v1503
        %1521 = vmatprep.subr.bf16.mxu0 0
        %1522 = vmatpush1.bf16.msra.mxu0 %v1505
        %1523 = vmatprep.subr.bf16.mxu0 0
        %1524 = vmatpush1.bf16.msra.mxu0 %v1506
        %1525 = vmatprep.subr.bf16.mxu0 0
        %1526 = vmatpush1.bf16.msra.mxu0 %v1507
        %1527 = vmatprep.subr.bf16.mxu0 0
        %1528 = vmatpush1.bf16.msra.mxu0 %v1508
        %1529 = vmatprep.subr.bf16.mxu0 0
        %1530 = vmatpush1.bf16.msra.mxu0 %v1509
        %1531 = vmatprep.subr.bf16.mxu0 0
        %1532 = vmatpush1.bf16.msra.mxu0 %v1510
        %1533 = vmatprep.subr.bf16.mxu0 0
        %1534 = vmatpush1.bf16.msra.mxu0 %v1511
        %1535 = vmatprep.subr.bf16.mxu0 0
        %1536 = vmatpush1.bf16.msra.mxu0 %v1512
        %1537 = vmatprep.subr.bf16.mxu0 0
        %1538 = vmatpush1.bf16.msra.mxu0 0
        %1539 = vmatprep.subr.bf16.mxu0 0
        %1540 = vmatpush1.bf16.msra.mxu0 0
        %1541 = vmatprep.subr.bf16.mxu0 0
        %1542 = vmatpush1.bf16.msra.mxu0 0
        %1543 = vmatprep.subr.bf16.mxu0 0
        %1544 = vmatpush1.bf16.msra.mxu0 0
        %1545 = vmatprep.subr.bf16.mxu0 0
        %1546 = vmatpush1.bf16.msra.mxu0 0
        %1547 = vmatprep.subr.bf16.mxu0 0
        %1548 = vmatpush1.bf16.msra.mxu0 0
        %1549 = vmatprep.subr.bf16.mxu0 0
        %1550 = vmatpush1.bf16.msra.mxu0 0
        %1551 = vmatprep.subr.bf16.mxu0 0
        %1552 = vmatpush1.bf16.msra.mxu0 0
        %1553 = vmatprep.mubr.bf16.mxu0 0
        %1554 = vmatmul.mubr.bf16.gmra.mrb[0].mxu0 %v1455
        %v1555 = vpop.f32.mrb[0].mxu0
        %v1556 = vadd.f32 0.0, %v1555
        %v1557 = vpop.f32.mrb[0].mxu0
        %v1558 = vpop.f32.mrb[0].mxu0
        %v1559 = vadd.f32 0.0, %v1558
        %v1560 = vpop.f32.mrb[0].mxu0
        %1561 = vdwg.mxu0
        %v1562 = vadd.f32 %v1449, %v1556
        %v1563 = vadd.f32 %v1450, %v1559
        %1564 = vst [vmem:[#allocation4] sm:$0xff] %v330
        %1565 = vst [vmem:[#allocation4 + $0x8] sm:$0xff] %v331
        %1566 = vst [vmem:[#allocation4 + $0x10] sm:$0xff] %v332
        %1567 = vst [vmem:[#allocation4 + $0x18] sm:$0xff] %v333
        %v1568 = vld [vmem:[#allocation4] ss:$2 sm:$0xff]
        %s1569 = scalar_lea.vmem [#allocation4], 16
        %v1570 = vld [vmem:[%s1569] ss:$2 sm:$0xff]
        %s1571 = scalar_lea.vmem [#allocation4], 1
        %v1572 = vld [vmem:[%s1571] ss:$2 sm:$0xff]
        %s1573 = scalar_lea.vmem [#allocation4], 17
        %v1574 = vld [vmem:[%s1573] ss:$2 sm:$0xff]
        %v1575 = vmax.f32 %v1568, %v1572
        %v1576 = vmax.f32 %v1570, %v1574
        %v1577 = vpack.c.bf16 %v1576, %v1575
        %v1578 = vld [vmem:[%s7] sm:$0xf]
        %v1579 = vld [vmem:[%s7 + $0x4] sm:$0xf]
        %v1580 = vld [vmem:[%s7 + $0x8] sm:$0xf]
        %v1581 = vld [vmem:[%s7 + $0xc] sm:$0xf]
        %v1582 = vld [vmem:[%s7 + $0x10] sm:$0xf]
        %v1583 = vld [vmem:[%s7 + $0x14] sm:$0xf]
        %v1584 = vld [vmem:[%s7 + $0x18] sm:$0xf]
        %v1585 = vld [vmem:[%s7 + $0x1c] sm:$0xf]
        %v1586 = vld [vmem:[%s7 + $0x20] sm:$0xf]
        %v1587 = vld [vmem:[%s7 + $0x24] sm:$0xf]
        %v1588 = vld [vmem:[%s7 + $0x28] sm:$0xf]
        %v1589 = vld [vmem:[%s7 + $0x2c] sm:$0xf]
        %v1590 = vld [vmem:[%s7 + $0x30] sm:$0xf]
        %v1591 = vld [vmem:[%s7 + $0x34] sm:$0xf]
        %v1592 = vld [vmem:[%s7 + $0x38] sm:$0xf]
        %v1593 = vld [vmem:[%s7 + $0x3c] sm:$0xf]
        %v1610 = vunpack.c.l.b16 %v1578
        %v1611 = vunpack.c.l.b16 %v1579
        %v1612 = vunpack.c.l.b16 %v1580
        %v1613 = vunpack.c.l.b16 %v1581
        %v1614 = vunpack.c.l.b16 %v1582
        %v1615 = vunpack.c.l.b16 %v1583
        %v1616 = vunpack.c.l.b16 %v1584
        %v1617 = vunpack.c.l.b16 %v1585
        %v1618 = vunpack.c.l.b16 %v1586
        %v1619 = vunpack.c.l.b16 %v1587
        %v1620 = vunpack.c.l.b16 %v1588
        %v1621 = vunpack.c.l.b16 %v1589
        %v1622 = vunpack.c.l.b16 %v1590
        %v1623 = vunpack.c.l.b16 %v1591
        %v1624 = vunpack.c.l.b16 %v1592
        %v1625 = vunpack.c.l.b16 %v1593
        %v1626 = vpack.c.b16 %v1611, %v1610
        %v1627 = vpack.c.b16 %v1613, %v1612
        %v1628 = vpack.c.b16 %v1615, %v1614
        %v1629 = vpack.c.b16 %v1617, %v1616
        %v1630 = vpack.c.b16 %v1619, %v1618
        %v1631 = vpack.c.b16 %v1621, %v1620
        %v1632 = vpack.c.b16 %v1623, %v1622
        %v1633 = vpack.c.b16 %v1625, %v1624
        %1642 = vmatprep.subr.bf16.mxu0 0
        %1643 = vmatpush1.bf16.msra.mxu0 %v1626
        %1644 = vmatprep.subr.bf16.mxu0 0
        %1645 = vmatpush1.bf16.msra.mxu0 %v1627
        %1646 = vmatprep.subr.bf16.mxu0 0
        %1647 = vmatpush1.bf16.msra.mxu0 %v1628
        %1648 = vmatprep.subr.bf16.mxu0 0
        %1649 = vmatpush1.bf16.msra.mxu0 %v1629
        %1650 = vmatprep.subr.bf16.mxu0 0
        %1651 = vmatpush1.bf16.msra.mxu0 %v1630
        %1652 = vmatprep.subr.bf16.mxu0 0
        %1653 = vmatpush1.bf16.msra.mxu0 %v1631
        %1654 = vmatprep.subr.bf16.mxu0 0
        %1655 = vmatpush1.bf16.msra.mxu0 %v1632
        %1656 = vmatprep.subr.bf16.mxu0 0
        %1657 = vmatpush1.bf16.msra.mxu0 %v1633
        %1658 = vmatprep.subr.bf16.mxu0 0
        %1659 = vmatpush1.bf16.msra.mxu0 0
        %1660 = vmatprep.subr.bf16.mxu0 0
        %1661 = vmatpush1.bf16.msra.mxu0 0
        %1662 = vmatprep.subr.bf16.mxu0 0
        %1663 = vmatpush1.bf16.msra.mxu0 0
        %1664 = vmatprep.subr.bf16.mxu0 0
        %1665 = vmatpush1.bf16.msra.mxu0 0
        %1666 = vmatprep.subr.bf16.mxu0 0
        %1667 = vmatpush1.bf16.msra.mxu0 0
        %1668 = vmatprep.subr.bf16.mxu0 0
        %1669 = vmatpush1.bf16.msra.mxu0 0
        %1670 = vmatprep.subr.bf16.mxu0 0
        %1671 = vmatpush1.bf16.msra.mxu0 0
        %1672 = vmatprep.subr.bf16.mxu0 0
        %1673 = vmatpush1.bf16.msra.mxu0 0
        %1674 = vmatprep.mubr.bf16.mxu0 0
        %1675 = vmatmul.mubr.bf16.gmra.mrb[0].mxu0 %v1577
        %v1676 = vpop.f32.mrb[0].mxu0
        %v1677 = vadd.f32 0.0, %v1676
        %v1678 = vpop.f32.mrb[0].mxu0
        %v1679 = vpop.f32.mrb[0].mxu0
        %v1680 = vadd.f32 0.0, %v1679
        %v1681 = vpop.f32.mrb[0].mxu0
        %1682 = vdwg.mxu0
        %v1683 = vadd.f32 %v1562, %v1677
        %v1684 = vadd.f32 %v1563, %v1680
        %v1685 = vpack.c.bf16 %v1684, %v1683
        %v1687 = vunpack.c.l.b16 %v1685
        %v1688 = vunpack.c.h.b16 %v1685
        %v1689 = vpack.c.b16 %v1687, %v1687
        %v1690 = vpack.c.b16 %v1688, %v1688
        %1693 = vst [vmem:[%s320] sm:$0xf] %v1689
        %1694 = vst [vmem:[%s320 + $0x4] sm:$0xf] %v1690
        %p1695 = scmp.lt.s32.totalorder %s20, 1
        %s1696 = scalar_select %p1695, %s20, 1
        %s1697 = smul.addr %s1696, 2
        %s1698 = smul.addr %s1697, 4
        %s1699 = scalar_lea.vmem %s8, %s1698
        // Predicated region
        $region57: #{_lambda_.4} parent=51 // pred_check
          %p1700 = pneg %p211
        $region58: #{_lambda_.4} parent=51 // pred_check_branch
          %1702 = sbr.rel (%p1700) target = $region60
        $region59: #{_lambda_.4} parent=51 // pred_region
          _
        $region60: #{_lambda_.4} parent=51 // pred_fallthru
          _
      $region52: #{_lambda_.4} parent=5 // pred_fallthru
        _
      %p1703 = scmp.le.s32.totalorder 2, %s15
      // Predicated region
      $region61: #{_lambda_.4} parent=5 // pred_check
        %p1704 = pneg %p1703
      $region62: #{_lambda_.4} parent=5 // pred_check_branch
        %1706 = sbr.rel (%p1704) target = $region64
      $region63: #{_lambda_.4} parent=5 // pred_region
        %s1707 = ssub.s32 %s15, 2
        // Predicated region
        $region65: #{_lambda_.4} parent=63 // pred_check
          %p1708 = pneg %p217
        $region66: #{_lambda_.4} parent=63 // pred_check_branch
          %1710 = sbr.rel (%p1708) target = $region68
        $region67: #{_lambda_.4} parent=63 // pred_region
          %p1711 = scmp.lt.s32.totalorder %s21, 1
          %s1712 = scalar_select %p1711, %s21, 1
          %s1713 = smul.addr %s1712, 2
          %s1714 = smul.addr %s1713, 4
          %s1715 = scalar_lea.vmem %s8, %s1714
        $region68: #{_lambda_.4} parent=63 // pred_fallthru
          _
      $region64: #{_lambda_.4} parent=5 // pred_fallthru
        _
    $region6: #{_lambda_.4} parent=1 // loop_footer
      %s19 = sadd.s32 1, %s15
    $region7: #{_lambda_.4} parent=1 // loop_footer_branch
      %14 = sbr.rel target = $region3
    $region8: #{_lambda_.4} parent=1 // loop_exit
      _
    %1716 = vsyncpa [#allocation6], 1
    %s1717 = scalar_lea.sflag [#allocation6], 1
    %1718 = vsyncpa %s1717, 1

// kernel: _lambda_.5
$region0: #{_lambda_.5}
  #allocation0 [shape = 'u32[]', space=smem, size = 0x4, offset = 0x4, fixed_abs, tag = 'smem constant byte address 0x4 - core index']
  #allocation1 [shape = 'u32[144,128]{1,0:T(1,128)}', space=vmem, size = 0x12000, scoped, tag = 'internal scratch']
  %s0 = inlined_call_operand.vmem [shape: bf16[2,2048], index: 0, kind: input, shape index: {}]
  %s1 = inlined_call_operand.vmem [shape: f32[1,2048], index: 1, kind: input, shape index: {}]
  %s2 = inlined_call_operand.vmem [shape: f32[1,2048], index: 2, kind: input, shape index: {}]
  %s3 = inlined_call_operand.vmem [shape: bf16[2048,128], index: 3, kind: input, shape index: {}]
  %s4 = inlined_call_operand.vmem [shape: f32[1,128], index: 4, kind: input, shape index: {}]
  %s5 = inlined_call_operand.hbm [shape: f32[2,128], index: 5, kind: output, shape index: {}]
  %s6 = sld [smem:[#allocation0]]
  $region30: #{_lambda_.5} parent=0
    _
  %s8 = ssub.s32 1, %s6
  %s9 = scalar_select 0, %s8, %s6
  $region1: #{_lambda_.5} parent=0
    #allocation2 [shape = 'u8[1024]{0}', space=vmem, size = 0x400, scoped, tag = 'output window, operand 0, single buffered']
    #allocation3 [shape = 's32[1]{0}', space=sflag, size = 0x4, scoped, tag = 'scoped memory for _lambda_.5']
    %10 = vsyncpa [#allocation3], 0
    // Predicated region
    $region2: #{_lambda_.5} parent=1 // pred_check
      _
    $region3: #{_lambda_.5} parent=1 // pred_check_branch
      %12 = sbr.rel (0) target = $region5
    $region4: #{_lambda_.5} parent=1 // pred_region
      _
    $region5: #{_lambda_.5} parent=1 // pred_fallthru
      _
    // Predicated region
    $region6: #{_lambda_.5} parent=1 // pred_check
      _
    $region7: #{_lambda_.5} parent=1 // pred_check_branch
      %14 = sbr.rel (0) target = $region9
    $region8: #{_lambda_.5} parent=1 // pred_region
      _
    $region9: #{_lambda_.5} parent=1 // pred_fallthru
      _
    // Predicated region
    $region10: #{_lambda_.5} parent=1 // pred_check
      _
    $region11: #{_lambda_.5} parent=1 // pred_check_branch
      %16 = sbr.rel (0) target = $region13
    $region12: #{_lambda_.5} parent=1 // pred_region
      _
    $region13: #{_lambda_.5} parent=1 // pred_fallthru
      _
    // Predicated region
    $region14: #{_lambda_.5} parent=1 // pred_check
      _
    $region15: #{_lambda_.5} parent=1 // pred_check_branch
      %18 = sbr.rel (0) target = $region17
    $region16: #{_lambda_.5} parent=1 // pred_region
      _
    $region17: #{_lambda_.5} parent=1 // pred_fallthru
      _
    // Predicated region
    $region18: #{_lambda_.5} parent=1 // pred_check
      _
    $region19: #{_lambda_.5} parent=1 // pred_check_branch
      %20 = sbr.rel (0) target = $region21
    $region20: #{_lambda_.5} parent=1 // pred_region
      _
    $region21: #{_lambda_.5} parent=1 // pred_fallthru
      _
    %v22 = vld [vmem:[%s0] sm:$0xff]
    %v23 = vld [vmem:[%s0 + $0x8] sm:$0xff]
    %v24 = vunpack.c.l.bf16 %v22
    %v25 = vunpack.c.h.bf16 %v22
    %v26 = vunpack.c.l.bf16 %v23
    %v27 = vunpack.c.h.bf16 %v23
    %v28 = vld [vmem:[%s1] sm:$0xff]
    %v29 = vld [vmem:[%s1 + $0x8] sm:$0xff]
    %v32 = vlaneseq
    %v33 = vshrl.u32 %v32, 7
    %v34 = vsub.s32 0, %v33
    %v35 = vrot.slane %v28, %v34
    %v36 = vlaneseq
    %v37 = vshrl.u32 %v36, 7
    %v38 = vsub.s32 1, %v37
    %v39 = vrot.slane %v28, %v38
    %v40 = vlaneseq
    %v41 = vshrl.u32 %v40, 7
    %v42 = vsub.s32 2, %v41
    %v43 = vrot.slane %v28, %v42
    %v44 = vlaneseq
    %v45 = vshrl.u32 %v44, 7
    %v46 = vsub.s32 3, %v45
    %v47 = vrot.slane %v28, %v46
    %v48 = vlaneseq
    %v49 = vshrl.u32 %v48, 7
    %v50 = vsub.s32 4, %v49
    %v51 = vrot.slane %v28, %v50
    %v52 = vlaneseq
    %v53 = vshrl.u32 %v52, 7
    %v54 = vsub.s32 5, %v53
    %v55 = vrot.slane %v28, %v54
    %v56 = vlaneseq
    %v57 = vshrl.u32 %v56, 7
    %v58 = vsub.s32 6, %v57
    %v59 = vrot.slane %v28, %v58
    %v60 = vlaneseq
    %v61 = vshrl.u32 %v60, 7
    %v62 = vsub.s32 7, %v61
    %v63 = vrot.slane %v28, %v62
    %v64 = vlaneseq
    %v65 = vshrl.u32 %v64, 7
    %v66 = vsub.s32 0, %v65
    %v67 = vrot.slane %v29, %v66
    %v68 = vlaneseq
    %v69 = vshrl.u32 %v68, 7
    %v70 = vsub.s32 1, %v69
    %v71 = vrot.slane %v29, %v70
    %v72 = vlaneseq
    %v73 = vshrl.u32 %v72, 7
    %v74 = vsub.s32 2, %v73
    %v75 = vrot.slane %v29, %v74
    %v76 = vlaneseq
    %v77 = vshrl.u32 %v76, 7
    %v78 = vsub.s32 3, %v77
    %v79 = vrot.slane %v29, %v78
    %v80 = vlaneseq
    %v81 = vshrl.u32 %v80, 7
    %v82 = vsub.s32 4, %v81
    %v83 = vrot.slane %v29, %v82
    %v84 = vlaneseq
    %v85 = vshrl.u32 %v84, 7
    %v86 = vsub.s32 5, %v85
    %v87 = vrot.slane %v29, %v86
    %v88 = vlaneseq
    %v89 = vshrl.u32 %v88, 7
    %v90 = vsub.s32 6, %v89
    %v91 = vrot.slane %v29, %v90
    %v92 = vlaneseq
    %v93 = vshrl.u32 %v92, 7
    %v94 = vsub.s32 7, %v93
    %v95 = vrot.slane %v29, %v94
    %v96 = vcombine.low %v35, %v39
    %v97 = vcombine.low %v43, %v47
    %v99 = vunpack.c.l.s4 1983009808
    %v100 = vunpack.c.0.s8 %v99
    %v101 = vlaneseq
    %v102 = vshrl.u32 %v101, 7
    %v103 = vsub.s32 %v100, %v102
    %v104 = vrot.slane %v96, %v103
    %v106 = vunpack.c.l.s4 1983009808
    %v107 = vunpack.c.0.s8 %v106
    %v108 = vlaneseq
    %v109 = vshrl.u32 %v108, 7
    %v110 = vsub.s32 %v107, %v109
    %v111 = vrot.slane %v97, %v110
    %v112 = vcombine.low %v104, %v111
    %v113 = vcombine.low %v51, %v55
    %v114 = vcombine.low %v59, %v63
    %v116 = vunpack.c.l.s4 1983009808
    %v117 = vunpack.c.0.s8 %v116
    %v118 = vlaneseq
    %v119 = vshrl.u32 %v118, 7
    %v120 = vsub.s32 %v117, %v119
    %v121 = vrot.slane %v113, %v120
    %v123 = vunpack.c.l.s4 1983009808
    %v124 = vunpack.c.0.s8 %v123
    %v125 = vlaneseq
    %v126 = vshrl.u32 %v125, 7
    %v127 = vsub.s32 %v124, %v126
    %v128 = vrot.slane %v114, %v127
    %v129 = vcombine.low %v121, %v128
    %v130 = vcombine.low %v67, %v71
    %v131 = vcombine.low %v75, %v79
    %v133 = vunpack.c.l.s4 1983009808
    %v134 = vunpack.c.0.s8 %v133
    %v135 = vlaneseq
    %v136 = vshrl.u32 %v135, 7
    %v137 = vsub.s32 %v134, %v136
    %v138 = vrot.slane %v130, %v137
    %v140 = vunpack.c.l.s4 1983009808
    %v141 = vunpack.c.0.s8 %v140
    %v142 = vlaneseq
    %v143 = vshrl.u32 %v142, 7
    %v144 = vsub.s32 %v141, %v143
    %v145 = vrot.slane %v131, %v144
    %v146 = vcombine.low %v138, %v145
    %v147 = vcombine.low %v83, %v87
    %v148 = vcombine.low %v91, %v95
    %v150 = vunpack.c.l.s4 1983009808
    %v151 = vunpack.c.0.s8 %v150
    %v152 = vlaneseq
    %v153 = vshrl.u32 %v152, 7
    %v154 = vsub.s32 %v151, %v153
    %v155 = vrot.slane %v147, %v154
    %v157 = vunpack.c.l.s4 1983009808
    %v158 = vunpack.c.0.s8 %v157
    %v159 = vlaneseq
    %v160 = vshrl.u32 %v159, 7
    %v161 = vsub.s32 %v158, %v160
    %v162 = vrot.slane %v148, %v161
    %v163 = vcombine.low %v155, %v162
    %v168 = vmul.f32 %v24, %v112
    %v169 = vmul.f32 %v25, %v129
    %v170 = vmul.f32 %v26, %v146
    %v171 = vmul.f32 %v27, %v163
    %v172 = vld [vmem:[%s2] sm:$0xff]
    %v173 = vld [vmem:[%s2 + $0x8] sm:$0xff]
    %v176 = vlaneseq
    %v177 = vshrl.u32 %v176, 7
    %v178 = vsub.s32 0, %v177
    %v179 = vrot.slane %v172, %v178
    %v180 = vlaneseq
    %v181 = vshrl.u32 %v180, 7
    %v182 = vsub.s32 1, %v181
    %v183 = vrot.slane %v172, %v182
    %v184 = vlaneseq
    %v185 = vshrl.u32 %v184, 7
    %v186 = vsub.s32 2, %v185
    %v187 = vrot.slane %v172, %v186
    %v188 = vlaneseq
    %v189 = vshrl.u32 %v188, 7
    %v190 = vsub.s32 3, %v189
    %v191 = vrot.slane %v172, %v190
    %v192 = vlaneseq
    %v193 = vshrl.u32 %v192, 7
    %v194 = vsub.s32 4, %v193
    %v195 = vrot.slane %v172, %v194
    %v196 = vlaneseq
    %v197 = vshrl.u32 %v196, 7
    %v198 = vsub.s32 5, %v197
    %v199 = vrot.slane %v172, %v198
    %v200 = vlaneseq
    %v201 = vshrl.u32 %v200, 7
    %v202 = vsub.s32 6, %v201
    %v203 = vrot.slane %v172, %v202
    %v204 = vlaneseq
    %v205 = vshrl.u32 %v204, 7
    %v206 = vsub.s32 7, %v205
    %v207 = vrot.slane %v172, %v206
    %v208 = vlaneseq
    %v209 = vshrl.u32 %v208, 7
    %v210 = vsub.s32 0, %v209
    %v211 = vrot.slane %v173, %v210
    %v212 = vlaneseq
    %v213 = vshrl.u32 %v212, 7
    %v214 = vsub.s32 1, %v213
    %v215 = vrot.slane %v173, %v214
    %v216 = vlaneseq
    %v217 = vshrl.u32 %v216, 7
    %v218 = vsub.s32 2, %v217
    %v219 = vrot.slane %v173, %v218
    %v220 = vlaneseq
    %v221 = vshrl.u32 %v220, 7
    %v222 = vsub.s32 3, %v221
    %v223 = vrot.slane %v173, %v222
    %v224 = vlaneseq
    %v225 = vshrl.u32 %v224, 7
    %v226 = vsub.s32 4, %v225
    %v227 = vrot.slane %v173, %v226
    %v228 = vlaneseq
    %v229 = vshrl.u32 %v228, 7
    %v230 = vsub.s32 5, %v229
    %v231 = vrot.slane %v173, %v230
    %v232 = vlaneseq
    %v233 = vshrl.u32 %v232, 7
    %v234 = vsub.s32 6, %v233
    %v235 = vrot.slane %v173, %v234
    %v236 = vlaneseq
    %v237 = vshrl.u32 %v236, 7
    %v238 = vsub.s32 7, %v237
    %v239 = vrot.slane %v173, %v238
    %v240 = vcombine.low %v179, %v183
    %v241 = vcombine.low %v187, %v191
    %v243 = vunpack.c.l.s4 1983009808
    %v244 = vunpack.c.0.s8 %v243
    %v245 = vlaneseq
    %v246 = vshrl.u32 %v245, 7
    %v247 = vsub.s32 %v244, %v246
    %v248 = vrot.slane %v240, %v247
    %v250 = vunpack.c.l.s4 1983009808
    %v251 = vunpack.c.0.s8 %v250
    %v252 = vlaneseq
    %v253 = vshrl.u32 %v252, 7
    %v254 = vsub.s32 %v251, %v253
    %v255 = vrot.slane %v241, %v254
    %v256 = vcombine.low %v248, %v255
    %v257 = vcombine.low %v195, %v199
    %v258 = vcombine.low %v203, %v207
    %v260 = vunpack.c.l.s4 1983009808
    %v261 = vunpack.c.0.s8 %v260
    %v262 = vlaneseq
    %v263 = vshrl.u32 %v262, 7
    %v264 = vsub.s32 %v261, %v263
    %v265 = vrot.slane %v257, %v264
    %v267 = vunpack.c.l.s4 1983009808
    %v268 = vunpack.c.0.s8 %v267
    %v269 = vlaneseq
    %v270 = vshrl.u32 %v269, 7
    %v271 = vsub.s32 %v268, %v270
    %v272 = vrot.slane %v258, %v271
    %v273 = vcombine.low %v265, %v272
    %v274 = vcombine.low %v211, %v215
    %v275 = vcombine.low %v219, %v223
    %v277 = vunpack.c.l.s4 1983009808
    %v278 = vunpack.c.0.s8 %v277
    %v279 = vlaneseq
    %v280 = vshrl.u32 %v279, 7
    %v281 = vsub.s32 %v278, %v280
    %v282 = vrot.slane %v274, %v281
    %v284 = vunpack.c.l.s4 1983009808
    %v285 = vunpack.c.0.s8 %v284
    %v286 = vlaneseq
    %v287 = vshrl.u32 %v286, 7
    %v288 = vsub.s32 %v285, %v287
    %v289 = vrot.slane %v275, %v288
    %v290 = vcombine.low %v282, %v289
    %v291 = vcombine.low %v227, %v231
    %v292 = vcombine.low %v235, %v239
    %v294 = vunpack.c.l.s4 1983009808
    %v295 = vunpack.c.0.s8 %v294
    %v296 = vlaneseq
    %v297 = vshrl.u32 %v296, 7
    %v298 = vsub.s32 %v295, %v297
    %v299 = vrot.slane %v291, %v298
    %v301 = vunpack.c.l.s4 1983009808
    %v302 = vunpack.c.0.s8 %v301
    %v303 = vlaneseq
    %v304 = vshrl.u32 %v303, 7
    %v305 = vsub.s32 %v302, %v304
    %v306 = vrot.slane %v292, %v305
    %v307 = vcombine.low %v299, %v306
    %v312 = vadd.f32 %v168, %v256
    %v313 = vadd.f32 %v169, %v273
    %v314 = vadd.f32 %v170, %v290
    %v315 = vadd.f32 %v171, %v307
    %v316 = vmax.f32 %v312, 0.0
    %v317 = vmax.f32 %v313, 0.0
    %v318 = vmax.f32 %v314, 0.0
    %v319 = vmax.f32 %v315, 0.0
    %v324 = vcombine.high %v316, %v316
    %v326 = vunpack.c.l.s4 1983009808
    %v327 = vunpack.c.0.s8 %v326
    %v328 = vlaneseq
    %v329 = vshrl.u32 %v328, 7
    %v330 = vsub.s32 %v327, %v329
    %v331 = vrot.slane %v316, %v330
    %v333 = vunpack.c.l.s4 1983009808
    %v334 = vunpack.c.0.s8 %v333
    %v335 = vlaneseq
    %v336 = vshrl.u32 %v335, 7
    %v337 = vsub.s32 %v334, %v336
    %v338 = vrot.slane %v324, %v337
    %v339 = vcombine.high %v331, %v331
    %v340 = vcombine.high %v338, %v338
    %v341 = vcombine.high %v317, %v317
    %v343 = vunpack.c.l.s4 1983009808
    %v344 = vunpack.c.0.s8 %v343
    %v345 = vlaneseq
    %v346 = vshrl.u32 %v345, 7
    %v347 = vsub.s32 %v344, %v346
    %v348 = vrot.slane %v317, %v347
    %v350 = vunpack.c.l.s4 1983009808
    %v351 = vunpack.c.0.s8 %v350
    %v352 = vlaneseq
    %v353 = vshrl.u32 %v352, 7
    %v354 = vsub.s32 %v351, %v353
    %v355 = vrot.slane %v341, %v354
    %v356 = vcombine.high %v348, %v348
    %v357 = vcombine.high %v355, %v355
    %v358 = vcombine.high %v318, %v318
    %v360 = vunpack.c.l.s4 1983009808
    %v361 = vunpack.c.0.s8 %v360
    %v362 = vlaneseq
    %v363 = vshrl.u32 %v362, 7
    %v364 = vsub.s32 %v361, %v363
    %v365 = vrot.slane %v318, %v364
    %v367 = vunpack.c.l.s4 1983009808
    %v368 = vunpack.c.0.s8 %v367
    %v369 = vlaneseq
    %v370 = vshrl.u32 %v369, 7
    %v371 = vsub.s32 %v368, %v370
    %v372 = vrot.slane %v358, %v371
    %v373 = vcombine.high %v365, %v365
    %v374 = vcombine.high %v372, %v372
    %v375 = vcombine.high %v319, %v319
    %v377 = vunpack.c.l.s4 1983009808
    %v378 = vunpack.c.0.s8 %v377
    %v379 = vlaneseq
    %v380 = vshrl.u32 %v379, 7
    %v381 = vsub.s32 %v378, %v380
    %v382 = vrot.slane %v319, %v381
    %v384 = vunpack.c.l.s4 1983009808
    %v385 = vunpack.c.0.s8 %v384
    %v386 = vlaneseq
    %v387 = vshrl.u32 %v386, 7
    %v388 = vsub.s32 %v385, %v387
    %v389 = vrot.slane %v375, %v388
    %v390 = vcombine.high %v382, %v382
    %v391 = vcombine.high %v389, %v389
    %v408 = vpack.c.bf16 %v331, %v331
    %v409 = vpack.c.bf16 %v339, %v339
    %v410 = vpack.c.bf16 %v338, %v338
    %v411 = vpack.c.bf16 %v340, %v340
    %v412 = vpack.c.bf16 %v348, %v348
    %v413 = vpack.c.bf16 %v356, %v356
    %v414 = vpack.c.bf16 %v355, %v355
    %v415 = vpack.c.bf16 %v357, %v357
    %v416 = vpack.c.bf16 %v365, %v365
    %v417 = vpack.c.bf16 %v373, %v373
    %v418 = vpack.c.bf16 %v372, %v372
    %v419 = vpack.c.bf16 %v374, %v374
    %v420 = vpack.c.bf16 %v382, %v382
    %v421 = vpack.c.bf16 %v390, %v390
    %v422 = vpack.c.bf16 %v389, %v389
    %v423 = vpack.c.bf16 %v391, %v391
    %v424 = vld [vmem:[%s3] sm:$0xf]
    %v425 = vld [vmem:[%s3 + $0x4] sm:$0xf]
    %v426 = vld [vmem:[%s3 + $0x8] sm:$0xf]
    %v427 = vld [vmem:[%s3 + $0xc] sm:$0xf]
    %v428 = vld [vmem:[%s3 + $0x10] sm:$0xf]
    %v429 = vld [vmem:[%s3 + $0x14] sm:$0xf]
    %v430 = vld [vmem:[%s3 + $0x18] sm:$0xf]
    %v431 = vld [vmem:[%s3 + $0x1c] sm:$0xf]
    %v432 = vld [vmem:[%s3 + $0x20] sm:$0xf]
    %v433 = vld [vmem:[%s3 + $0x24] sm:$0xf]
    %v434 = vld [vmem:[%s3 + $0x28] sm:$0xf]
    %v435 = vld [vmem:[%s3 + $0x2c] sm:$0xf]
    %v436 = vld [vmem:[%s3 + $0x30] sm:$0xf]
    %v437 = vld [vmem:[%s3 + $0x34] sm:$0xf]
    %v438 = vld [vmem:[%s3 + $0x38] sm:$0xf]
    %v439 = vld [vmem:[%s3 + $0x3c] sm:$0xf]
    %v440 = vld [vmem:[%s3 + $0x40] sm:$0xf]
    %v441 = vld [vmem:[%s3 + $0x44] sm:$0xf]
    %v442 = vld [vmem:[%s3 + $0x48] sm:$0xf]
    %v443 = vld [vmem:[%s3 + $0x4c] sm:$0xf]
    %v444 = vld [vmem:[%s3 + $0x50] sm:$0xf]
    %v445 = vld [vmem:[%s3 + $0x54] sm:$0xf]
    %v446 = vld [vmem:[%s3 + $0x58] sm:$0xf]
    %v447 = vld [vmem:[%s3 + $0x5c] sm:$0xf]
    %v448 = vld [vmem:[%s3 + $0x60] sm:$0xf]
    %v449 = vld [vmem:[%s3 + $0x64] sm:$0xf]
    %v450 = vld [vmem:[%s3 + $0x68] sm:$0xf]
    %v451 = vld [vmem:[%s3 + $0x6c] sm:$0xf]
    %v452 = vld [vmem:[%s3 + $0x70] sm:$0xf]
    %v453 = vld [vmem:[%s3 + $0x74] sm:$0xf]
    %v454 = vld [vmem:[%s3 + $0x78] sm:$0xf]
    %v455 = vld [vmem:[%s3 + $0x7c] sm:$0xf]
    %v456 = vld [vmem:[%s3 + $0x80] sm:$0xf]
    %v457 = vld [vmem:[%s3 + $0x84] sm:$0xf]
    %v458 = vld [vmem:[%s3 + $0x88] sm:$0xf]
    %v459 = vld [vmem:[%s3 + $0x8c] sm:$0xf]
    %v460 = vld [vmem:[%s3 + $0x90] sm:$0xf]
    %v461 = vld [vmem:[%s3 + $0x94] sm:$0xf]
    %v462 = vld [vmem:[%s3 + $0x98] sm:$0xf]
    %v463 = vld [vmem:[%s3 + $0x9c] sm:$0xf]
    %v464 = vld [vmem:[%s3 + $0xa0] sm:$0xf]
    %v465 = vld [vmem:[%s3 + $0xa4] sm:$0xf]
    %v466 = vld [vmem:[%s3 + $0xa8] sm:$0xf]
    %v467 = vld [vmem:[%s3 + $0xac] sm:$0xf]
    %v468 = vld [vmem:[%s3 + $0xb0] sm:$0xf]
    %v469 = vld [vmem:[%s3 + $0xb4] sm:$0xf]
    %v470 = vld [vmem:[%s3 + $0xb8] sm:$0xf]
    %v471 = vld [vmem:[%s3 + $0xbc] sm:$0xf]
    %v472 = vld [vmem:[%s3 + $0xc0] sm:$0xf]
    %v473 = vld [vmem:[%s3 + $0xc4] sm:$0xf]
    %v474 = vld [vmem:[%s3 + $0xc8] sm:$0xf]
    %v475 = vld [vmem:[%s3 + $0xcc] sm:$0xf]
    %v476 = vld [vmem:[%s3 + $0xd0] sm:$0xf]
    %v477 = vld [vmem:[%s3 + $0xd4] sm:$0xf]
    %v478 = vld [vmem:[%s3 + $0xd8] sm:$0xf]
    %v479 = vld [vmem:[%s3 + $0xdc] sm:$0xf]
    %v480 = vld [vmem:[%s3 + $0xe0] sm:$0xf]
    %v481 = vld [vmem:[%s3 + $0xe4] sm:$0xf]
    %v482 = vld [vmem:[%s3 + $0xe8] sm:$0xf]
    %v483 = vld [vmem:[%s3 + $0xec] sm:$0xf]
    %v484 = vld [vmem:[%s3 + $0xf0] sm:$0xf]
    %v485 = vld [vmem:[%s3 + $0xf4] sm:$0xf]
    %v486 = vld [vmem:[%s3 + $0xf8] sm:$0xf]
    %v487 = vld [vmem:[%s3 + $0xfc] sm:$0xf]
    %v488 = vld [vmem:[%s3 + $0x100] sm:$0xf]
    %v489 = vld [vmem:[%s3 + $0x104] sm:$0xf]
    %v490 = vld [vmem:[%s3 + $0x108] sm:$0xf]
    %v491 = vld [vmem:[%s3 + $0x10c] sm:$0xf]
    %v492 = vld [vmem:[%s3 + $0x110] sm:$0xf]
    %v493 = vld [vmem:[%s3 + $0x114] sm:$0xf]
    %v494 = vld [vmem:[%s3 + $0x118] sm:$0xf]
    %v495 = vld [vmem:[%s3 + $0x11c] sm:$0xf]
    %v496 = vld [vmem:[%s3 + $0x120] sm:$0xf]
    %v497 = vld [vmem:[%s3 + $0x124] sm:$0xf]
    %v498 = vld [vmem:[%s3 + $0x128] sm:$0xf]
    %v499 = vld [vmem:[%s3 + $0x12c] sm:$0xf]
    %v500 = vld [vmem:[%s3 + $0x130] sm:$0xf]
    %v501 = vld [vmem:[%s3 + $0x134] sm:$0xf]
    %v502 = vld [vmem:[%s3 + $0x138] sm:$0xf]
    %v503 = vld [vmem:[%s3 + $0x13c] sm:$0xf]
    %v504 = vld [vmem:[%s3 + $0x140] sm:$0xf]
    %v505 = vld [vmem:[%s3 + $0x144] sm:$0xf]
    %v506 = vld [vmem:[%s3 + $0x148] sm:$0xf]
    %v507 = vld [vmem:[%s3 + $0x14c] sm:$0xf]
    %v508 = vld [vmem:[%s3 + $0x150] sm:$0xf]
    %v509 = vld [vmem:[%s3 + $0x154] sm:$0xf]
    %v510 = vld [vmem:[%s3 + $0x158] sm:$0xf]
    %v511 = vld [vmem:[%s3 + $0x15c] sm:$0xf]
    %v512 = vld [vmem:[%s3 + $0x160] sm:$0xf]
    %v513 = vld [vmem:[%s3 + $0x164] sm:$0xf]
    %v514 = vld [vmem:[%s3 + $0x168] sm:$0xf]
    %v515 = vld [vmem:[%s3 + $0x16c] sm:$0xf]
    %v516 = vld [vmem:[%s3 + $0x170] sm:$0xf]
    %v517 = vld [vmem:[%s3 + $0x174] sm:$0xf]
    %v518 = vld [vmem:[%s3 + $0x178] sm:$0xf]
    %v519 = vld [vmem:[%s3 + $0x17c] sm:$0xf]
    %v520 = vld [vmem:[%s3 + $0x180] sm:$0xf]
    %v521 = vld [vmem:[%s3 + $0x184] sm:$0xf]
    %v522 = vld [vmem:[%s3 + $0x188] sm:$0xf]
    %v523 = vld [vmem:[%s3 + $0x18c] sm:$0xf]
    %v524 = vld [vmem:[%s3 + $0x190] sm:$0xf]
    %v525 = vld [vmem:[%s3 + $0x194] sm:$0xf]
    %v526 = vld [vmem:[%s3 + $0x198] sm:$0xf]
    %v527 = vld [vmem:[%s3 + $0x19c] sm:$0xf]
    %v528 = vld [vmem:[%s3 + $0x1a0] sm:$0xf]
    %v529 = vld [vmem:[%s3 + $0x1a4] sm:$0xf]
    %v530 = vld [vmem:[%s3 + $0x1a8] sm:$0xf]
    %v531 = vld [vmem:[%s3 + $0x1ac] sm:$0xf]
    %v532 = vld [vmem:[%s3 + $0x1b0] sm:$0xf]
    %v533 = vld [vmem:[%s3 + $0x1b4] sm:$0xf]
    %v534 = vld [vmem:[%s3 + $0x1b8] sm:$0xf]
    %v535 = vld [vmem:[%s3 + $0x1bc] sm:$0xf]
    %v536 = vld [vmem:[%s3 + $0x1c0] sm:$0xf]
    %v537 = vld [vmem:[%s3 + $0x1c4] sm:$0xf]
    %v538 = vld [vmem:[%s3 + $0x1c8] sm:$0xf]
    %v539 = vld [vmem:[%s3 + $0x1cc] sm:$0xf]
    %v540 = vld [vmem:[%s3 + $0x1d0] sm:$0xf]
    %v541 = vld [vmem:[%s3 + $0x1d4] sm:$0xf]
    %v542 = vld [vmem:[%s3 + $0x1d8] sm:$0xf]
    %v543 = vld [vmem:[%s3 + $0x1dc] sm:$0xf]
    %v544 = vld [vmem:[%s3 + $0x1e0] sm:$0xf]
    %v545 = vld [vmem:[%s3 + $0x1e4] sm:$0xf]
    %v546 = vld [vmem:[%s3 + $0x1e8] sm:$0xf]
    %v547 = vld [vmem:[%s3 + $0x1ec] sm:$0xf]
    %v548 = vld [vmem:[%s3 + $0x1f0] sm:$0xf]
    %v549 = vld [vmem:[%s3 + $0x1f4] sm:$0xf]
    %v550 = vld [vmem:[%s3 + $0x1f8] sm:$0xf]
    %v551 = vld [vmem:[%s3 + $0x1fc] sm:$0xf]
    %v552 = vld [vmem:[%s3 + $0x200] sm:$0xf]
    %v553 = vld [vmem:[%s3 + $0x204] sm:$0xf]
    %v554 = vld [vmem:[%s3 + $0x208] sm:$0xf]
    %v555 = vld [vmem:[%s3 + $0x20c] sm:$0xf]
    %v556 = vld [vmem:[%s3 + $0x210] sm:$0xf]
    %v557 = vld [vmem:[%s3 + $0x214] sm:$0xf]
    %v558 = vld [vmem:[%s3 + $0x218] sm:$0xf]
    %v559 = vld [vmem:[%s3 + $0x21c] sm:$0xf]
    %v560 = vld [vmem:[%s3 + $0x220] sm:$0xf]
    %v561 = vld [vmem:[%s3 + $0x224] sm:$0xf]
    %v562 = vld [vmem:[%s3 + $0x228] sm:$0xf]
    %v563 = vld [vmem:[%s3 + $0x22c] sm:$0xf]
    %v564 = vld [vmem:[%s3 + $0x230] sm:$0xf]
    %v565 = vld [vmem:[%s3 + $0x234] sm:$0xf]
    %v566 = vld [vmem:[%s3 + $0x238] sm:$0xf]
    %v567 = vld [vmem:[%s3 + $0x23c] sm:$0xf]
    %v568 = vld [vmem:[%s3 + $0x240] sm:$0xf]
    %v569 = vld [vmem:[%s3 + $0x244] sm:$0xf]
    %v570 = vld [vmem:[%s3 + $0x248] sm:$0xf]
    %v571 = vld [vmem:[%s3 + $0x24c] sm:$0xf]
    %v572 = vld [vmem:[%s3 + $0x250] sm:$0xf]
    %v573 = vld [vmem:[%s3 + $0x254] sm:$0xf]
    %v574 = vld [vmem:[%s3 + $0x258] sm:$0xf]
    %v575 = vld [vmem:[%s3 + $0x25c] sm:$0xf]
    %v576 = vld [vmem:[%s3 + $0x260] sm:$0xf]
    %v577 = vld [vmem:[%s3 + $0x264] sm:$0xf]
    %v578 = vld [vmem:[%s3 + $0x268] sm:$0xf]
    %v579 = vld [vmem:[%s3 + $0x26c] sm:$0xf]
    %v580 = vld [vmem:[%s3 + $0x270] sm:$0xf]
    %v581 = vld [vmem:[%s3 + $0x274] sm:$0xf]
    %v582 = vld [vmem:[%s3 + $0x278] sm:$0xf]
    %v583 = vld [vmem:[%s3 + $0x27c] sm:$0xf]
    %v584 = vld [vmem:[%s3 + $0x280] sm:$0xf]
    %v585 = vld [vmem:[%s3 + $0x284] sm:$0xf]
    %v586 = vld [vmem:[%s3 + $0x288] sm:$0xf]
    %v587 = vld [vmem:[%s3 + $0x28c] sm:$0xf]
    %v588 = vld [vmem:[%s3 + $0x290] sm:$0xf]
    %v589 = vld [vmem:[%s3 + $0x294] sm:$0xf]
    %v590 = vld [vmem:[%s3 + $0x298] sm:$0xf]
    %v591 = vld [vmem:[%s3 + $0x29c] sm:$0xf]
    %v592 = vld [vmem:[%s3 + $0x2a0] sm:$0xf]
    %v593 = vld [vmem:[%s3 + $0x2a4] sm:$0xf]
    %v594 = vld [vmem:[%s3 + $0x2a8] sm:$0xf]
    %v595 = vld [vmem:[%s3 + $0x2ac] sm:$0xf]
    %v596 = vld [vmem:[%s3 + $0x2b0] sm:$0xf]
    %v597 = vld [vmem:[%s3 + $0x2b4] sm:$0xf]
    %v598 = vld [vmem:[%s3 + $0x2b8] sm:$0xf]
    %v599 = vld [vmem:[%s3 + $0x2bc] sm:$0xf]
    %v600 = vld [vmem:[%s3 + $0x2c0] sm:$0xf]
    %v601 = vld [vmem:[%s3 + $0x2c4] sm:$0xf]
    %v602 = vld [vmem:[%s3 + $0x2c8] sm:$0xf]
    %v603 = vld [vmem:[%s3 + $0x2cc] sm:$0xf]
    %v604 = vld [vmem:[%s3 + $0x2d0] sm:$0xf]
    %v605 = vld [vmem:[%s3 + $0x2d4] sm:$0xf]
    %v606 = vld [vmem:[%s3 + $0x2d8] sm:$0xf]
    %v607 = vld [vmem:[%s3 + $0x2dc] sm:$0xf]
    %v608 = vld [vmem:[%s3 + $0x2e0] sm:$0xf]
    %v609 = vld [vmem:[%s3 + $0x2e4] sm:$0xf]
    %v610 = vld [vmem:[%s3 + $0x2e8] sm:$0xf]
    %v611 = vld [vmem:[%s3 + $0x2ec] sm:$0xf]
    %v612 = vld [vmem:[%s3 + $0x2f0] sm:$0xf]
    %v613 = vld [vmem:[%s3 + $0x2f4] sm:$0xf]
    %v614 = vld [vmem:[%s3 + $0x2f8] sm:$0xf]
    %v615 = vld [vmem:[%s3 + $0x2fc] sm:$0xf]
    %v616 = vld [vmem:[%s3 + $0x300] sm:$0xf]
    %v617 = vld [vmem:[%s3 + $0x304] sm:$0xf]
    %v618 = vld [vmem:[%s3 + $0x308] sm:$0xf]
    %v619 = vld [vmem:[%s3 + $0x30c] sm:$0xf]
    %v620 = vld [vmem:[%s3 + $0x310] sm:$0xf]
    %v621 = vld [vmem:[%s3 + $0x314] sm:$0xf]
    %v622 = vld [vmem:[%s3 + $0x318] sm:$0xf]
    %v623 = vld [vmem:[%s3 + $0x31c] sm:$0xf]
    %v624 = vld [vmem:[%s3 + $0x320] sm:$0xf]
    %v625 = vld [vmem:[%s3 + $0x324] sm:$0xf]
    %v626 = vld [vmem:[%s3 + $0x328] sm:$0xf]
    %v627 = vld [vmem:[%s3 + $0x32c] sm:$0xf]
    %v628 = vld [vmem:[%s3 + $0x330] sm:$0xf]
    %v629 = vld [vmem:[%s3 + $0x334] sm:$0xf]
    %v630 = vld [vmem:[%s3 + $0x338] sm:$0xf]
    %v631 = vld [vmem:[%s3 + $0x33c] sm:$0xf]
    %v632 = vld [vmem:[%s3 + $0x340] sm:$0xf]
    %v633 = vld [vmem:[%s3 + $0x344] sm:$0xf]
    %v634 = vld [vmem:[%s3 + $0x348] sm:$0xf]
    %v635 = vld [vmem:[%s3 + $0x34c] sm:$0xf]
    %v636 = vld [vmem:[%s3 + $0x350] sm:$0xf]
    %v637 = vld [vmem:[%s3 + $0x354] sm:$0xf]
    %v638 = vld [vmem:[%s3 + $0x358] sm:$0xf]
    %v639 = vld [vmem:[%s3 + $0x35c] sm:$0xf]
    %v640 = vld [vmem:[%s3 + $0x360] sm:$0xf]
    %v641 = vld [vmem:[%s3 + $0x364] sm:$0xf]
    %v642 = vld [vmem:[%s3 + $0x368] sm:$0xf]
    %v643 = vld [vmem:[%s3 + $0x36c] sm:$0xf]
    %v644 = vld [vmem:[%s3 + $0x370] sm:$0xf]
    %v645 = vld [vmem:[%s3 + $0x374] sm:$0xf]
    %v646 = vld [vmem:[%s3 + $0x378] sm:$0xf]
    %v647 = vld [vmem:[%s3 + $0x37c] sm:$0xf]
    %v648 = vld [vmem:[%s3 + $0x380] sm:$0xf]
    %v649 = vld [vmem:[%s3 + $0x384] sm:$0xf]
    %v650 = vld [vmem:[%s3 + $0x388] sm:$0xf]
    %v651 = vld [vmem:[%s3 + $0x38c] sm:$0xf]
    %v652 = vld [vmem:[%s3 + $0x390] sm:$0xf]
    %v653 = vld [vmem:[%s3 + $0x394] sm:$0xf]
    %v654 = vld [vmem:[%s3 + $0x398] sm:$0xf]
    %v655 = vld [vmem:[%s3 + $0x39c] sm:$0xf]
    %v656 = vld [vmem:[%s3 + $0x3a0] sm:$0xf]
    %v657 = vld [vmem:[%s3 + $0x3a4] sm:$0xf]
    %v658 = vld [vmem:[%s3 + $0x3a8] sm:$0xf]
    %v659 = vld [vmem:[%s3 + $0x3ac] sm:$0xf]
    %v660 = vld [vmem:[%s3 + $0x3b0] sm:$0xf]
    %v661 = vld [vmem:[%s3 + $0x3b4] sm:$0xf]
    %v662 = vld [vmem:[%s3 + $0x3b8] sm:$0xf]
    %v663 = vld [vmem:[%s3 + $0x3bc] sm:$0xf]
    %v664 = vld [vmem:[%s3 + $0x3c0] sm:$0xf]
    %v665 = vld [vmem:[%s3 + $0x3c4] sm:$0xf]
    %v666 = vld [vmem:[%s3 + $0x3c8] sm:$0xf]
    %v667 = vld [vmem:[%s3 + $0x3cc] sm:$0xf]
    %v668 = vld [vmem:[%s3 + $0x3d0] sm:$0xf]
    %v669 = vld [vmem:[%s3 + $0x3d4] sm:$0xf]
    %v670 = vld [vmem:[%s3 + $0x3d8] sm:$0xf]
    %v671 = vld [vmem:[%s3 + $0x3dc] sm:$0xf]
    %v672 = vld [vmem:[%s3 + $0x3e0] sm:$0xf]
    %v673 = vld [vmem:[%s3 + $0x3e4] sm:$0xf]
    %v674 = vld [vmem:[%s3 + $0x3e8] sm:$0xf]
    %v675 = vld [vmem:[%s3 + $0x3ec] sm:$0xf]
    %v676 = vld [vmem:[%s3 + $0x3f0] sm:$0xf]
    %v677 = vld [vmem:[%s3 + $0x3f4] sm:$0xf]
    %v678 = vld [vmem:[%s3 + $0x3f8] sm:$0xf]
    %v679 = vld [vmem:[%s3 + $0x3fc] sm:$0xf]
    %v680 = vld [vmem:[%s4] sm:$0x1]
    %v682 = vlaneseq
    %v683 = vshrl.u32 %v682, 7
    %v684 = vsub.s32 0, %v683
    %v685 = vrot.slane %v680, %v684
    %v943 = vunpack.c.l.b16 %v424
    %v944 = vunpack.c.l.b16 %v425
    %v945 = vunpack.c.l.b16 %v426
    %v946 = vunpack.c.l.b16 %v427
    %v947 = vunpack.c.l.b16 %v428
    %v948 = vunpack.c.l.b16 %v429
    %v949 = vunpack.c.l.b16 %v430
    %v950 = vunpack.c.l.b16 %v431
    %v951 = vunpack.c.l.b16 %v432
    %v952 = vunpack.c.l.b16 %v433
    %v953 = vunpack.c.l.b16 %v434
    %v954 = vunpack.c.l.b16 %v435
    %v955 = vunpack.c.l.b16 %v436
    %v956 = vunpack.c.l.b16 %v437
    %v957 = vunpack.c.l.b16 %v438
    %v958 = vunpack.c.l.b16 %v439
    %v959 = vunpack.c.l.b16 %v440
    %v960 = vunpack.c.l.b16 %v441
    %v961 = vunpack.c.l.b16 %v442
    %v962 = vunpack.c.l.b16 %v443
    %v963 = vunpack.c.l.b16 %v444
    %v964 = vunpack.c.l.b16 %v445
    %v965 = vunpack.c.l.b16 %v446
    %v966 = vunpack.c.l.b16 %v447
    %v967 = vunpack.c.l.b16 %v448
    %v968 = vunpack.c.l.b16 %v449
    %v969 = vunpack.c.l.b16 %v450
    %v970 = vunpack.c.l.b16 %v451
    %v971 = vunpack.c.l.b16 %v452
    %v972 = vunpack.c.l.b16 %v453
    %v973 = vunpack.c.l.b16 %v454
    %v974 = vunpack.c.l.b16 %v455
    %v975 = vunpack.c.l.b16 %v456
    %v976 = vunpack.c.l.b16 %v457
    %v977 = vunpack.c.l.b16 %v458
    %v978 = vunpack.c.l.b16 %v459
    %v979 = vunpack.c.l.b16 %v460
    %v980 = vunpack.c.l.b16 %v461
    %v981 = vunpack.c.l.b16 %v462
    %v982 = vunpack.c.l.b16 %v463
    %v983 = vunpack.c.l.b16 %v464
    %v984 = vunpack.c.l.b16 %v465
    %v985 = vunpack.c.l.b16 %v466
    %v986 = vunpack.c.l.b16 %v467
    %v987 = vunpack.c.l.b16 %v468
    %v988 = vunpack.c.l.b16 %v469
    %v989 = vunpack.c.l.b16 %v470
    %v990 = vunpack.c.l.b16 %v471
    %v991 = vunpack.c.l.b16 %v472
    %v992 = vunpack.c.l.b16 %v473
    %v993 = vunpack.c.l.b16 %v474
    %v994 = vunpack.c.l.b16 %v475
    %v995 = vunpack.c.l.b16 %v476
    %v996 = vunpack.c.l.b16 %v477
    %v997 = vunpack.c.l.b16 %v478
    %v998 = vunpack.c.l.b16 %v479
    %v999 = vunpack.c.l.b16 %v480
    %v1000 = vunpack.c.l.b16 %v481
    %v1001 = vunpack.c.l.b16 %v482
    %v1002 = vunpack.c.l.b16 %v483
    %v1003 = vunpack.c.l.b16 %v484
    %v1004 = vunpack.c.l.b16 %v485
    %v1005 = vunpack.c.l.b16 %v486
    %v1006 = vunpack.c.l.b16 %v487
    %v1007 = vunpack.c.l.b16 %v488
    %v1008 = vunpack.c.l.b16 %v489
    %v1009 = vunpack.c.l.b16 %v490
    %v1010 = vunpack.c.l.b16 %v491
    %v1011 = vunpack.c.l.b16 %v492
    %v1012 = vunpack.c.l.b16 %v493
    %v1013 = vunpack.c.l.b16 %v494
    %v1014 = vunpack.c.l.b16 %v495
    %v1015 = vunpack.c.l.b16 %v496
    %v1016 = vunpack.c.l.b16 %v497
    %v1017 = vunpack.c.l.b16 %v498
    %v1018 = vunpack.c.l.b16 %v499
    %v1019 = vunpack.c.l.b16 %v500
    %v1020 = vunpack.c.l.b16 %v501
    %v1021 = vunpack.c.l.b16 %v502
    %v1022 = vunpack.c.l.b16 %v503
    %v1023 = vunpack.c.l.b16 %v504
    %v1024 = vunpack.c.l.b16 %v505
    %v1025 = vunpack.c.l.b16 %v506
    %v1026 = vunpack.c.l.b16 %v507
    %v1027 = vunpack.c.l.b16 %v508
    %v1028 = vunpack.c.l.b16 %v509
    %v1029 = vunpack.c.l.b16 %v510
    %v1030 = vunpack.c.l.b16 %v511
    %v1031 = vunpack.c.l.b16 %v512
    %v1032 = vunpack.c.l.b16 %v513
    %v1033 = vunpack.c.l.b16 %v514
    %v1034 = vunpack.c.l.b16 %v515
    %v1035 = vunpack.c.l.b16 %v516
    %v1036 = vunpack.c.l.b16 %v517
    %v1037 = vunpack.c.l.b16 %v518
    %v1038 = vunpack.c.l.b16 %v519
    %v1039 = vunpack.c.l.b16 %v520
    %v1040 = vunpack.c.l.b16 %v521
    %v1041 = vunpack.c.l.b16 %v522
    %v1042 = vunpack.c.l.b16 %v523
    %v1043 = vunpack.c.l.b16 %v524
    %v1044 = vunpack.c.l.b16 %v525
    %v1045 = vunpack.c.l.b16 %v526
    %v1046 = vunpack.c.l.b16 %v527
    %v1047 = vunpack.c.l.b16 %v528
    %v1048 = vunpack.c.l.b16 %v529
    %v1049 = vunpack.c.l.b16 %v530
    %v1050 = vunpack.c.l.b16 %v531
    %v1051 = vunpack.c.l.b16 %v532
    %v1052 = vunpack.c.l.b16 %v533
    %v1053 = vunpack.c.l.b16 %v534
    %v1054 = vunpack.c.l.b16 %v535
    %v1055 = vunpack.c.l.b16 %v536
    %v1056 = vunpack.c.l.b16 %v537
    %v1057 = vunpack.c.l.b16 %v538
    %v1058 = vunpack.c.l.b16 %v539
    %v1059 = vunpack.c.l.b16 %v540
    %v1060 = vunpack.c.l.b16 %v541
    %v1061 = vunpack.c.l.b16 %v542
    %v1062 = vunpack.c.l.b16 %v543
    %v1063 = vunpack.c.l.b16 %v544
    %v1064 = vunpack.c.l.b16 %v545
    %v1065 = vunpack.c.l.b16 %v546
    %v1066 = vunpack.c.l.b16 %v547
    %v1067 = vunpack.c.l.b16 %v548
    %v1068 = vunpack.c.l.b16 %v549
    %v1069 = vunpack.c.l.b16 %v550
    %v1070 = vunpack.c.l.b16 %v551
    %v1071 = vunpack.c.l.b16 %v552
    %v1072 = vunpack.c.l.b16 %v553
    %v1073 = vunpack.c.l.b16 %v554
    %v1074 = vunpack.c.l.b16 %v555
    %v1075 = vunpack.c.l.b16 %v556
    %v1076 = vunpack.c.l.b16 %v557
    %v1077 = vunpack.c.l.b16 %v558
    %v1078 = vunpack.c.l.b16 %v559
    %v1079 = vunpack.c.l.b16 %v560
    %v1080 = vunpack.c.l.b16 %v561
    %v1081 = vunpack.c.l.b16 %v562
    %v1082 = vunpack.c.l.b16 %v563
    %v1083 = vunpack.c.l.b16 %v564
    %v1084 = vunpack.c.l.b16 %v565
    %v1085 = vunpack.c.l.b16 %v566
    %v1086 = vunpack.c.l.b16 %v567
    %v1087 = vunpack.c.l.b16 %v568
    %v1088 = vunpack.c.l.b16 %v569
    %v1089 = vunpack.c.l.b16 %v570
    %v1090 = vunpack.c.l.b16 %v571
    %v1091 = vunpack.c.l.b16 %v572
    %v1092 = vunpack.c.l.b16 %v573
    %v1093 = vunpack.c.l.b16 %v574
    %v1094 = vunpack.c.l.b16 %v575
    %v1095 = vunpack.c.l.b16 %v576
    %v1096 = vunpack.c.l.b16 %v577
    %v1097 = vunpack.c.l.b16 %v578
    %v1098 = vunpack.c.l.b16 %v579
    %v1099 = vunpack.c.l.b16 %v580
    %v1100 = vunpack.c.l.b16 %v581
    %v1101 = vunpack.c.l.b16 %v582
    %v1102 = vunpack.c.l.b16 %v583
    %v1103 = vunpack.c.l.b16 %v584
    %v1104 = vunpack.c.l.b16 %v585
    %v1105 = vunpack.c.l.b16 %v586
    %v1106 = vunpack.c.l.b16 %v587
    %v1107 = vunpack.c.l.b16 %v588
    %v1108 = vunpack.c.l.b16 %v589
    %v1109 = vunpack.c.l.b16 %v590
    %v1110 = vunpack.c.l.b16 %v591
    %v1111 = vunpack.c.l.b16 %v592
    %v1112 = vunpack.c.l.b16 %v593
    %v1113 = vunpack.c.l.b16 %v594
    %v1114 = vunpack.c.l.b16 %v595
    %v1115 = vunpack.c.l.b16 %v596
    %v1116 = vunpack.c.l.b16 %v597
    %v1117 = vunpack.c.l.b16 %v598
    %v1118 = vunpack.c.l.b16 %v599
    %v1119 = vunpack.c.l.b16 %v600
    %v1120 = vunpack.c.l.b16 %v601
    %v1121 = vunpack.c.l.b16 %v602
    %v1122 = vunpack.c.l.b16 %v603
    %v1123 = vunpack.c.l.b16 %v604
    %v1124 = vunpack.c.l.b16 %v605
    %v1125 = vunpack.c.l.b16 %v606
    %v1126 = vunpack.c.l.b16 %v607
    %v1127 = vunpack.c.l.b16 %v608
    %v1128 = vunpack.c.l.b16 %v609
    %v1129 = vunpack.c.l.b16 %v610
    %v1130 = vunpack.c.l.b16 %v611
    %v1131 = vunpack.c.l.b16 %v612
    %v1132 = vunpack.c.l.b16 %v613
    %v1133 = vunpack.c.l.b16 %v614
    %v1134 = vunpack.c.l.b16 %v615
    %v1135 = vunpack.c.l.b16 %v616
    %v1136 = vunpack.c.l.b16 %v617
    %v1137 = vunpack.c.l.b16 %v618
    %v1138 = vunpack.c.l.b16 %v619
    %v1139 = vunpack.c.l.b16 %v620
    %v1140 = vunpack.c.l.b16 %v621
    %v1141 = vunpack.c.l.b16 %v622
    %v1142 = vunpack.c.l.b16 %v623
    %v1143 = vunpack.c.l.b16 %v624
    %v1144 = vunpack.c.l.b16 %v625
    %v1145 = vunpack.c.l.b16 %v626
    %v1146 = vunpack.c.l.b16 %v627
    %v1147 = vunpack.c.l.b16 %v628
    %v1148 = vunpack.c.l.b16 %v629
    %v1149 = vunpack.c.l.b16 %v630
    %v1150 = vunpack.c.l.b16 %v631
    %v1151 = vunpack.c.l.b16 %v632
    %v1152 = vunpack.c.l.b16 %v633
    %v1153 = vunpack.c.l.b16 %v634
    %v1154 = vunpack.c.l.b16 %v635
    %v1155 = vunpack.c.l.b16 %v636
    %v1156 = vunpack.c.l.b16 %v637
    %v1157 = vunpack.c.l.b16 %v638
    %v1158 = vunpack.c.l.b16 %v639
    %v1159 = vunpack.c.l.b16 %v640
    %v1160 = vunpack.c.l.b16 %v641
    %v1161 = vunpack.c.l.b16 %v642
    %v1162 = vunpack.c.l.b16 %v643
    %v1163 = vunpack.c.l.b16 %v644
    %v1164 = vunpack.c.l.b16 %v645
    %v1165 = vunpack.c.l.b16 %v646
    %v1166 = vunpack.c.l.b16 %v647
    %v1167 = vunpack.c.l.b16 %v648
    %v1168 = vunpack.c.l.b16 %v649
    %v1169 = vunpack.c.l.b16 %v650
    %v1170 = vunpack.c.l.b16 %v651
    %v1171 = vunpack.c.l.b16 %v652
    %v1172 = vunpack.c.l.b16 %v653
    %v1173 = vunpack.c.l.b16 %v654
    %v1174 = vunpack.c.l.b16 %v655
    %v1175 = vunpack.c.l.b16 %v656
    %v1176 = vunpack.c.l.b16 %v657
    %v1177 = vunpack.c.l.b16 %v658
    %v1178 = vunpack.c.l.b16 %v659
    %v1179 = vunpack.c.l.b16 %v660
    %v1180 = vunpack.c.l.b16 %v661
    %v1181 = vunpack.c.l.b16 %v662
    %v1182 = vunpack.c.l.b16 %v663
    %v1183 = vunpack.c.l.b16 %v664
    %v1184 = vunpack.c.l.b16 %v665
    %v1185 = vunpack.c.l.b16 %v666
    %v1186 = vunpack.c.l.b16 %v667
    %v1187 = vunpack.c.l.b16 %v668
    %v1188 = vunpack.c.l.b16 %v669
    %v1189 = vunpack.c.l.b16 %v670
    %v1190 = vunpack.c.l.b16 %v671
    %v1191 = vunpack.c.l.b16 %v672
    %v1192 = vunpack.c.l.b16 %v673
    %v1193 = vunpack.c.l.b16 %v674
    %v1194 = vunpack.c.l.b16 %v675
    %v1195 = vunpack.c.l.b16 %v676
    %v1196 = vunpack.c.l.b16 %v677
    %v1197 = vunpack.c.l.b16 %v678
    %v1198 = vunpack.c.l.b16 %v679
    %v1199 = vpack.c.b16 %v944, %v943
    %v1200 = vpack.c.b16 %v946, %v945
    %v1201 = vpack.c.b16 %v948, %v947
    %v1202 = vpack.c.b16 %v950, %v949
    %v1203 = vpack.c.b16 %v952, %v951
    %v1204 = vpack.c.b16 %v954, %v953
    %v1205 = vpack.c.b16 %v956, %v955
    %v1206 = vpack.c.b16 %v958, %v957
    %v1207 = vpack.c.b16 %v960, %v959
    %v1208 = vpack.c.b16 %v962, %v961
    %v1209 = vpack.c.b16 %v964, %v963
    %v1210 = vpack.c.b16 %v966, %v965
    %v1211 = vpack.c.b16 %v968, %v967
    %v1212 = vpack.c.b16 %v970, %v969
    %v1213 = vpack.c.b16 %v972, %v971
    %v1214 = vpack.c.b16 %v974, %v973
    %v1215 = vpack.c.b16 %v976, %v975
    %v1216 = vpack.c.b16 %v978, %v977
    %v1217 = vpack.c.b16 %v980, %v979
    %v1218 = vpack.c.b16 %v982, %v981
    %v1219 = vpack.c.b16 %v984, %v983
    %v1220 = vpack.c.b16 %v986, %v985
    %v1221 = vpack.c.b16 %v988, %v987
    %v1222 = vpack.c.b16 %v990, %v989
    %v1223 = vpack.c.b16 %v992, %v991
    %v1224 = vpack.c.b16 %v994, %v993
    %v1225 = vpack.c.b16 %v996, %v995
    %v1226 = vpack.c.b16 %v998, %v997
    %v1227 = vpack.c.b16 %v1000, %v999
    %v1228 = vpack.c.b16 %v1002, %v1001
    %v1229 = vpack.c.b16 %v1004, %v1003
    %v1230 = vpack.c.b16 %v1006, %v1005
    %v1231 = vpack.c.b16 %v1008, %v1007
    %v1232 = vpack.c.b16 %v1010, %v1009
    %v1233 = vpack.c.b16 %v1012, %v1011
    %v1234 = vpack.c.b16 %v1014, %v1013
    %v1235 = vpack.c.b16 %v1016, %v1015
    %v1236 = vpack.c.b16 %v1018, %v1017
    %v1237 = vpack.c.b16 %v1020, %v1019
    %v1238 = vpack.c.b16 %v1022, %v1021
    %v1239 = vpack.c.b16 %v1024, %v1023
    %v1240 = vpack.c.b16 %v1026, %v1025
    %v1241 = vpack.c.b16 %v1028, %v1027
    %v1242 = vpack.c.b16 %v1030, %v1029
    %v1243 = vpack.c.b16 %v1032, %v1031
    %v1244 = vpack.c.b16 %v1034, %v1033
    %v1245 = vpack.c.b16 %v1036, %v1035
    %v1246 = vpack.c.b16 %v1038, %v1037
    %v1247 = vpack.c.b16 %v1040, %v1039
    %v1248 = vpack.c.b16 %v1042, %v1041
    %v1249 = vpack.c.b16 %v1044, %v1043
    %v1250 = vpack.c.b16 %v1046, %v1045
    %v1251 = vpack.c.b16 %v1048, %v1047
    %v1252 = vpack.c.b16 %v1050, %v1049
    %v1253 = vpack.c.b16 %v1052, %v1051
    %v1254 = vpack.c.b16 %v1054, %v1053
    %v1255 = vpack.c.b16 %v1056, %v1055
    %v1256 = vpack.c.b16 %v1058, %v1057
    %v1257 = vpack.c.b16 %v1060, %v1059
    %v1258 = vpack.c.b16 %v1062, %v1061
    %v1259 = vpack.c.b16 %v1064, %v1063
    %v1260 = vpack.c.b16 %v1066, %v1065
    %v1261 = vpack.c.b16 %v1068, %v1067
    %v1262 = vpack.c.b16 %v1070, %v1069
    %v1263 = vpack.c.b16 %v1072, %v1071
    %v1264 = vpack.c.b16 %v1074, %v1073
    %v1265 = vpack.c.b16 %v1076, %v1075
    %v1266 = vpack.c.b16 %v1078, %v1077
    %v1267 = vpack.c.b16 %v1080, %v1079
    %v1268 = vpack.c.b16 %v1082, %v1081
    %v1269 = vpack.c.b16 %v1084, %v1083
    %v1270 = vpack.c.b16 %v1086, %v1085
    %v1271 = vpack.c.b16 %v1088, %v1087
    %v1272 = vpack.c.b16 %v1090, %v1089
    %v1273 = vpack.c.b16 %v1092, %v1091
    %v1274 = vpack.c.b16 %v1094, %v1093
    %v1275 = vpack.c.b16 %v1096, %v1095
    %v1276 = vpack.c.b16 %v1098, %v1097
    %v1277 = vpack.c.b16 %v1100, %v1099
    %v1278 = vpack.c.b16 %v1102, %v1101
    %v1279 = vpack.c.b16 %v1104, %v1103
    %v1280 = vpack.c.b16 %v1106, %v1105
    %v1281 = vpack.c.b16 %v1108, %v1107
    %v1282 = vpack.c.b16 %v1110, %v1109
    %v1283 = vpack.c.b16 %v1112, %v1111
    %v1284 = vpack.c.b16 %v1114, %v1113
    %v1285 = vpack.c.b16 %v1116, %v1115
    %v1286 = vpack.c.b16 %v1118, %v1117
    %v1287 = vpack.c.b16 %v1120, %v1119
    %v1288 = vpack.c.b16 %v1122, %v1121
    %v1289 = vpack.c.b16 %v1124, %v1123
    %v1290 = vpack.c.b16 %v1126, %v1125
    %v1291 = vpack.c.b16 %v1128, %v1127
    %v1292 = vpack.c.b16 %v1130, %v1129
    %v1293 = vpack.c.b16 %v1132, %v1131
    %v1294 = vpack.c.b16 %v1134, %v1133
    %v1295 = vpack.c.b16 %v1136, %v1135
    %v1296 = vpack.c.b16 %v1138, %v1137
    %v1297 = vpack.c.b16 %v1140, %v1139
    %v1298 = vpack.c.b16 %v1142, %v1141
    %v1299 = vpack.c.b16 %v1144, %v1143
    %v1300 = vpack.c.b16 %v1146, %v1145
    %v1301 = vpack.c.b16 %v1148, %v1147
    %v1302 = vpack.c.b16 %v1150, %v1149
    %v1303 = vpack.c.b16 %v1152, %v1151
    %v1304 = vpack.c.b16 %v1154, %v1153
    %v1305 = vpack.c.b16 %v1156, %v1155
    %v1306 = vpack.c.b16 %v1158, %v1157
    %v1307 = vpack.c.b16 %v1160, %v1159
    %v1308 = vpack.c.b16 %v1162, %v1161
    %v1309 = vpack.c.b16 %v1164, %v1163
    %v1310 = vpack.c.b16 %v1166, %v1165
    %v1311 = vpack.c.b16 %v1168, %v1167
    %v1312 = vpack.c.b16 %v1170, %v1169
    %v1313 = vpack.c.b16 %v1172, %v1171
    %v1314 = vpack.c.b16 %v1174, %v1173
    %v1315 = vpack.c.b16 %v1176, %v1175
    %v1316 = vpack.c.b16 %v1178, %v1177
    %v1317 = vpack.c.b16 %v1180, %v1179
    %v1318 = vpack.c.b16 %v1182, %v1181
    %v1319 = vpack.c.b16 %v1184, %v1183
    %v1320 = vpack.c.b16 %v1186, %v1185
    %v1321 = vpack.c.b16 %v1188, %v1187
    %v1322 = vpack.c.b16 %v1190, %v1189
    %v1323 = vpack.c.b16 %v1192, %v1191
    %v1324 = vpack.c.b16 %v1194, %v1193
    %v1325 = vpack.c.b16 %v1196, %v1195
    %v1326 = vpack.c.b16 %v1198, %v1197
    %1455 = vmatprep.subr.bf16.mxu0 0
    %1456 = vmatpush1.bf16.msra.mxu0 %v1199
    %1457 = vmatprep.subr.bf16.mxu0 0
    %1458 = vmatpush1.bf16.msra.mxu0 %v1200
    %1459 = vmatprep.subr.bf16.mxu0 0
    %1460 = vmatpush1.bf16.msra.mxu0 %v1201
    %1461 = vmatprep.subr.bf16.mxu0 0
    %1462 = vmatpush1.bf16.msra.mxu0 %v1202
    %1463 = vmatprep.subr.bf16.mxu0 0
    %1464 = vmatpush1.bf16.msra.mxu0 %v1203
    %1465 = vmatprep.subr.bf16.mxu0 0
    %1466 = vmatpush1.bf16.msra.mxu0 %v1204
    %1467 = vmatprep.subr.bf16.mxu0 0
    %1468 = vmatpush1.bf16.msra.mxu0 %v1205
    %1469 = vmatprep.subr.bf16.mxu0 0
    %1470 = vmatpush1.bf16.msra.mxu0 %v1206
    %1471 = vmatprep.subr.bf16.mxu0 0
    %1472 = vmatpush1.bf16.msra.mxu0 %v1207
    %1473 = vmatprep.subr.bf16.mxu0 0
    %1474 = vmatpush1.bf16.msra.mxu0 %v1208
    %1475 = vmatprep.subr.bf16.mxu0 0
    %1476 = vmatpush1.bf16.msra.mxu0 %v1209
    %1477 = vmatprep.subr.bf16.mxu0 0
    %1478 = vmatpush1.bf16.msra.mxu0 %v1210
    %1479 = vmatprep.subr.bf16.mxu0 0
    %1480 = vmatpush1.bf16.msra.mxu0 %v1211
    %1481 = vmatprep.subr.bf16.mxu0 0
    %1482 = vmatpush1.bf16.msra.mxu0 %v1212
    %1483 = vmatprep.subr.bf16.mxu0 0
    %1484 = vmatpush1.bf16.msra.mxu0 %v1213
    %1485 = vmatprep.subr.bf16.mxu0 0
    %1486 = vmatpush1.bf16.msra.mxu0 %v1214
    %1487 = vmatprep.mubr.bf16.mxu0 %v409
    %1488 = vmatmul.mubr.bf16.gmra.mrb[0].mxu0 %v408
    %v1489 = vpop.f32.mrb[0].mxu0
    %v1490 = vadd.f32 %v685, %v1489
    %v1491 = vpop.f32.mrb[0].mxu0
    %v1492 = vpop.f32.mrb[0].mxu0
    %v1493 = vpop.f32.mrb[0].mxu0
    %1494 = vdwg.mxu0
    %1495 = vmatprep.subr.bf16.mxu0 0
    %1496 = vmatpush1.bf16.msra.mxu0 %v1215
    %1497 = vmatprep.subr.bf16.mxu0 0
    %1498 = vmatpush1.bf16.msra.mxu0 %v1216
    %1499 = vmatprep.subr.bf16.mxu0 0
    %1500 = vmatpush1.bf16.msra.mxu0 %v1217
    %1501 = vmatprep.subr.bf16.mxu0 0
    %1502 = vmatpush1.bf16.msra.mxu0 %v1218
    %1503 = vmatprep.subr.bf16.mxu0 0
    %1504 = vmatpush1.bf16.msra.mxu0 %v1219
    %1505 = vmatprep.subr.bf16.mxu0 0
    %1506 = vmatpush1.bf16.msra.mxu0 %v1220
    %1507 = vmatprep.subr.bf16.mxu0 0
    %1508 = vmatpush1.bf16.msra.mxu0 %v1221
    %1509 = vmatprep.subr.bf16.mxu0 0
    %1510 = vmatpush1.bf16.msra.mxu0 %v1222
    %1511 = vmatprep.subr.bf16.mxu0 0
    %1512 = vmatpush1.bf16.msra.mxu0 %v1223
    %1513 = vmatprep.subr.bf16.mxu0 0
    %1514 = vmatpush1.bf16.msra.mxu0 %v1224
    %1515 = vmatprep.subr.bf16.mxu0 0
    %1516 = vmatpush1.bf16.msra.mxu0 %v1225
    %1517 = vmatprep.subr.bf16.mxu0 0
    %1518 = vmatpush1.bf16.msra.mxu0 %v1226
    %1519 = vmatprep.subr.bf16.mxu0 0
    %1520 = vmatpush1.bf16.msra.mxu0 %v1227
    %1521 = vmatprep.subr.bf16.mxu0 0
    %1522 = vmatpush1.bf16.msra.mxu0 %v1228
    %1523 = vmatprep.subr.bf16.mxu0 0
    %1524 = vmatpush1.bf16.msra.mxu0 %v1229
    %1525 = vmatprep.subr.bf16.mxu0 0
    %1526 = vmatpush1.bf16.msra.mxu0 %v1230
    %1527 = vmatprep.mubr.bf16.mxu0 %v411
    %1528 = vmatmul.mubr.bf16.gmra.mrb[0].mxu0 %v410
    %v1529 = vpop.f32.mrb[0].mxu0
    %v1530 = vadd.f32 %v1490, %v1529
    %v1531 = vpop.f32.mrb[0].mxu0
    %v1532 = vpop.f32.mrb[0].mxu0
    %v1533 = vpop.f32.mrb[0].mxu0
    %1534 = vdwg.mxu0
    %1535 = vmatprep.subr.bf16.mxu0 0
    %1536 = vmatpush1.bf16.msra.mxu0 %v1231
    %1537 = vmatprep.subr.bf16.mxu0 0
    %1538 = vmatpush1.bf16.msra.mxu0 %v1232
    %1539 = vmatprep.subr.bf16.mxu0 0
    %1540 = vmatpush1.bf16.msra.mxu0 %v1233
    %1541 = vmatprep.subr.bf16.mxu0 0
    %1542 = vmatpush1.bf16.msra.mxu0 %v1234
    %1543 = vmatprep.subr.bf16.mxu0 0
    %1544 = vmatpush1.bf16.msra.mxu0 %v1235
    %1545 = vmatprep.subr.bf16.mxu0 0
    %1546 = vmatpush1.bf16.msra.mxu0 %v1236
    %1547 = vmatprep.subr.bf16.mxu0 0
    %1548 = vmatpush1.bf16.msra.mxu0 %v1237
    %1549 = vmatprep.subr.bf16.mxu0 0
    %1550 = vmatpush1.bf16.msra.mxu0 %v1238
    %1551 = vmatprep.subr.bf16.mxu0 0
    %1552 = vmatpush1.bf16.msra.mxu0 %v1239
    %1553 = vmatprep.subr.bf16.mxu0 0
    %1554 = vmatpush1.bf16.msra.mxu0 %v1240
    %1555 = vmatprep.subr.bf16.mxu0 0
    %1556 = vmatpush1.bf16.msra.mxu0 %v1241
    %1557 = vmatprep.subr.bf16.mxu0 0
    %1558 = vmatpush1.bf16.msra.mxu0 %v1242
    %1559 = vmatprep.subr.bf16.mxu0 0
    %1560 = vmatpush1.bf16.msra.mxu0 %v1243
    %1561 = vmatprep.subr.bf16.mxu0 0
    %1562 = vmatpush1.bf16.msra.mxu0 %v1244
    %1563 = vmatprep.subr.bf16.mxu0 0
    %1564 = vmatpush1.bf16.msra.mxu0 %v1245
    %1565 = vmatprep.subr.bf16.mxu0 0
    %1566 = vmatpush1.bf16.msra.mxu0 %v1246
    %1567 = vmatprep.mubr.bf16.mxu0 %v413
    %1568 = vmatmul.mubr.bf16.gmra.mrb[0].mxu0 %v412
    %v1569 = vpop.f32.mrb[0].mxu0
    %v1570 = vadd.f32 %v1530, %v1569
    %v1571 = vpop.f32.mrb[0].mxu0
    %v1572 = vpop.f32.mrb[0].mxu0
    %v1573 = vpop.f32.mrb[0].mxu0
    %1574 = vdwg.mxu0
    %1575 = vmatprep.subr.bf16.mxu0 0
    %1576 = vmatpush1.bf16.msra.mxu0 %v1247
    %1577 = vmatprep.subr.bf16.mxu0 0
    %1578 = vmatpush1.bf16.msra.mxu0 %v1248
    %1579 = vmatprep.subr.bf16.mxu0 0
    %1580 = vmatpush1.bf16.msra.mxu0 %v1249
    %1581 = vmatprep.subr.bf16.mxu0 0
    %1582 = vmatpush1.bf16.msra.mxu0 %v1250
    %1583 = vmatprep.subr.bf16.mxu0 0
    %1584 = vmatpush1.bf16.msra.mxu0 %v1251
    %1585 = vmatprep.subr.bf16.mxu0 0
    %1586 = vmatpush1.bf16.msra.mxu0 %v1252
    %1587 = vmatprep.subr.bf16.mxu0 0
    %1588 = vmatpush1.bf16.msra.mxu0 %v1253
    %1589 = vmatprep.subr.bf16.mxu0 0
    %1590 = vmatpush1.bf16.msra.mxu0 %v1254
    %1591 = vmatprep.subr.bf16.mxu0 0
    %1592 = vmatpush1.bf16.msra.mxu0 %v1255
    %1593 = vmatprep.subr.bf16.mxu0 0
    %1594 = vmatpush1.bf16.msra.mxu0 %v1256
    %1595 = vmatprep.subr.bf16.mxu0 0
    %1596 = vmatpush1.bf16.msra.mxu0 %v1257
    %1597 = vmatprep.subr.bf16.mxu0 0
    %1598 = vmatpush1.bf16.msra.mxu0 %v1258
    %1599 = vmatprep.subr.bf16.mxu0 0
    %1600 = vmatpush1.bf16.msra.mxu0 %v1259
    %1601 = vmatprep.subr.bf16.mxu0 0
    %1602 = vmatpush1.bf16.msra.mxu0 %v1260
    %1603 = vmatprep.subr.bf16.mxu0 0
    %1604 = vmatpush1.bf16.msra.mxu0 %v1261
    %1605 = vmatprep.subr.bf16.mxu0 0
    %1606 = vmatpush1.bf16.msra.mxu0 %v1262
    %1607 = vmatprep.mubr.bf16.mxu0 %v415
    %1608 = vmatmul.mubr.bf16.gmra.mrb[0].mxu0 %v414
    %v1609 = vpop.f32.mrb[0].mxu0
    %v1610 = vadd.f32 %v1570, %v1609
    %v1611 = vpop.f32.mrb[0].mxu0
    %v1612 = vpop.f32.mrb[0].mxu0
    %v1613 = vpop.f32.mrb[0].mxu0
    %1614 = vdwg.mxu0
    %1615 = vmatprep.subr.bf16.mxu0 0
    %1616 = vmatpush1.bf16.msra.mxu0 %v1263
    %1617 = vmatprep.subr.bf16.mxu0 0
    %1618 = vmatpush1.bf16.msra.mxu0 %v1264
    %1619 = vmatprep.subr.bf16.mxu0 0
    %1620 = vmatpush1.bf16.msra.mxu0 %v1265
    %1621 = vmatprep.subr.bf16.mxu0 0
    %1622 = vmatpush1.bf16.msra.mxu0 %v1266
    %1623 = vmatprep.subr.bf16.mxu0 0
    %1624 = vmatpush1.bf16.msra.mxu0 %v1267
    %1625 = vmatprep.subr.bf16.mxu0 0
    %1626 = vmatpush1.bf16.msra.mxu0 %v1268
    %1627 = vmatprep.subr.bf16.mxu0 0
    %1628 = vmatpush1.bf16.msra.mxu0 %v1269
    %1629 = vmatprep.subr.bf16.mxu0 0
    %1630 = vmatpush1.bf16.msra.mxu0 %v1270
    %1631 = vmatprep.subr.bf16.mxu0 0
    %1632 = vmatpush1.bf16.msra.mxu0 %v1271
    %1633 = vmatprep.subr.bf16.mxu0 0
    %1634 = vmatpush1.bf16.msra.mxu0 %v1272
    %1635 = vmatprep.subr.bf16.mxu0 0
    %1636 = vmatpush1.bf16.msra.mxu0 %v1273
    %1637 = vmatprep.subr.bf16.mxu0 0
    %1638 = vmatpush1.bf16.msra.mxu0 %v1274
    %1639 = vmatprep.subr.bf16.mxu0 0
    %1640 = vmatpush1.bf16.msra.mxu0 %v1275
    %1641 = vmatprep.subr.bf16.mxu0 0
    %1642 = vmatpush1.bf16.msra.mxu0 %v1276
    %1643 = vmatprep.subr.bf16.mxu0 0
    %1644 = vmatpush1.bf16.msra.mxu0 %v1277
    %1645 = vmatprep.subr.bf16.mxu0 0
    %1646 = vmatpush1.bf16.msra.mxu0 %v1278
    %1647 = vmatprep.mubr.bf16.mxu0 %v417
    %1648 = vmatmul.mubr.bf16.gmra.mrb[0].mxu0 %v416
    %v1649 = vpop.f32.mrb[0].mxu0
    %v1650 = vadd.f32 %v1610, %v1649
    %v1651 = vpop.f32.mrb[0].mxu0
    %v1652 = vpop.f32.mrb[0].mxu0
    %v1653 = vpop.f32.mrb[0].mxu0
    %1654 = vdwg.mxu0
    %1655 = vmatprep.subr.bf16.mxu0 0
    %1656 = vmatpush1.bf16.msra.mxu0 %v1279
    %1657 = vmatprep.subr.bf16.mxu0 0
    %1658 = vmatpush1.bf16.msra.mxu0 %v1280
    %1659 = vmatprep.subr.bf16.mxu0 0
    %1660 = vmatpush1.bf16.msra.mxu0 %v1281
    %1661 = vmatprep.subr.bf16.mxu0 0
    %1662 = vmatpush1.bf16.msra.mxu0 %v1282
    %1663 = vmatprep.subr.bf16.mxu0 0
    %1664 = vmatpush1.bf16.msra.mxu0 %v1283
    %1665 = vmatprep.subr.bf16.mxu0 0
    %1666 = vmatpush1.bf16.msra.mxu0 %v1284
    %1667 = vmatprep.subr.bf16.mxu0 0
    %1668 = vmatpush1.bf16.msra.mxu0 %v1285
    %1669 = vmatprep.subr.bf16.mxu0 0
    %1670 = vmatpush1.bf16.msra.mxu0 %v1286
    %1671 = vmatprep.subr.bf16.mxu0 0
    %1672 = vmatpush1.bf16.msra.mxu0 %v1287
    %1673 = vmatprep.subr.bf16.mxu0 0
    %1674 = vmatpush1.bf16.msra.mxu0 %v1288
    %1675 = vmatprep.subr.bf16.mxu0 0
    %1676 = vmatpush1.bf16.msra.mxu0 %v1289
    %1677 = vmatprep.subr.bf16.mxu0 0
    %1678 = vmatpush1.bf16.msra.mxu0 %v1290
    %1679 = vmatprep.subr.bf16.mxu0 0
    %1680 = vmatpush1.bf16.msra.mxu0 %v1291
    %1681 = vmatprep.subr.bf16.mxu0 0
    %1682 = vmatpush1.bf16.msra.mxu0 %v1292
    %1683 = vmatprep.subr.bf16.mxu0 0
    %1684 = vmatpush1.bf16.msra.mxu0 %v1293
    %1685 = vmatprep.subr.bf16.mxu0 0
    %1686 = vmatpush1.bf16.msra.mxu0 %v1294
    %1687 = vmatprep.mubr.bf16.mxu0 %v419
    %1688 = vmatmul.mubr.bf16.gmra.mrb[0].mxu0 %v418
    %v1689 = vpop.f32.mrb[0].mxu0
    %v1690 = vadd.f32 %v1650, %v1689
    %v1691 = vpop.f32.mrb[0].mxu0
    %v1692 = vpop.f32.mrb[0].mxu0
    %v1693 = vpop.f32.mrb[0].mxu0
    %1694 = vdwg.mxu0
    %1695 = vmatprep.subr.bf16.mxu0 0
    %1696 = vmatpush1.bf16.msra.mxu0 %v1295
    %1697 = vmatprep.subr.bf16.mxu0 0
    %1698 = vmatpush1.bf16.msra.mxu0 %v1296
    %1699 = vmatprep.subr.bf16.mxu0 0
    %1700 = vmatpush1.bf16.msra.mxu0 %v1297
    %1701 = vmatprep.subr.bf16.mxu0 0
    %1702 = vmatpush1.bf16.msra.mxu0 %v1298
    %1703 = vmatprep.subr.bf16.mxu0 0
    %1704 = vmatpush1.bf16.msra.mxu0 %v1299
    %1705 = vmatprep.subr.bf16.mxu0 0
    %1706 = vmatpush1.bf16.msra.mxu0 %v1300
    %1707 = vmatprep.subr.bf16.mxu0 0
    %1708 = vmatpush1.bf16.msra.mxu0 %v1301
    %1709 = vmatprep.subr.bf16.mxu0 0
    %1710 = vmatpush1.bf16.msra.mxu0 %v1302
    %1711 = vmatprep.subr.bf16.mxu0 0
    %1712 = vmatpush1.bf16.msra.mxu0 %v1303
    %1713 = vmatprep.subr.bf16.mxu0 0
    %1714 = vmatpush1.bf16.msra.mxu0 %v1304
    %1715 = vmatprep.subr.bf16.mxu0 0
    %1716 = vmatpush1.bf16.msra.mxu0 %v1305
    %1717 = vmatprep.subr.bf16.mxu0 0
    %1718 = vmatpush1.bf16.msra.mxu0 %v1306
    %1719 = vmatprep.subr.bf16.mxu0 0
    %1720 = vmatpush1.bf16.msra.mxu0 %v1307
    %1721 = vmatprep.subr.bf16.mxu0 0
    %1722 = vmatpush1.bf16.msra.mxu0 %v1308
    %1723 = vmatprep.subr.bf16.mxu0 0
    %1724 = vmatpush1.bf16.msra.mxu0 %v1309
    %1725 = vmatprep.subr.bf16.mxu0 0
    %1726 = vmatpush1.bf16.msra.mxu0 %v1310
    %1727 = vmatprep.mubr.bf16.mxu0 %v421
    %1728 = vmatmul.mubr.bf16.gmra.mrb[0].mxu0 %v420
    %v1729 = vpop.f32.mrb[0].mxu0
    %v1730 = vadd.f32 %v1690, %v1729
    %v1731 = vpop.f32.mrb[0].mxu0
    %v1732 = vpop.f32.mrb[0].mxu0
    %v1733 = vpop.f32.mrb[0].mxu0
    %1734 = vdwg.mxu0
    %1735 = vmatprep.subr.bf16.mxu0 0
    %1736 = vmatpush1.bf16.msra.mxu0 %v1311
    %1737 = vmatprep.subr.bf16.mxu0 0
    %1738 = vmatpush1.bf16.msra.mxu0 %v1312
    %1739 = vmatprep.subr.bf16.mxu0 0
    %1740 = vmatpush1.bf16.msra.mxu0 %v1313
    %1741 = vmatprep.subr.bf16.mxu0 0
    %1742 = vmatpush1.bf16.msra.mxu0 %v1314
    %1743 = vmatprep.subr.bf16.mxu0 0
    %1744 = vmatpush1.bf16.msra.mxu0 %v1315
    %1745 = vmatprep.subr.bf16.mxu0 0
    %1746 = vmatpush1.bf16.msra.mxu0 %v1316
    %1747 = vmatprep.subr.bf16.mxu0 0
    %1748 = vmatpush1.bf16.msra.mxu0 %v1317
    %1749 = vmatprep.subr.bf16.mxu0 0
    %1750 = vmatpush1.bf16.msra.mxu0 %v1318
    %1751 = vmatprep.subr.bf16.mxu0 0
    %1752 = vmatpush1.bf16.msra.mxu0 %v1319
    %1753 = vmatprep.subr.bf16.mxu0 0
    %1754 = vmatpush1.bf16.msra.mxu0 %v1320
    %1755 = vmatprep.subr.bf16.mxu0 0
    %1756 = vmatpush1.bf16.msra.mxu0 %v1321
    %1757 = vmatprep.subr.bf16.mxu0 0
    %1758 = vmatpush1.bf16.msra.mxu0 %v1322
    %1759 = vmatprep.subr.bf16.mxu0 0
    %1760 = vmatpush1.bf16.msra.mxu0 %v1323
    %1761 = vmatprep.subr.bf16.mxu0 0
    %1762 = vmatpush1.bf16.msra.mxu0 %v1324
    %1763 = vmatprep.subr.bf16.mxu0 0
    %1764 = vmatpush1.bf16.msra.mxu0 %v1325
    %1765 = vmatprep.subr.bf16.mxu0 0
    %1766 = vmatpush1.bf16.msra.mxu0 %v1326
    %1767 = vmatprep.mubr.bf16.mxu0 %v423
    %1768 = vmatmul.mubr.bf16.gmra.mrb[0].mxu0 %v422
    %v1769 = vpop.f32.mrb[0].mxu0
    %v1770 = vadd.f32 %v1730, %v1769
    %v1771 = vpop.f32.mrb[0].mxu0
    %v1772 = vpop.f32.mrb[0].mxu0
    %v1773 = vpop.f32.mrb[0].mxu0
    %1774 = vdwg.mxu0
    %1775 = vst [vmem:[#allocation2] sm:$0x3] %v1770
    // Predicated region
    $region22: #{_lambda_.5} parent=1 // pred_check
      _
    $region23: #{_lambda_.5} parent=1 // pred_check_branch
      %1777 = sbr.rel (0) target = $region25
    $region24: #{_lambda_.5} parent=1 // pred_region
      %s1779 = ssub.s32 32, 32
      %1780 = vsyncadd [#allocation3], %s1779
      %s1782 = sshll.u32 [#allocation2], 4
      %s1783 = int_to_ptr.vmem [resolvable:$true] %s1782
      %1785 = dma.vmem_to_hbm [thread:$0]  %s1783, 32, %s5, [#allocation3]
    $region25: #{_lambda_.5} parent=1 // pred_fallthru
      _
    // Predicated region
    $region26: #{_lambda_.5} parent=1 // pred_check
      _
    $region27: #{_lambda_.5} parent=1 // pred_check_branch
      %1787 = sbr.rel (0) target = $region29
    $region28: #{_lambda_.5} parent=1 // pred_region
      %1788 = dma.done [#allocation3], 32
    $region29: #{_lambda_.5} parent=1 // pred_fallthru
      _
    %1789 = vsyncpa [#allocation3], 1

// kernel: _lambda_.3
$region0: #{_lambda_.3}
  #allocation0 [shape = 'u32[]', space=smem, size = 0x4, offset = 0x4, fixed_abs, tag = 'smem constant byte address 0x4 - core index']
  #allocation1 [shape = 'u32[144,128]{1,0:T(1,128)}', space=vmem, size = 0x12000, scoped, tag = 'internal scratch']
  #allocation2 [shape = 'f32[68,128]{1,0:T(8,128)}', space=vmem, size = 0x9000, scoped, tag = 'scratch operand']
  #allocation3 [shape = 'f32[36,128]{1,0:T(8,128)}', space=vmem, size = 0x5000, scoped, tag = 'scratch operand']
  #allocation4 [shape = 'f32[36,128]{1,0:T(8,128)}', space=vmem, size = 0x5000, scoped, tag = 'scratch operand']
  %s0 = inlined_call_operand.vmem [shape: f32[2,64,128], index: 0, kind: input, shape index: {}]
  %s1 = inlined_call_operand.hbm [shape: bf16[5,128,128], index: 1, kind: input, shape index: {}]
  %s2 = inlined_call_operand.vmem [shape: f32[1,128], index: 2, kind: input, shape index: {}]
  %s3 = inlined_call_operand.vmem [shape: f32[1,128], index: 3, kind: input, shape index: {}]
  %s4 = inlined_call_operand.hbm [shape: bf16[5,128,128], index: 4, kind: input, shape index: {}]
  %s5 = inlined_call_operand.vmem [shape: f32[1,128], index: 5, kind: input, shape index: {}]
  %s6 = inlined_call_operand.vmem [shape: f32[1,128], index: 6, kind: input, shape index: {}]
  %s7 = inlined_call_operand.hbm [shape: bf16[5,128,128], index: 7, kind: input, shape index: {}]
  %s8 = inlined_call_operand.vmem [shape: bf16[2,32,128], index: 8, kind: output, shape index: {}]
  %s9 = sld [smem:[#allocation0]]
  $region77: #{_lambda_.3} parent=0
    _
  %s11 = ssub.s32 1, %s9
  %s12 = scalar_select 0, %s11, %s9
  $region1: #{_lambda_.3} parent=0
    #allocation5 [shape = 'u8[163840]{0}', space=vmem, size = 0x28000, scoped, tag = 'input window, operand 1, single buffered']
    #allocation6 [shape = 's32[2]{0}', space=sflag, size = 0x8, scoped, tag = 'scoped memory for _lambda_.3']
    #allocation7 [shape = 'u8[163840]{0}', space=vmem, size = 0x28000, scoped, tag = 'input window, operand 4, single buffered']
    #allocation8 [shape = 's32[1]{0}', space=sflag, size = 0x4, scoped, tag = 'scoped memory for _lambda_.3']
    #allocation9 [shape = 'u8[163840]{0}', space=vmem, size = 0x28000, scoped, tag = 'input window, operand 7, single buffered']
    %13 = vsyncpa [#allocation6], 0
    %14 = vsyncpa [#allocation8], 0
    loop: start=0, step=1, limit=4
    $region2: #{_lambda_.3} parent=1 // loop_pre_header
      _
    $region3: #{_lambda_.3} parent=1 // loop_header
      %s16 = sphi 0, %s20
      %p17 = scmp.ge.s32.totalorder %s16, 4
      %s26 = sphi 0, %s28
      %s29 = sphi 0, %s26
      %s30 = sphi 0, %s29
      %s46 = sphi 0, %s30
      %s50 = sphi 0, %s50
      %s52 = sphi 0, %s50
      %s53 = sphi 0, %s52
      %s67 = sphi 0, %s53
      %s71 = sphi 0, %s71
      %s73 = sphi 0, %s71
      %s74 = sphi 0, %s73
      %s88 = sphi 0, %s74
      %s92 = sphi 0, %s92
      %s94 = sphi 0, %s92
      %s95 = sphi 0, %s94
      %s109 = sphi 0, %s95
      %s113 = sphi 0, %s113
      %s115 = sphi 0, %s113
      %s116 = sphi 0, %s115
      %s130 = sphi 0, %s116
      %s134 = sphi 0, %s134
      %s136 = sphi 0, %s134
      %s137 = sphi 0, %s136
      %s151 = sphi 0, %s137
      %s155 = sphi 0, %s155
      %s157 = sphi 0, %s155
      %s158 = sphi 0, %s157
      %s172 = sphi 0, %s158
      %s176 = sphi 0, %s176
      %s178 = sphi 0, %s176
      %s179 = sphi 0, %s178
      %s193 = sphi 0, %s179
      %s199 = sphi 0, %s201
      %s202 = sphi 0, %s199
      %s203 = sphi 0, %s202
      %s219 = sphi 0, %s203
    $region4: #{_lambda_.3} parent=1 // loop_header_branch
      %19 = sbr.rel (%p17) target = $region8
    $region5: #{_lambda_.3} parent=1 // loop_body
      %s21 = ssub.s32 %s16, 1
      %s22 = ssub.s32 %s16, 2
      %s23 = sadd.s32 %s16, 1
      %s24 = ssub.s32 %s16, %s23
      %p25 = scmp.eq.s32.totalorder %s24, 0
      %s27 = sadd.s32 %s26, 1
      %s28 = scalar_select %p25, %s26, %s27
      %p31 = pneg %p25
      %p32 = scmp.eq.s32.totalorder %s16, 1
      %p33 = por %p31, %p32
      %p34 = scmp.ne.s32.totalorder %s26, %s29
      %p35 = scmp.eq.s32.totalorder %s16, 0
      %p36 = por %p34, %p35
      %p37 = scmp.ne.s32.totalorder %s26, %s29
      %p38 = scmp.eq.s32.totalorder %s21, 1
      %p39 = por %p37, %p38
      %p40 = scmp.ne.s32.totalorder %s29, %s30
      %p41 = scmp.eq.s32.totalorder %s21, 0
      %p42 = por %p40, %p41
      %p43 = scmp.ne.s32.totalorder %s29, %s30
      %p44 = scmp.eq.s32.totalorder %s22, 1
      %p45 = por %p43, %p44
      %p47 = scmp.ne.s32.totalorder %s30, %s46
      %p48 = scmp.eq.s32.totalorder %s22, 0
      %p49 = por %p47, %p48
      %s51 = sadd.s32 %s50, 1
      %p54 = scmp.eq.s32.totalorder %s16, 1
      %p55 = scmp.ne.s32.totalorder %s50, %s52
      %p56 = scmp.eq.s32.totalorder %s16, 0
      %p57 = por %p55, %p56
      %p58 = scmp.ne.s32.totalorder %s50, %s52
      %p59 = scmp.eq.s32.totalorder %s21, 1
      %p60 = por %p58, %p59
      %p61 = scmp.ne.s32.totalorder %s52, %s53
      %p62 = scmp.eq.s32.totalorder %s21, 0
      %p63 = por %p61, %p62
      %p64 = scmp.ne.s32.totalorder %s52, %s53
      %p65 = scmp.eq.s32.totalorder %s22, 1
      %p66 = por %p64, %p65
      %p68 = scmp.ne.s32.totalorder %s53, %s67
      %p69 = scmp.eq.s32.totalorder %s22, 0
      %p70 = por %p68, %p69
      %s72 = sadd.s32 %s71, 1
      %p75 = scmp.eq.s32.totalorder %s16, 1
      %p76 = scmp.ne.s32.totalorder %s71, %s73
      %p77 = scmp.eq.s32.totalorder %s16, 0
      %p78 = por %p76, %p77
      %p79 = scmp.ne.s32.totalorder %s71, %s73
      %p80 = scmp.eq.s32.totalorder %s21, 1
      %p81 = por %p79, %p80
      %p82 = scmp.ne.s32.totalorder %s73, %s74
      %p83 = scmp.eq.s32.totalorder %s21, 0
      %p84 = por %p82, %p83
      %p85 = scmp.ne.s32.totalorder %s73, %s74
      %p86 = scmp.eq.s32.totalorder %s22, 1
      %p87 = por %p85, %p86
      %p89 = scmp.ne.s32.totalorder %s74, %s88
      %p90 = scmp.eq.s32.totalorder %s22, 0
      %p91 = por %p89, %p90
      %s93 = sadd.s32 %s92, 1
      %p96 = scmp.eq.s32.totalorder %s16, 1
      %p97 = scmp.ne.s32.totalorder %s92, %s94
      %p98 = scmp.eq.s32.totalorder %s16, 0
      %p99 = por %p97, %p98
      %p100 = scmp.ne.s32.totalorder %s92, %s94
      %p101 = scmp.eq.s32.totalorder %s21, 1
      %p102 = por %p100, %p101
      %p103 = scmp.ne.s32.totalorder %s94, %s95
      %p104 = scmp.eq.s32.totalorder %s21, 0
      %p105 = por %p103, %p104
      %p106 = scmp.ne.s32.totalorder %s94, %s95
      %p107 = scmp.eq.s32.totalorder %s22, 1
      %p108 = por %p106, %p107
      %p110 = scmp.ne.s32.totalorder %s95, %s109
      %p111 = scmp.eq.s32.totalorder %s22, 0
      %p112 = por %p110, %p111
      %s114 = sadd.s32 %s113, 1
      %p117 = scmp.eq.s32.totalorder %s16, 1
      %p118 = scmp.ne.s32.totalorder %s113, %s115
      %p119 = scmp.eq.s32.totalorder %s16, 0
      %p120 = por %p118, %p119
      %p121 = scmp.ne.s32.totalorder %s113, %s115
      %p122 = scmp.eq.s32.totalorder %s21, 1
      %p123 = por %p121, %p122
      %p124 = scmp.ne.s32.totalorder %s115, %s116
      %p125 = scmp.eq.s32.totalorder %s21, 0
      %p126 = por %p124, %p125
      %p127 = scmp.ne.s32.totalorder %s115, %s116
      %p128 = scmp.eq.s32.totalorder %s22, 1
      %p129 = por %p127, %p128
      %p131 = scmp.ne.s32.totalorder %s116, %s130
      %p132 = scmp.eq.s32.totalorder %s22, 0
      %p133 = por %p131, %p132
      %s135 = sadd.s32 %s134, 1
      %p138 = scmp.eq.s32.totalorder %s16, 1
      %p139 = scmp.ne.s32.totalorder %s134, %s136
      %p140 = scmp.eq.s32.totalorder %s16, 0
      %p141 = por %p139, %p140
      %p142 = scmp.ne.s32.totalorder %s134, %s136
      %p143 = scmp.eq.s32.totalorder %s21, 1
      %p144 = por %p142, %p143
      %p145 = scmp.ne.s32.totalorder %s136, %s137
      %p146 = scmp.eq.s32.totalorder %s21, 0
      %p147 = por %p145, %p146
      %p148 = scmp.ne.s32.totalorder %s136, %s137
      %p149 = scmp.eq.s32.totalorder %s22, 1
      %p150 = por %p148, %p149
      %p152 = scmp.ne.s32.totalorder %s137, %s151
      %p153 = scmp.eq.s32.totalorder %s22, 0
      %p154 = por %p152, %p153
      %s156 = sadd.s32 %s155, 1
      %p159 = scmp.eq.s32.totalorder %s16, 1
      %p160 = scmp.ne.s32.totalorder %s155, %s157
      %p161 = scmp.eq.s32.totalorder %s16, 0
      %p162 = por %p160, %p161
      %p163 = scmp.ne.s32.totalorder %s155, %s157
      %p164 = scmp.eq.s32.totalorder %s21, 1
      %p165 = por %p163, %p164
      %p166 = scmp.ne.s32.totalorder %s157, %s158
      %p167 = scmp.eq.s32.totalorder %s21, 0
      %p168 = por %p166, %p167
      %p169 = scmp.ne.s32.totalorder %s157, %s158
      %p170 = scmp.eq.s32.totalorder %s22, 1
      %p171 = por %p169, %p170
      %p173 = scmp.ne.s32.totalorder %s158, %s172
      %p174 = scmp.eq.s32.totalorder %s22, 0
      %p175 = por %p173, %p174
      %s177 = sadd.s32 %s176, 1
      %p180 = scmp.eq.s32.totalorder %s16, 1
      %p181 = scmp.ne.s32.totalorder %s176, %s178
      %p182 = scmp.eq.s32.totalorder %s16, 0
      %p183 = por %p181, %p182
      %p184 = scmp.ne.s32.totalorder %s176, %s178
      %p185 = scmp.eq.s32.totalorder %s21, 1
      %p186 = por %p184, %p185
      %p187 = scmp.ne.s32.totalorder %s178, %s179
      %p188 = scmp.eq.s32.totalorder %s21, 0
      %p189 = por %p187, %p188
      %p190 = scmp.ne.s32.totalorder %s178, %s179
      %p191 = scmp.eq.s32.totalorder %s22, 1
      %p192 = por %p190, %p191
      %p194 = scmp.ne.s32.totalorder %s179, %s193
      %p195 = scmp.eq.s32.totalorder %s22, 0
      %p196 = por %p194, %p195
      %s197 = ssub.s32 %s16, %s23
      %p198 = scmp.eq.s32.totalorder %s197, 0
      %s200 = sadd.s32 %s199, 1
      %s201 = scalar_select %p198, %s199, %s200
      %p204 = pneg %p198
      %p205 = scmp.eq.s32.totalorder %s16, 1
      %p206 = por %p204, %p205
      %p207 = scmp.ne.s32.totalorder %s199, %s202
      %p208 = scmp.eq.s32.totalorder %s16, 0
      %p209 = por %p207, %p208
      %p210 = scmp.ne.s32.totalorder %s199, %s202
      %p211 = scmp.eq.s32.totalorder %s21, 1
      %p212 = por %p210, %p211
      %p213 = scmp.ne.s32.totalorder %s202, %s203
      %p214 = scmp.eq.s32.totalorder %s21, 0
      %p215 = por %p213, %p214
      %p216 = scmp.ne.s32.totalorder %s202, %s203
      %p217 = scmp.eq.s32.totalorder %s22, 1
      %p218 = por %p216, %p217
      %p220 = scmp.ne.s32.totalorder %s203, %s219
      %p221 = scmp.eq.s32.totalorder %s22, 0
      %p222 = por %p220, %p221
      %p223 = scmp.le.s32.totalorder 1, %s16
      %p224 = scmp.lt.s32.totalorder %s16, 3
      %p225 = pnand %p223, %p224
      %p226 = pneg %p225
      // Predicated region
      $region9: #{_lambda_.3} parent=5 // pred_check
        _
      $region10: #{_lambda_.3} parent=5 // pred_check_branch
        %228 = sbr.rel (%p225) target = $region12
      $region11: #{_lambda_.3} parent=5 // pred_region
        %s229 = ssub.s32 %s16, 1
        // Predicated region
        $region13: #{_lambda_.3} parent=11 // pred_check
          %p230 = pneg %p63
        $region14: #{_lambda_.3} parent=11 // pred_check_branch
          %232 = sbr.rel (%p230) target = $region16
        $region15: #{_lambda_.3} parent=11 // pred_region
          %s234 = ssub.s32 5120, 5120
          %235 = vsyncadd [#allocation6], %s234
          %s236 = sshll.u32 [#allocation5], 4
          %s237 = int_to_ptr.vmem [resolvable:$true] %s236
          %242 = dma.hbm_to_vmem [thread:$0]  %s1, 5120, %s237, [#allocation6], 64, 64, 4
        $region16: #{_lambda_.3} parent=11 // pred_fallthru
          _
        // Predicated region
        $region17: #{_lambda_.3} parent=11 // pred_check
          %p243 = pneg %p84
        $region18: #{_lambda_.3} parent=11 // pred_check_branch
          %245 = sbr.rel (%p243) target = $region20
        $region19: #{_lambda_.3} parent=11 // pred_region
          _
        $region20: #{_lambda_.3} parent=11 // pred_fallthru
          _
        // Predicated region
        $region21: #{_lambda_.3} parent=11 // pred_check
          %p246 = pneg %p105
        $region22: #{_lambda_.3} parent=11 // pred_check_branch
          %248 = sbr.rel (%p246) target = $region24
        $region23: #{_lambda_.3} parent=11 // pred_region
          _
        $region24: #{_lambda_.3} parent=11 // pred_fallthru
          _
        // Predicated region
        $region25: #{_lambda_.3} parent=11 // pred_check
          %p249 = pneg %p126
        $region26: #{_lambda_.3} parent=11 // pred_check_branch
          %251 = sbr.rel (%p249) target = $region28
        $region27: #{_lambda_.3} parent=11 // pred_region
          %s253 = ssub.s32 5120, 5120
          %254 = vsyncadd [#allocation8], %s253
          %s255 = sshll.u32 [#allocation7], 4
          %s256 = int_to_ptr.vmem [resolvable:$true] %s255
          %261 = dma.hbm_to_vmem [thread:$0]  %s4, 5120, %s256, [#allocation8], 64, 64, 4
        $region28: #{_lambda_.3} parent=11 // pred_fallthru
          _
        // Predicated region
        $region29: #{_lambda_.3} parent=11 // pred_check
          %p262 = pneg %p147
        $region30: #{_lambda_.3} parent=11 // pred_check_branch
          %264 = sbr.rel (%p262) target = $region32
        $region31: #{_lambda_.3} parent=11 // pred_region
          _
        $region32: #{_lambda_.3} parent=11 // pred_fallthru
          _
        // Predicated region
        $region33: #{_lambda_.3} parent=11 // pred_check
          %p265 = pneg %p168
        $region34: #{_lambda_.3} parent=11 // pred_check_branch
          %267 = sbr.rel (%p265) target = $region36
        $region35: #{_lambda_.3} parent=11 // pred_region
          _
        $region36: #{_lambda_.3} parent=11 // pred_fallthru
          _
        // Predicated region
        $region37: #{_lambda_.3} parent=11 // pred_check
          %p268 = pneg %p189
        $region38: #{_lambda_.3} parent=11 // pred_check_branch
          %270 = sbr.rel (%p268) target = $region40
        $region39: #{_lambda_.3} parent=11 // pred_region
          %s272 = ssub.s32 5120, 5120
          %273 = vsyncadd [#allocation8], %s272
          %s274 = sshll.u32 [#allocation9], 4
          %s275 = int_to_ptr.vmem [resolvable:$true] %s274
          %280 = dma.hbm_to_vmem [thread:$0]  %s7, 5120, %s275, [#allocation8], 64, 64, 4
        $region40: #{_lambda_.3} parent=11 // pred_fallthru
          _
      $region12: #{_lambda_.3} parent=5 // pred_fallthru
        _
      %p281 = scmp.lt.s32.totalorder %s16, 2
      // Predicated region
      $region41: #{_lambda_.3} parent=5 // pred_check
        %p282 = pneg %p281
      $region42: #{_lambda_.3} parent=5 // pred_check_branch
        %284 = sbr.rel (%p282) target = $region44
      $region43: #{_lambda_.3} parent=5 // pred_region
        // Predicated region
        $region45: #{_lambda_.3} parent=43 // pred_check
          %p285 = pneg %p36
        $region46: #{_lambda_.3} parent=43 // pred_check_branch
          %287 = sbr.rel (%p285) target = $region48
        $region47: #{_lambda_.3} parent=43 // pred_region
          %p288 = scmp.lt.s32.totalorder %s16, 1
          %s289 = scalar_select %p288, %s16, 1
          %s290 = smul.addr %s289, 8
          %s291 = smul.addr %s290, 8
          %s292 = scalar_lea.vmem %s0, %s291
        $region48: #{_lambda_.3} parent=43 // pred_fallthru
          _
      $region44: #{_lambda_.3} parent=5 // pred_fallthru
        _
      %p293 = scmp.le.s32.totalorder 1, %s16
      %p294 = scmp.lt.s32.totalorder %s16, 3
      %p295 = pnand %p293, %p294
      %p296 = pneg %p295
      // Predicated region
      $region49: #{_lambda_.3} parent=5 // pred_check
        _
      $region50: #{_lambda_.3} parent=5 // pred_check_branch
        %298 = sbr.rel (%p295) target = $region52
      $region51: #{_lambda_.3} parent=5 // pred_region
        %s299 = ssub.s32 %s16, 1
        // Predicated region
        $region53: #{_lambda_.3} parent=51 // pred_check
          %p300 = pneg %p63
        $region54: #{_lambda_.3} parent=51 // pred_check_branch
          %302 = sbr.rel (%p300) target = $region56
        $region55: #{_lambda_.3} parent=51 // pred_region
          %303 = dma.done [#allocation6], 5120
        $region56: #{_lambda_.3} parent=51 // pred_fallthru
          _
        // Predicated region
        $region57: #{_lambda_.3} parent=51 // pred_check
          %p304 = pneg %p126
        $region58: #{_lambda_.3} parent=51 // pred_check_branch
          %306 = sbr.rel (%p304) target = $region60
        $region59: #{_lambda_.3} parent=51 // pred_region
          %307 = dma.done [#allocation8], 5120
        $region60: #{_lambda_.3} parent=51 // pred_fallthru
          _
        // Predicated region
        $region61: #{_lambda_.3} parent=51 // pred_check
          %p308 = pneg %p189
        $region62: #{_lambda_.3} parent=51 // pred_check_branch
          %310 = sbr.rel (%p308) target = $region64
        $region63: #{_lambda_.3} parent=51 // pred_region
          %311 = dma.done [#allocation8], 5120
        $region64: #{_lambda_.3} parent=51 // pred_fallthru
          _
        %p312 = scmp.lt.s32.totalorder %s21, 1
        %s313 = scalar_select %p312, %s21, 1
        %s314 = smul.addr %s313, 8
        %s315 = smul.addr %s314, 8
        %s316 = scalar_lea.vmem %s0, %s315
        %p317 = pneg %p42
        %p318 = pneg %p39
        %p319 = pneg %p63
        %p320 = pneg %p60
        %p321 = pneg %p84
        %p322 = pneg %p81
        %p323 = pneg %p105
        %p324 = pneg %p102
        %p325 = pneg %p126
        %p326 = pneg %p123
        %p327 = pneg %p147
        %p328 = pneg %p144
        %p329 = pneg %p168
        %p330 = pneg %p165
        %p331 = pneg %p189
        %p332 = pneg %p186
        %p333 = pneg %p215
        %p334 = pneg %p212
        %p335 = scmp.lt.s32.totalorder %s21, 1
        %s336 = scalar_select %p335, %s21, 1
        %s337 = smul.addr %s336, 4
        %s338 = smul.addr %s337, 4
        %s339 = scalar_lea.vmem %s8, %s338
        %p340 = scmp.lt.s32.totalorder %s21, 1
        %s341 = scalar_select %p340, %s21, 1
        %s342 = smul.addr %s341, 8
        %s343 = smul.addr %s342, 8
        %s344 = scalar_lea.vmem %s0, %s343
        %p345 = scmp.lt.s32.totalorder %s21, 1
        %s346 = scalar_select %p345, %s21, 1
        %s347 = smul.addr %s346, 4
        %s348 = smul.addr %s347, 4
        %s349 = scalar_lea.vmem %s8, %s348
        %351 = vst [vmem:[#allocation2] sm:$0x3] 0.0
        %352 = vst [vmem:[#allocation2 + $0x42] sm:$0x3] 0.0
        %353 = vst [vmem:[#allocation3] sm:$0x3] 0.0
        %354 = vst [vmem:[#allocation3 + $0x22] sm:$0x3] 0.0
        %355 = vst [vmem:[#allocation4] sm:$0x3] 0.0
        %356 = vst [vmem:[#allocation4 + $0x22] sm:$0x3] 0.0
        %v357 = vld [vmem:[%s344] sm:$0xff]
        %v358 = vld [vmem:[%s344 + $0x8] sm:$0xff]
        %v359 = vld [vmem:[%s344 + $0x10] sm:$0xff]
        %v360 = vld [vmem:[%s344 + $0x18] sm:$0xff]
        %v361 = vld [vmem:[%s344 + $0x20] sm:$0xff]
        %v362 = vld [vmem:[%s344 + $0x28] sm:$0xff]
        %v363 = vld [vmem:[%s344 + $0x30] sm:$0xff]
        %v364 = vld [vmem:[%s344 + $0x38] sm:$0xff]
        %365 = vst [vmem:[#allocation2 + $0x2] sm:$0xff] %v357
        %366 = vst [vmem:[#allocation2 + $0xa] sm:$0xff] %v358
        %367 = vst [vmem:[#allocation2 + $0x12] sm:$0xff] %v359
        %368 = vst [vmem:[#allocation2 + $0x1a] sm:$0xff] %v360
        %369 = vst [vmem:[#allocation2 + $0x22] sm:$0xff] %v361
        %370 = vst [vmem:[#allocation2 + $0x2a] sm:$0xff] %v362
        %371 = vst [vmem:[#allocation2 + $0x32] sm:$0xff] %v363
        %372 = vst [vmem:[#allocation2 + $0x3a] sm:$0xff] %v364
        %v373 = vld [vmem:[#allocation2] ss:$2 sm:$0xff]
        %s374 = scalar_lea.vmem [#allocation2], 16
        %v375 = vld [vmem:[%s374] ss:$2 sm:$0xff]
        %s376 = scalar_lea.vmem [#allocation2], 32
        %v377 = vld [vmem:[%s376] ss:$2 sm:$0xff]
        %s378 = scalar_lea.vmem [#allocation2], 48
        %v379 = vld [vmem:[%s378] ss:$2 sm:$0xff]
        %v380 = vpack.c.bf16 %v375, %v373
        %v381 = vpack.c.bf16 %v379, %v377
        %v382 = vld [vmem:[#allocation5] sm:$0xf]
        %v383 = vld [vmem:[#allocation5 + $0x4] sm:$0xf]
        %v384 = vld [vmem:[#allocation5 + $0x8] sm:$0xf]
        %v385 = vld [vmem:[#allocation5 + $0xc] sm:$0xf]
        %v386 = vld [vmem:[#allocation5 + $0x10] sm:$0xf]
        %v387 = vld [vmem:[#allocation5 + $0x14] sm:$0xf]
        %v388 = vld [vmem:[#allocation5 + $0x18] sm:$0xf]
        %v389 = vld [vmem:[#allocation5 + $0x1c] sm:$0xf]
        %v390 = vld [vmem:[#allocation5 + $0x20] sm:$0xf]
        %v391 = vld [vmem:[#allocation5 + $0x24] sm:$0xf]
        %v392 = vld [vmem:[#allocation5 + $0x28] sm:$0xf]
        %v393 = vld [vmem:[#allocation5 + $0x2c] sm:$0xf]
        %v394 = vld [vmem:[#allocation5 + $0x30] sm:$0xf]
        %v395 = vld [vmem:[#allocation5 + $0x34] sm:$0xf]
        %v396 = vld [vmem:[#allocation5 + $0x38] sm:$0xf]
        %v397 = vld [vmem:[#allocation5 + $0x3c] sm:$0xf]
        %s398 = scalar_lea.vmem [#allocation2], 1
        %v399 = vld [vmem:[%s398] ss:$2 sm:$0xff]
        %s400 = scalar_lea.vmem [#allocation2], 17
        %v401 = vld [vmem:[%s400] ss:$2 sm:$0xff]
        %s402 = scalar_lea.vmem [#allocation2], 33
        %v403 = vld [vmem:[%s402] ss:$2 sm:$0xff]
        %s404 = scalar_lea.vmem [#allocation2], 49
        %v405 = vld [vmem:[%s404] ss:$2 sm:$0xff]
        %v406 = vpack.c.bf16 %v401, %v399
        %v407 = vpack.c.bf16 %v405, %v403
        %s408 = scalar_lea.vmem [#allocation5], 64
        %v409 = vld [vmem:[%s408] sm:$0xf]
        %v410 = vld [vmem:[%s408 + $0x4] sm:$0xf]
        %v411 = vld [vmem:[%s408 + $0x8] sm:$0xf]
        %v412 = vld [vmem:[%s408 + $0xc] sm:$0xf]
        %v413 = vld [vmem:[%s408 + $0x10] sm:$0xf]
        %v414 = vld [vmem:[%s408 + $0x14] sm:$0xf]
        %v415 = vld [vmem:[%s408 + $0x18] sm:$0xf]
        %v416 = vld [vmem:[%s408 + $0x1c] sm:$0xf]
        %v417 = vld [vmem:[%s408 + $0x20] sm:$0xf]
        %v418 = vld [vmem:[%s408 + $0x24] sm:$0xf]
        %v419 = vld [vmem:[%s408 + $0x28] sm:$0xf]
        %v420 = vld [vmem:[%s408 + $0x2c] sm:$0xf]
        %v421 = vld [vmem:[%s408 + $0x30] sm:$0xf]
        %v422 = vld [vmem:[%s408 + $0x34] sm:$0xf]
        %v423 = vld [vmem:[%s408 + $0x38] sm:$0xf]
        %v424 = vld [vmem:[%s408 + $0x3c] sm:$0xf]
        %v441 = vunpack.c.l.b16 %v409
        %v442 = vunpack.c.l.b16 %v410
        %v443 = vunpack.c.l.b16 %v411
        %v444 = vunpack.c.l.b16 %v412
        %v445 = vunpack.c.l.b16 %v413
        %v446 = vunpack.c.l.b16 %v414
        %v447 = vunpack.c.l.b16 %v415
        %v448 = vunpack.c.l.b16 %v416
        %v449 = vunpack.c.l.b16 %v417
        %v450 = vunpack.c.l.b16 %v418
        %v451 = vunpack.c.l.b16 %v419
        %v452 = vunpack.c.l.b16 %v420
        %v453 = vunpack.c.l.b16 %v421
        %v454 = vunpack.c.l.b16 %v422
        %v455 = vunpack.c.l.b16 %v423
        %v456 = vunpack.c.l.b16 %v424
        %v457 = vpack.c.b16 %v442, %v441
        %v458 = vpack.c.b16 %v444, %v443
        %v459 = vpack.c.b16 %v446, %v445
        %v460 = vpack.c.b16 %v448, %v447
        %v461 = vpack.c.b16 %v450, %v449
        %v462 = vpack.c.b16 %v452, %v451
        %v463 = vpack.c.b16 %v454, %v453
        %v464 = vpack.c.b16 %v456, %v455
        %473 = vmatprep.subr.bf16.mxu0 0
        %474 = vmatpush1.bf16.msra.mxu0 %v457
        %475 = vmatprep.subr.bf16.mxu0 0
        %476 = vmatpush1.bf16.msra.mxu0 %v458
        %477 = vmatprep.subr.bf16.mxu0 0
        %478 = vmatpush1.bf16.msra.mxu0 %v459
        %479 = vmatprep.subr.bf16.mxu0 0
        %480 = vmatpush1.bf16.msra.mxu0 %v460
        %481 = vmatprep.subr.bf16.mxu0 0
        %482 = vmatpush1.bf16.msra.mxu0 %v461
        %483 = vmatprep.subr.bf16.mxu0 0
        %484 = vmatpush1.bf16.msra.mxu0 %v462
        %485 = vmatprep.subr.bf16.mxu0 0
        %486 = vmatpush1.bf16.msra.mxu0 %v463
        %487 = vmatprep.subr.bf16.mxu0 0
        %488 = vmatpush1.bf16.msra.mxu0 %v464
        %489 = vmatprep.subr.bf16.mxu0 0
        %490 = vmatpush1.bf16.msra.mxu0 0
        %491 = vmatprep.subr.bf16.mxu0 0
        %492 = vmatpush1.bf16.msra.mxu0 0
        %493 = vmatprep.subr.bf16.mxu0 0
        %494 = vmatpush1.bf16.msra.mxu0 0
        %495 = vmatprep.subr.bf16.mxu0 0
        %496 = vmatpush1.bf16.msra.mxu0 0
        %497 = vmatprep.subr.bf16.mxu0 0
        %498 = vmatpush1.bf16.msra.mxu0 0
        %499 = vmatprep.subr.bf16.mxu0 0
        %500 = vmatpush1.bf16.msra.mxu0 0
        %501 = vmatprep.subr.bf16.mxu0 0
        %502 = vmatpush1.bf16.msra.mxu0 0
        %503 = vmatprep.subr.bf16.mxu0 0
        %504 = vmatpush1.bf16.msra.mxu0 0
        %505 = vmatprep.mubr.bf16.mxu0 0
        %506 = vmatmul.mubr.bf16.gmra.mrb[0].mxu0 %v406
        %v507 = vpop.f32.mrb[0].mxu0
        %v508 = vadd.f32 0.0, %v507
        %v509 = vpop.f32.mrb[0].mxu0
        %v510 = vpop.f32.mrb[0].mxu0
        %v511 = vadd.f32 0.0, %v510
        %v512 = vpop.f32.mrb[0].mxu0
        %513 = vmatprep.mubr.bf16.mxu0 0
        %514 = vmatmul.mubr.bf16.gmra.mrb[0].mxu0 %v407
        %v515 = vpop.f32.mrb[0].mxu0
        %v516 = vadd.f32 0.0, %v515
        %v517 = vpop.f32.mrb[0].mxu0
        %v518 = vpop.f32.mrb[0].mxu0
        %v519 = vadd.f32 0.0, %v518
        %v520 = vpop.f32.mrb[0].mxu0
        %521 = vdwg.mxu0
        %v538 = vunpack.c.l.b16 %v382
        %v539 = vunpack.c.l.b16 %v383
        %v540 = vunpack.c.l.b16 %v384
        %v541 = vunpack.c.l.b16 %v385
        %v542 = vunpack.c.l.b16 %v386
        %v543 = vunpack.c.l.b16 %v387
        %v544 = vunpack.c.l.b16 %v388
        %v545 = vunpack.c.l.b16 %v389
        %v546 = vunpack.c.l.b16 %v390
        %v547 = vunpack.c.l.b16 %v391
        %v548 = vunpack.c.l.b16 %v392
        %v549 = vunpack.c.l.b16 %v393
        %v550 = vunpack.c.l.b16 %v394
        %v551 = vunpack.c.l.b16 %v395
        %v552 = vunpack.c.l.b16 %v396
        %v553 = vunpack.c.l.b16 %v397
        %v554 = vpack.c.b16 %v539, %v538
        %v555 = vpack.c.b16 %v541, %v540
        %v556 = vpack.c.b16 %v543, %v542
        %v557 = vpack.c.b16 %v545, %v544
        %v558 = vpack.c.b16 %v547, %v546
        %v559 = vpack.c.b16 %v549, %v548
        %v560 = vpack.c.b16 %v551, %v550
        %v561 = vpack.c.b16 %v553, %v552
        %570 = vmatprep.subr.bf16.mxu0 0
        %571 = vmatpush1.bf16.msra.mxu0 %v554
        %572 = vmatprep.subr.bf16.mxu0 0
        %573 = vmatpush1.bf16.msra.mxu0 %v555
        %574 = vmatprep.subr.bf16.mxu0 0
        %575 = vmatpush1.bf16.msra.mxu0 %v556
        %576 = vmatprep.subr.bf16.mxu0 0
        %577 = vmatpush1.bf16.msra.mxu0 %v557
        %578 = vmatprep.subr.bf16.mxu0 0
        %579 = vmatpush1.bf16.msra.mxu0 %v558
        %580 = vmatprep.subr.bf16.mxu0 0
        %581 = vmatpush1.bf16.msra.mxu0 %v559
        %582 = vmatprep.subr.bf16.mxu0 0
        %583 = vmatpush1.bf16.msra.mxu0 %v560
        %584 = vmatprep.subr.bf16.mxu0 0
        %585 = vmatpush1.bf16.msra.mxu0 %v561
        %586 = vmatprep.subr.bf16.mxu0 0
        %587 = vmatpush1.bf16.msra.mxu0 0
        %588 = vmatprep.subr.bf16.mxu0 0
        %589 = vmatpush1.bf16.msra.mxu0 0
        %590 = vmatprep.subr.bf16.mxu0 0
        %591 = vmatpush1.bf16.msra.mxu0 0
        %592 = vmatprep.subr.bf16.mxu0 0
        %593 = vmatpush1.bf16.msra.mxu0 0
        %594 = vmatprep.subr.bf16.mxu0 0
        %595 = vmatpush1.bf16.msra.mxu0 0
        %596 = vmatprep.subr.bf16.mxu0 0
        %597 = vmatpush1.bf16.msra.mxu0 0
        %598 = vmatprep.subr.bf16.mxu0 0
        %599 = vmatpush1.bf16.msra.mxu0 0
        %600 = vmatprep.subr.bf16.mxu0 0
        %601 = vmatpush1.bf16.msra.mxu0 0
        %602 = vmatprep.mubr.bf16.mxu0 0
        %603 = vmatmul.mubr.bf16.gmra.mrb[0].mxu0 %v380
        %v604 = vpop.f32.mrb[0].mxu0
        %v605 = vadd.f32 %v508, %v604
        %v606 = vpop.f32.mrb[0].mxu0
        %v607 = vpop.f32.mrb[0].mxu0
        %v608 = vadd.f32 %v511, %v607
        %v609 = vpop.f32.mrb[0].mxu0
        %610 = vmatprep.mubr.bf16.mxu0 0
        %611 = vmatmul.mubr.bf16.gmra.mrb[0].mxu0 %v381
        %v612 = vpop.f32.mrb[0].mxu0
        %v613 = vadd.f32 %v516, %v612
        %v614 = vpop.f32.mrb[0].mxu0
        %v615 = vpop.f32.mrb[0].mxu0
        %v616 = vadd.f32 %v519, %v615
        %v617 = vpop.f32.mrb[0].mxu0
        %618 = vdwg.mxu0
        %s619 = scalar_lea.vmem [#allocation2], 2
        %v620 = vld [vmem:[%s619] ss:$2 sm:$0xff]
        %s621 = scalar_lea.vmem [#allocation2], 18
        %v622 = vld [vmem:[%s621] ss:$2 sm:$0xff]
        %s623 = scalar_lea.vmem [#allocation2], 34
        %v624 = vld [vmem:[%s623] ss:$2 sm:$0xff]
        %s625 = scalar_lea.vmem [#allocation2], 50
        %v626 = vld [vmem:[%s625] ss:$2 sm:$0xff]
        %v627 = vpack.c.bf16 %v622, %v620
        %v628 = vpack.c.bf16 %v626, %v624
        %s629 = scalar_lea.vmem [#allocation5], 128
        %v630 = vld [vmem:[%s629] sm:$0xf]
        %v631 = vld [vmem:[%s629 + $0x4] sm:$0xf]
        %v632 = vld [vmem:[%s629 + $0x8] sm:$0xf]
        %v633 = vld [vmem:[%s629 + $0xc] sm:$0xf]
        %v634 = vld [vmem:[%s629 + $0x10] sm:$0xf]
        %v635 = vld [vmem:[%s629 + $0x14] sm:$0xf]
        %v636 = vld [vmem:[%s629 + $0x18] sm:$0xf]
        %v637 = vld [vmem:[%s629 + $0x1c] sm:$0xf]
        %v638 = vld [vmem:[%s629 + $0x20] sm:$0xf]
        %v639 = vld [vmem:[%s629 + $0x24] sm:$0xf]
        %v640 = vld [vmem:[%s629 + $0x28] sm:$0xf]
        %v641 = vld [vmem:[%s629 + $0x2c] sm:$0xf]
        %v642 = vld [vmem:[%s629 + $0x30] sm:$0xf]
        %v643 = vld [vmem:[%s629 + $0x34] sm:$0xf]
        %v644 = vld [vmem:[%s629 + $0x38] sm:$0xf]
        %v645 = vld [vmem:[%s629 + $0x3c] sm:$0xf]
        %v662 = vunpack.c.l.b16 %v630
        %v663 = vunpack.c.l.b16 %v631
        %v664 = vunpack.c.l.b16 %v632
        %v665 = vunpack.c.l.b16 %v633
        %v666 = vunpack.c.l.b16 %v634
        %v667 = vunpack.c.l.b16 %v635
        %v668 = vunpack.c.l.b16 %v636
        %v669 = vunpack.c.l.b16 %v637
        %v670 = vunpack.c.l.b16 %v638
        %v671 = vunpack.c.l.b16 %v639
        %v672 = vunpack.c.l.b16 %v640
        %v673 = vunpack.c.l.b16 %v641
        %v674 = vunpack.c.l.b16 %v642
        %v675 = vunpack.c.l.b16 %v643
        %v676 = vunpack.c.l.b16 %v644
        %v677 = vunpack.c.l.b16 %v645
        %v678 = vpack.c.b16 %v663, %v662
        %v679 = vpack.c.b16 %v665, %v664
        %v680 = vpack.c.b16 %v667, %v666
        %v681 = vpack.c.b16 %v669, %v668
        %v682 = vpack.c.b16 %v671, %v670
        %v683 = vpack.c.b16 %v673, %v672
        %v684 = vpack.c.b16 %v675, %v674
        %v685 = vpack.c.b16 %v677, %v676
        %694 = vmatprep.subr.bf16.mxu0 0
        %695 = vmatpush1.bf16.msra.mxu0 %v678
        %696 = vmatprep.subr.bf16.mxu0 0
        %697 = vmatpush1.bf16.msra.mxu0 %v679
        %698 = vmatprep.subr.bf16.mxu0 0
        %699 = vmatpush1.bf16.msra.mxu0 %v680
        %700 = vmatprep.subr.bf16.mxu0 0
        %701 = vmatpush1.bf16.msra.mxu0 %v681
        %702 = vmatprep.subr.bf16.mxu0 0
        %703 = vmatpush1.bf16.msra.mxu0 %v682
        %704 = vmatprep.subr.bf16.mxu0 0
        %705 = vmatpush1.bf16.msra.mxu0 %v683
        %706 = vmatprep.subr.bf16.mxu0 0
        %707 = vmatpush1.bf16.msra.mxu0 %v684
        %708 = vmatprep.subr.bf16.mxu0 0
        %709 = vmatpush1.bf16.msra.mxu0 %v685
        %710 = vmatprep.subr.bf16.mxu0 0
        %711 = vmatpush1.bf16.msra.mxu0 0
        %712 = vmatprep.subr.bf16.mxu0 0
        %713 = vmatpush1.bf16.msra.mxu0 0
        %714 = vmatprep.subr.bf16.mxu0 0
        %715 = vmatpush1.bf16.msra.mxu0 0
        %716 = vmatprep.subr.bf16.mxu0 0
        %717 = vmatpush1.bf16.msra.mxu0 0
        %718 = vmatprep.subr.bf16.mxu0 0
        %719 = vmatpush1.bf16.msra.mxu0 0
        %720 = vmatprep.subr.bf16.mxu0 0
        %721 = vmatpush1.bf16.msra.mxu0 0
        %722 = vmatprep.subr.bf16.mxu0 0
        %723 = vmatpush1.bf16.msra.mxu0 0
        %724 = vmatprep.subr.bf16.mxu0 0
        %725 = vmatpush1.bf16.msra.mxu0 0
        %726 = vmatprep.mubr.bf16.mxu0 0
        %727 = vmatmul.mubr.bf16.gmra.mrb[0].mxu0 %v627
        %v728 = vpop.f32.mrb[0].mxu0
        %v729 = vadd.f32 0.0, %v728
        %v730 = vpop.f32.mrb[0].mxu0
        %v731 = vpop.f32.mrb[0].mxu0
        %v732 = vadd.f32 0.0, %v731
        %v733 = vpop.f32.mrb[0].mxu0
        %734 = vmatprep.mubr.bf16.mxu0 0
        %735 = vmatmul.mubr.bf16.gmra.mrb[0].mxu0 %v628
        %v736 = vpop.f32.mrb[0].mxu0
        %v737 = vadd.f32 0.0, %v736
        %v738 = vpop.f32.mrb[0].mxu0
        %v739 = vpop.f32.mrb[0].mxu0
        %v740 = vadd.f32 0.0, %v739
        %v741 = vpop.f32.mrb[0].mxu0
        %742 = vdwg.mxu0
        %v743 = vadd.f32 %v605, %v729
        %v744 = vadd.f32 %v608, %v732
        %v745 = vadd.f32 %v613, %v737
        %v746 = vadd.f32 %v616, %v740
        %s747 = scalar_lea.vmem [#allocation2], 3
        %v748 = vld [vmem:[%s747] ss:$2 sm:$0xff]
        %s749 = scalar_lea.vmem [#allocation2], 19
        %v750 = vld [vmem:[%s749] ss:$2 sm:$0xff]
        %s751 = scalar_lea.vmem [#allocation2], 35
        %v752 = vld [vmem:[%s751] ss:$2 sm:$0xff]
        %s753 = scalar_lea.vmem [#allocation2], 51
        %v754 = vld [vmem:[%s753] ss:$2 sm:$0xff]
        %v755 = vpack.c.bf16 %v750, %v748
        %v756 = vpack.c.bf16 %v754, %v752
        %s757 = scalar_lea.vmem [#allocation5], 192
        %v758 = vld [vmem:[%s757] sm:$0xf]
        %v759 = vld [vmem:[%s757 + $0x4] sm:$0xf]
        %v760 = vld [vmem:[%s757 + $0x8] sm:$0xf]
        %v761 = vld [vmem:[%s757 + $0xc] sm:$0xf]
        %v762 = vld [vmem:[%s757 + $0x10] sm:$0xf]
        %v763 = vld [vmem:[%s757 + $0x14] sm:$0xf]
        %v764 = vld [vmem:[%s757 + $0x18] sm:$0xf]
        %v765 = vld [vmem:[%s757 + $0x1c] sm:$0xf]
        %v766 = vld [vmem:[%s757 + $0x20] sm:$0xf]
        %v767 = vld [vmem:[%s757 + $0x24] sm:$0xf]
        %v768 = vld [vmem:[%s757 + $0x28] sm:$0xf]
        %v769 = vld [vmem:[%s757 + $0x2c] sm:$0xf]
        %v770 = vld [vmem:[%s757 + $0x30] sm:$0xf]
        %v771 = vld [vmem:[%s757 + $0x34] sm:$0xf]
        %v772 = vld [vmem:[%s757 + $0x38] sm:$0xf]
        %v773 = vld [vmem:[%s757 + $0x3c] sm:$0xf]
        %v790 = vunpack.c.l.b16 %v758
        %v791 = vunpack.c.l.b16 %v759
        %v792 = vunpack.c.l.b16 %v760
        %v793 = vunpack.c.l.b16 %v761
        %v794 = vunpack.c.l.b16 %v762
        %v795 = vunpack.c.l.b16 %v763
        %v796 = vunpack.c.l.b16 %v764
        %v797 = vunpack.c.l.b16 %v765
        %v798 = vunpack.c.l.b16 %v766
        %v799 = vunpack.c.l.b16 %v767
        %v800 = vunpack.c.l.b16 %v768
        %v801 = vunpack.c.l.b16 %v769
        %v802 = vunpack.c.l.b16 %v770
        %v803 = vunpack.c.l.b16 %v771
        %v804 = vunpack.c.l.b16 %v772
        %v805 = vunpack.c.l.b16 %v773
        %v806 = vpack.c.b16 %v791, %v790
        %v807 = vpack.c.b16 %v793, %v792
        %v808 = vpack.c.b16 %v795, %v794
        %v809 = vpack.c.b16 %v797, %v796
        %v810 = vpack.c.b16 %v799, %v798
        %v811 = vpack.c.b16 %v801, %v800
        %v812 = vpack.c.b16 %v803, %v802
        %v813 = vpack.c.b16 %v805, %v804
        %822 = vmatprep.subr.bf16.mxu0 0
        %823 = vmatpush1.bf16.msra.mxu0 %v806
        %824 = vmatprep.subr.bf16.mxu0 0
        %825 = vmatpush1.bf16.msra.mxu0 %v807
        %826 = vmatprep.subr.bf16.mxu0 0
        %827 = vmatpush1.bf16.msra.mxu0 %v808
        %828 = vmatprep.subr.bf16.mxu0 0
        %829 = vmatpush1.bf16.msra.mxu0 %v809
        %830 = vmatprep.subr.bf16.mxu0 0
        %831 = vmatpush1.bf16.msra.mxu0 %v810
        %832 = vmatprep.subr.bf16.mxu0 0
        %833 = vmatpush1.bf16.msra.mxu0 %v811
        %834 = vmatprep.subr.bf16.mxu0 0
        %835 = vmatpush1.bf16.msra.mxu0 %v812
        %836 = vmatprep.subr.bf16.mxu0 0
        %837 = vmatpush1.bf16.msra.mxu0 %v813
        %838 = vmatprep.subr.bf16.mxu0 0
        %839 = vmatpush1.bf16.msra.mxu0 0
        %840 = vmatprep.subr.bf16.mxu0 0
        %841 = vmatpush1.bf16.msra.mxu0 0
        %842 = vmatprep.subr.bf16.mxu0 0
        %843 = vmatpush1.bf16.msra.mxu0 0
        %844 = vmatprep.subr.bf16.mxu0 0
        %845 = vmatpush1.bf16.msra.mxu0 0
        %846 = vmatprep.subr.bf16.mxu0 0
        %847 = vmatpush1.bf16.msra.mxu0 0
        %848 = vmatprep.subr.bf16.mxu0 0
        %849 = vmatpush1.bf16.msra.mxu0 0
        %850 = vmatprep.subr.bf16.mxu0 0
        %851 = vmatpush1.bf16.msra.mxu0 0
        %852 = vmatprep.subr.bf16.mxu0 0
        %853 = vmatpush1.bf16.msra.mxu0 0
        %854 = vmatprep.mubr.bf16.mxu0 0
        %855 = vmatmul.mubr.bf16.gmra.mrb[0].mxu0 %v755
        %v856 = vpop.f32.mrb[0].mxu0
        %v857 = vadd.f32 0.0, %v856
        %v858 = vpop.f32.mrb[0].mxu0
        %v859 = vpop.f32.mrb[0].mxu0
        %v860 = vadd.f32 0.0, %v859
        %v861 = vpop.f32.mrb[0].mxu0
        %862 = vmatprep.mubr.bf16.mxu0 0
        %863 = vmatmul.mubr.bf16.gmra.mrb[0].mxu0 %v756
        %v864 = vpop.f32.mrb[0].mxu0
        %v865 = vadd.f32 0.0, %v864
        %v866 = vpop.f32.mrb[0].mxu0
        %v867 = vpop.f32.mrb[0].mxu0
        %v868 = vadd.f32 0.0, %v867
        %v869 = vpop.f32.mrb[0].mxu0
        %870 = vdwg.mxu0
        %v871 = vadd.f32 %v743, %v857
        %v872 = vadd.f32 %v744, %v860
        %v873 = vadd.f32 %v745, %v865
        %v874 = vadd.f32 %v746, %v868
        %s875 = scalar_lea.vmem [#allocation2], 4
        %v876 = vld [vmem:[%s875] ss:$2 sm:$0xff]
        %s877 = scalar_lea.vmem [#allocation2], 20
        %v878 = vld [vmem:[%s877] ss:$2 sm:$0xff]
        %s879 = scalar_lea.vmem [#allocation2], 36
        %v880 = vld [vmem:[%s879] ss:$2 sm:$0xff]
        %s881 = scalar_lea.vmem [#allocation2], 52
        %v882 = vld [vmem:[%s881] ss:$2 sm:$0xff]
        %v883 = vpack.c.bf16 %v878, %v876
        %v884 = vpack.c.bf16 %v882, %v880
        %s885 = scalar_lea.vmem [#allocation5], 256
        %v886 = vld [vmem:[%s885] sm:$0xf]
        %v887 = vld [vmem:[%s885 + $0x4] sm:$0xf]
        %v888 = vld [vmem:[%s885 + $0x8] sm:$0xf]
        %v889 = vld [vmem:[%s885 + $0xc] sm:$0xf]
        %v890 = vld [vmem:[%s885 + $0x10] sm:$0xf]
        %v891 = vld [vmem:[%s885 + $0x14] sm:$0xf]
        %v892 = vld [vmem:[%s885 + $0x18] sm:$0xf]
        %v893 = vld [vmem:[%s885 + $0x1c] sm:$0xf]
        %v894 = vld [vmem:[%s885 + $0x20] sm:$0xf]
        %v895 = vld [vmem:[%s885 + $0x24] sm:$0xf]
        %v896 = vld [vmem:[%s885 + $0x28] sm:$0xf]
        %v897 = vld [vmem:[%s885 + $0x2c] sm:$0xf]
        %v898 = vld [vmem:[%s885 + $0x30] sm:$0xf]
        %v899 = vld [vmem:[%s885 + $0x34] sm:$0xf]
        %v900 = vld [vmem:[%s885 + $0x38] sm:$0xf]
        %v901 = vld [vmem:[%s885 + $0x3c] sm:$0xf]
        %v918 = vunpack.c.l.b16 %v886
        %v919 = vunpack.c.l.b16 %v887
        %v920 = vunpack.c.l.b16 %v888
        %v921 = vunpack.c.l.b16 %v889
        %v922 = vunpack.c.l.b16 %v890
        %v923 = vunpack.c.l.b16 %v891
        %v924 = vunpack.c.l.b16 %v892
        %v925 = vunpack.c.l.b16 %v893
        %v926 = vunpack.c.l.b16 %v894
        %v927 = vunpack.c.l.b16 %v895
        %v928 = vunpack.c.l.b16 %v896
        %v929 = vunpack.c.l.b16 %v897
        %v930 = vunpack.c.l.b16 %v898
        %v931 = vunpack.c.l.b16 %v899
        %v932 = vunpack.c.l.b16 %v900
        %v933 = vunpack.c.l.b16 %v901
        %v934 = vpack.c.b16 %v919, %v918
        %v935 = vpack.c.b16 %v921, %v920
        %v936 = vpack.c.b16 %v923, %v922
        %v937 = vpack.c.b16 %v925, %v924
        %v938 = vpack.c.b16 %v927, %v926
        %v939 = vpack.c.b16 %v929, %v928
        %v940 = vpack.c.b16 %v931, %v930
        %v941 = vpack.c.b16 %v933, %v932
        %950 = vmatprep.subr.bf16.mxu0 0
        %951 = vmatpush1.bf16.msra.mxu0 %v934
        %952 = vmatprep.subr.bf16.mxu0 0
        %953 = vmatpush1.bf16.msra.mxu0 %v935
        %954 = vmatprep.subr.bf16.mxu0 0
        %955 = vmatpush1.bf16.msra.mxu0 %v936
        %956 = vmatprep.subr.bf16.mxu0 0
        %957 = vmatpush1.bf16.msra.mxu0 %v937
        %958 = vmatprep.subr.bf16.mxu0 0
        %959 = vmatpush1.bf16.msra.mxu0 %v938
        %960 = vmatprep.subr.bf16.mxu0 0
        %961 = vmatpush1.bf16.msra.mxu0 %v939
        %962 = vmatprep.subr.bf16.mxu0 0
        %963 = vmatpush1.bf16.msra.mxu0 %v940
        %964 = vmatprep.subr.bf16.mxu0 0
        %965 = vmatpush1.bf16.msra.mxu0 %v941
        %966 = vmatprep.subr.bf16.mxu0 0
        %967 = vmatpush1.bf16.msra.mxu0 0
        %968 = vmatprep.subr.bf16.mxu0 0
        %969 = vmatpush1.bf16.msra.mxu0 0
        %970 = vmatprep.subr.bf16.mxu0 0
        %971 = vmatpush1.bf16.msra.mxu0 0
        %972 = vmatprep.subr.bf16.mxu0 0
        %973 = vmatpush1.bf16.msra.mxu0 0
        %974 = vmatprep.subr.bf16.mxu0 0
        %975 = vmatpush1.bf16.msra.mxu0 0
        %976 = vmatprep.subr.bf16.mxu0 0
        %977 = vmatpush1.bf16.msra.mxu0 0
        %978 = vmatprep.subr.bf16.mxu0 0
        %979 = vmatpush1.bf16.msra.mxu0 0
        %980 = vmatprep.subr.bf16.mxu0 0
        %981 = vmatpush1.bf16.msra.mxu0 0
        %982 = vmatprep.mubr.bf16.mxu0 0
        %983 = vmatmul.mubr.bf16.gmra.mrb[0].mxu0 %v883
        %v984 = vpop.f32.mrb[0].mxu0
        %v985 = vadd.f32 0.0, %v984
        %v986 = vpop.f32.mrb[0].mxu0
        %v987 = vpop.f32.mrb[0].mxu0
        %v988 = vadd.f32 0.0, %v987
        %v989 = vpop.f32.mrb[0].mxu0
        %990 = vmatprep.mubr.bf16.mxu0 0
        %991 = vmatmul.mubr.bf16.gmra.mrb[0].mxu0 %v884
        %v992 = vpop.f32.mrb[0].mxu0
        %v993 = vadd.f32 0.0, %v992
        %v994 = vpop.f32.mrb[0].mxu0
        %v995 = vpop.f32.mrb[0].mxu0
        %v996 = vadd.f32 0.0, %v995
        %v997 = vpop.f32.mrb[0].mxu0
        %998 = vdwg.mxu0
        %v999 = vadd.f32 %v871, %v985
        %v1000 = vadd.f32 %v872, %v988
        %v1001 = vadd.f32 %v873, %v993
        %v1002 = vadd.f32 %v874, %v996
        %v1003 = vld [vmem:[%s2] sm:$0x1]
        %v1005 = vlaneseq
        %v1006 = vshrl.u32 %v1005, 7
        %v1007 = vsub.s32 0, %v1006
        %v1008 = vrot.slane %v1003, %v1007
        %v1010 = vmul.f32 %v999, %v1008
        %v1011 = vmul.f32 %v1000, %v1008
        %v1012 = vmul.f32 %v1001, %v1008
        %v1013 = vmul.f32 %v1002, %v1008
        %v1014 = vld [vmem:[%s3] sm:$0x1]
        %v1016 = vlaneseq
        %v1017 = vshrl.u32 %v1016, 7
        %v1018 = vsub.s32 0, %v1017
        %v1019 = vrot.slane %v1014, %v1018
        %v1021 = vadd.f32 %v1010, %v1019
        %v1022 = vadd.f32 %v1011, %v1019
        %v1023 = vadd.f32 %v1012, %v1019
        %v1024 = vadd.f32 %v1013, %v1019
        %1025 = vst [vmem:[#allocation3 + $0x2] sm:$0xff] %v1021
        %1026 = vst [vmem:[#allocation3 + $0xa] sm:$0xff] %v1022
        %1027 = vst [vmem:[#allocation3 + $0x12] sm:$0xff] %v1023
        %1028 = vst [vmem:[#allocation3 + $0x1a] sm:$0xff] %v1024
        %v1029 = vld [vmem:[#allocation3] sm:$0xff]
        %v1030 = vld [vmem:[#allocation3 + $0x8] sm:$0xff]
        %v1031 = vld [vmem:[#allocation3 + $0x10] sm:$0xff]
        %v1032 = vld [vmem:[#allocation3 + $0x18] sm:$0xff]
        %v1033 = vpack.c.bf16 %v1030, %v1029
        %v1034 = vpack.c.bf16 %v1032, %v1031
        %v1035 = vld [vmem:[#allocation7] sm:$0xf]
        %v1036 = vld [vmem:[#allocation7 + $0x4] sm:$0xf]
        %v1037 = vld [vmem:[#allocation7 + $0x8] sm:$0xf]
        %v1038 = vld [vmem:[#allocation7 + $0xc] sm:$0xf]
        %v1039 = vld [vmem:[#allocation7 + $0x10] sm:$0xf]
        %v1040 = vld [vmem:[#allocation7 + $0x14] sm:$0xf]
        %v1041 = vld [vmem:[#allocation7 + $0x18] sm:$0xf]
        %v1042 = vld [vmem:[#allocation7 + $0x1c] sm:$0xf]
        %v1043 = vld [vmem:[#allocation7 + $0x20] sm:$0xf]
        %v1044 = vld [vmem:[#allocation7 + $0x24] sm:$0xf]
        %v1045 = vld [vmem:[#allocation7 + $0x28] sm:$0xf]
        %v1046 = vld [vmem:[#allocation7 + $0x2c] sm:$0xf]
        %v1047 = vld [vmem:[#allocation7 + $0x30] sm:$0xf]
        %v1048 = vld [vmem:[#allocation7 + $0x34] sm:$0xf]
        %v1049 = vld [vmem:[#allocation7 + $0x38] sm:$0xf]
        %v1050 = vld [vmem:[#allocation7 + $0x3c] sm:$0xf]
        %v1051 = vld [vmem:[#allocation3 + $0x1] sm:$0xff]
        %v1052 = vld [vmem:[#allocation3 + $0x9] sm:$0xff]
        %v1053 = vld [vmem:[#allocation3 + $0x11] sm:$0xff]
        %v1054 = vld [vmem:[#allocation3 + $0x19] sm:$0xff]
        %v1055 = vpack.c.bf16 %v1052, %v1051
        %v1056 = vpack.c.bf16 %v1054, %v1053
        %s1057 = scalar_lea.vmem [#allocation7], 64
        %v1058 = vld [vmem:[%s1057] sm:$0xf]
        %v1059 = vld [vmem:[%s1057 + $0x4] sm:$0xf]
        %v1060 = vld [vmem:[%s1057 + $0x8] sm:$0xf]
        %v1061 = vld [vmem:[%s1057 + $0xc] sm:$0xf]
        %v1062 = vld [vmem:[%s1057 + $0x10] sm:$0xf]
        %v1063 = vld [vmem:[%s1057 + $0x14] sm:$0xf]
        %v1064 = vld [vmem:[%s1057 + $0x18] sm:$0xf]
        %v1065 = vld [vmem:[%s1057 + $0x1c] sm:$0xf]
        %v1066 = vld [vmem:[%s1057 + $0x20] sm:$0xf]
        %v1067 = vld [vmem:[%s1057 + $0x24] sm:$0xf]
        %v1068 = vld [vmem:[%s1057 + $0x28] sm:$0xf]
        %v1069 = vld [vmem:[%s1057 + $0x2c] sm:$0xf]
        %v1070 = vld [vmem:[%s1057 + $0x30] sm:$0xf]
        %v1071 = vld [vmem:[%s1057 + $0x34] sm:$0xf]
        %v1072 = vld [vmem:[%s1057 + $0x38] sm:$0xf]
        %v1073 = vld [vmem:[%s1057 + $0x3c] sm:$0xf]
        %v1090 = vunpack.c.l.b16 %v1058
        %v1091 = vunpack.c.l.b16 %v1059
        %v1092 = vunpack.c.l.b16 %v1060
        %v1093 = vunpack.c.l.b16 %v1061
        %v1094 = vunpack.c.l.b16 %v1062
        %v1095 = vunpack.c.l.b16 %v1063
        %v1096 = vunpack.c.l.b16 %v1064
        %v1097 = vunpack.c.l.b16 %v1065
        %v1098 = vunpack.c.l.b16 %v1066
        %v1099 = vunpack.c.l.b16 %v1067
        %v1100 = vunpack.c.l.b16 %v1068
        %v1101 = vunpack.c.l.b16 %v1069
        %v1102 = vunpack.c.l.b16 %v1070
        %v1103 = vunpack.c.l.b16 %v1071
        %v1104 = vunpack.c.l.b16 %v1072
        %v1105 = vunpack.c.l.b16 %v1073
        %v1106 = vpack.c.b16 %v1091, %v1090
        %v1107 = vpack.c.b16 %v1093, %v1092
        %v1108 = vpack.c.b16 %v1095, %v1094
        %v1109 = vpack.c.b16 %v1097, %v1096
        %v1110 = vpack.c.b16 %v1099, %v1098
        %v1111 = vpack.c.b16 %v1101, %v1100
        %v1112 = vpack.c.b16 %v1103, %v1102
        %v1113 = vpack.c.b16 %v1105, %v1104
        %1122 = vmatprep.subr.bf16.mxu0 0
        %1123 = vmatpush1.bf16.msra.mxu0 %v1106
        %1124 = vmatprep.subr.bf16.mxu0 0
        %1125 = vmatpush1.bf16.msra.mxu0 %v1107
        %1126 = vmatprep.subr.bf16.mxu0 0
        %1127 = vmatpush1.bf16.msra.mxu0 %v1108
        %1128 = vmatprep.subr.bf16.mxu0 0
        %1129 = vmatpush1.bf16.msra.mxu0 %v1109
        %1130 = vmatprep.subr.bf16.mxu0 0
        %1131 = vmatpush1.bf16.msra.mxu0 %v1110
        %1132 = vmatprep.subr.bf16.mxu0 0
        %1133 = vmatpush1.bf16.msra.mxu0 %v1111
        %1134 = vmatprep.subr.bf16.mxu0 0
        %1135 = vmatpush1.bf16.msra.mxu0 %v1112
        %1136 = vmatprep.subr.bf16.mxu0 0
        %1137 = vmatpush1.bf16.msra.mxu0 %v1113
        %1138 = vmatprep.subr.bf16.mxu0 0
        %1139 = vmatpush1.bf16.msra.mxu0 0
        %1140 = vmatprep.subr.bf16.mxu0 0
        %1141 = vmatpush1.bf16.msra.mxu0 0
        %1142 = vmatprep.subr.bf16.mxu0 0
        %1143 = vmatpush1.bf16.msra.mxu0 0
        %1144 = vmatprep.subr.bf16.mxu0 0
        %1145 = vmatpush1.bf16.msra.mxu0 0
        %1146 = vmatprep.subr.bf16.mxu0 0
        %1147 = vmatpush1.bf16.msra.mxu0 0
        %1148 = vmatprep.subr.bf16.mxu0 0
        %1149 = vmatpush1.bf16.msra.mxu0 0
        %1150 = vmatprep.subr.bf16.mxu0 0
        %1151 = vmatpush1.bf16.msra.mxu0 0
        %1152 = vmatprep.subr.bf16.mxu0 0
        %1153 = vmatpush1.bf16.msra.mxu0 0
        %1154 = vmatprep.mubr.bf16.mxu0 0
        %1155 = vmatmul.mubr.bf16.gmra.mrb[0].mxu0 %v1055
        %v1156 = vpop.f32.mrb[0].mxu0
        %v1157 = vadd.f32 0.0, %v1156
        %v1158 = vpop.f32.mrb[0].mxu0
        %v1159 = vpop.f32.mrb[0].mxu0
        %v1160 = vadd.f32 0.0, %v1159
        %v1161 = vpop.f32.mrb[0].mxu0
        %1162 = vmatprep.mubr.bf16.mxu0 0
        %1163 = vmatmul.mubr.bf16.gmra.mrb[0].mxu0 %v1056
        %v1164 = vpop.f32.mrb[0].mxu0
        %v1165 = vadd.f32 0.0, %v1164
        %v1166 = vpop.f32.mrb[0].mxu0
        %v1167 = vpop.f32.mrb[0].mxu0
        %v1168 = vadd.f32 0.0, %v1167
        %v1169 = vpop.f32.mrb[0].mxu0
        %1170 = vdwg.mxu0
        %v1187 = vunpack.c.l.b16 %v1035
        %v1188 = vunpack.c.l.b16 %v1036
        %v1189 = vunpack.c.l.b16 %v1037
        %v1190 = vunpack.c.l.b16 %v1038
        %v1191 = vunpack.c.l.b16 %v1039
        %v1192 = vunpack.c.l.b16 %v1040
        %v1193 = vunpack.c.l.b16 %v1041
        %v1194 = vunpack.c.l.b16 %v1042
        %v1195 = vunpack.c.l.b16 %v1043
        %v1196 = vunpack.c.l.b16 %v1044
        %v1197 = vunpack.c.l.b16 %v1045
        %v1198 = vunpack.c.l.b16 %v1046
        %v1199 = vunpack.c.l.b16 %v1047
        %v1200 = vunpack.c.l.b16 %v1048
        %v1201 = vunpack.c.l.b16 %v1049
        %v1202 = vunpack.c.l.b16 %v1050
        %v1203 = vpack.c.b16 %v1188, %v1187
        %v1204 = vpack.c.b16 %v1190, %v1189
        %v1205 = vpack.c.b16 %v1192, %v1191
        %v1206 = vpack.c.b16 %v1194, %v1193
        %v1207 = vpack.c.b16 %v1196, %v1195
        %v1208 = vpack.c.b16 %v1198, %v1197
        %v1209 = vpack.c.b16 %v1200, %v1199
        %v1210 = vpack.c.b16 %v1202, %v1201
        %1219 = vmatprep.subr.bf16.mxu0 0
        %1220 = vmatpush1.bf16.msra.mxu0 %v1203
        %1221 = vmatprep.subr.bf16.mxu0 0
        %1222 = vmatpush1.bf16.msra.mxu0 %v1204
        %1223 = vmatprep.subr.bf16.mxu0 0
        %1224 = vmatpush1.bf16.msra.mxu0 %v1205
        %1225 = vmatprep.subr.bf16.mxu0 0
        %1226 = vmatpush1.bf16.msra.mxu0 %v1206
        %1227 = vmatprep.subr.bf16.mxu0 0
        %1228 = vmatpush1.bf16.msra.mxu0 %v1207
        %1229 = vmatprep.subr.bf16.mxu0 0
        %1230 = vmatpush1.bf16.msra.mxu0 %v1208
        %1231 = vmatprep.subr.bf16.mxu0 0
        %1232 = vmatpush1.bf16.msra.mxu0 %v1209
        %1233 = vmatprep.subr.bf16.mxu0 0
        %1234 = vmatpush1.bf16.msra.mxu0 %v1210
        %1235 = vmatprep.subr.bf16.mxu0 0
        %1236 = vmatpush1.bf16.msra.mxu0 0
        %1237 = vmatprep.subr.bf16.mxu0 0
        %1238 = vmatpush1.bf16.msra.mxu0 0
        %1239 = vmatprep.subr.bf16.mxu0 0
        %1240 = vmatpush1.bf16.msra.mxu0 0
        %1241 = vmatprep.subr.bf16.mxu0 0
        %1242 = vmatpush1.bf16.msra.mxu0 0
        %1243 = vmatprep.subr.bf16.mxu0 0
        %1244 = vmatpush1.bf16.msra.mxu0 0
        %1245 = vmatprep.subr.bf16.mxu0 0
        %1246 = vmatpush1.bf16.msra.mxu0 0
        %1247 = vmatprep.subr.bf16.mxu0 0
        %1248 = vmatpush1.bf16.msra.mxu0 0
        %1249 = vmatprep.subr.bf16.mxu0 0
        %1250 = vmatpush1.bf16.msra.mxu0 0
        %1251 = vmatprep.mubr.bf16.mxu0 0
        %1252 = vmatmul.mubr.bf16.gmra.mrb[0].mxu0 %v1033
        %v1253 = vpop.f32.mrb[0].mxu0
        %v1254 = vadd.f32 %v1157, %v1253
        %v1255 = vpop.f32.mrb[0].mxu0
        %v1256 = vpop.f32.mrb[0].mxu0
        %v1257 = vadd.f32 %v1160, %v1256
        %v1258 = vpop.f32.mrb[0].mxu0
        %1259 = vmatprep.mubr.bf16.mxu0 0
        %1260 = vmatmul.mubr.bf16.gmra.mrb[0].mxu0 %v1034
        %v1261 = vpop.f32.mrb[0].mxu0
        %v1262 = vadd.f32 %v1165, %v1261
        %v1263 = vpop.f32.mrb[0].mxu0
        %v1264 = vpop.f32.mrb[0].mxu0
        %v1265 = vadd.f32 %v1168, %v1264
        %v1266 = vpop.f32.mrb[0].mxu0
        %1267 = vdwg.mxu0
        %v1268 = vld [vmem:[#allocation3 + $0x2] sm:$0xff]
        %v1269 = vld [vmem:[#allocation3 + $0xa] sm:$0xff]
        %v1270 = vld [vmem:[#allocation3 + $0x12] sm:$0xff]
        %v1271 = vld [vmem:[#allocation3 + $0x1a] sm:$0xff]
        %v1272 = vpack.c.bf16 %v1269, %v1268
        %v1273 = vpack.c.bf16 %v1271, %v1270
        %s1274 = scalar_lea.vmem [#allocation7], 128
        %v1275 = vld [vmem:[%s1274] sm:$0xf]
        %v1276 = vld [vmem:[%s1274 + $0x4] sm:$0xf]
        %v1277 = vld [vmem:[%s1274 + $0x8] sm:$0xf]
        %v1278 = vld [vmem:[%s1274 + $0xc] sm:$0xf]
        %v1279 = vld [vmem:[%s1274 + $0x10] sm:$0xf]
        %v1280 = vld [vmem:[%s1274 + $0x14] sm:$0xf]
        %v1281 = vld [vmem:[%s1274 + $0x18] sm:$0xf]
        %v1282 = vld [vmem:[%s1274 + $0x1c] sm:$0xf]
        %v1283 = vld [vmem:[%s1274 + $0x20] sm:$0xf]
        %v1284 = vld [vmem:[%s1274 + $0x24] sm:$0xf]
        %v1285 = vld [vmem:[%s1274 + $0x28] sm:$0xf]
        %v1286 = vld [vmem:[%s1274 + $0x2c] sm:$0xf]
        %v1287 = vld [vmem:[%s1274 + $0x30] sm:$0xf]
        %v1288 = vld [vmem:[%s1274 + $0x34] sm:$0xf]
        %v1289 = vld [vmem:[%s1274 + $0x38] sm:$0xf]
        %v1290 = vld [vmem:[%s1274 + $0x3c] sm:$0xf]
        %v1307 = vunpack.c.l.b16 %v1275
        %v1308 = vunpack.c.l.b16 %v1276
        %v1309 = vunpack.c.l.b16 %v1277
        %v1310 = vunpack.c.l.b16 %v1278
        %v1311 = vunpack.c.l.b16 %v1279
        %v1312 = vunpack.c.l.b16 %v1280
        %v1313 = vunpack.c.l.b16 %v1281
        %v1314 = vunpack.c.l.b16 %v1282
        %v1315 = vunpack.c.l.b16 %v1283
        %v1316 = vunpack.c.l.b16 %v1284
        %v1317 = vunpack.c.l.b16 %v1285
        %v1318 = vunpack.c.l.b16 %v1286
        %v1319 = vunpack.c.l.b16 %v1287
        %v1320 = vunpack.c.l.b16 %v1288
        %v1321 = vunpack.c.l.b16 %v1289
        %v1322 = vunpack.c.l.b16 %v1290
        %v1323 = vpack.c.b16 %v1308, %v1307
        %v1324 = vpack.c.b16 %v1310, %v1309
        %v1325 = vpack.c.b16 %v1312, %v1311
        %v1326 = vpack.c.b16 %v1314, %v1313
        %v1327 = vpack.c.b16 %v1316, %v1315
        %v1328 = vpack.c.b16 %v1318, %v1317
        %v1329 = vpack.c.b16 %v1320, %v1319
        %v1330 = vpack.c.b16 %v1322, %v1321
        %1339 = vmatprep.subr.bf16.mxu0 0
        %1340 = vmatpush1.bf16.msra.mxu0 %v1323
        %1341 = vmatprep.subr.bf16.mxu0 0
        %1342 = vmatpush1.bf16.msra.mxu0 %v1324
        %1343 = vmatprep.subr.bf16.mxu0 0
        %1344 = vmatpush1.bf16.msra.mxu0 %v1325
        %1345 = vmatprep.subr.bf16.mxu0 0
        %1346 = vmatpush1.bf16.msra.mxu0 %v1326
        %1347 = vmatprep.subr.bf16.mxu0 0
        %1348 = vmatpush1.bf16.msra.mxu0 %v1327
        %1349 = vmatprep.subr.bf16.mxu0 0
        %1350 = vmatpush1.bf16.msra.mxu0 %v1328
        %1351 = vmatprep.subr.bf16.mxu0 0
        %1352 = vmatpush1.bf16.msra.mxu0 %v1329
        %1353 = vmatprep.subr.bf16.mxu0 0
        %1354 = vmatpush1.bf16.msra.mxu0 %v1330
        %1355 = vmatprep.subr.bf16.mxu0 0
        %1356 = vmatpush1.bf16.msra.mxu0 0
        %1357 = vmatprep.subr.bf16.mxu0 0
        %1358 = vmatpush1.bf16.msra.mxu0 0
        %1359 = vmatprep.subr.bf16.mxu0 0
        %1360 = vmatpush1.bf16.msra.mxu0 0
        %1361 = vmatprep.subr.bf16.mxu0 0
        %1362 = vmatpush1.bf16.msra.mxu0 0
        %1363 = vmatprep.subr.bf16.mxu0 0
        %1364 = vmatpush1.bf16.msra.mxu0 0
        %1365 = vmatprep.subr.bf16.mxu0 0
        %1366 = vmatpush1.bf16.msra.mxu0 0
        %1367 = vmatprep.subr.bf16.mxu0 0
        %1368 = vmatpush1.bf16.msra.mxu0 0
        %1369 = vmatprep.subr.bf16.mxu0 0
        %1370 = vmatpush1.bf16.msra.mxu0 0
        %1371 = vmatprep.mubr.bf16.mxu0 0
        %1372 = vmatmul.mubr.bf16.gmra.mrb[0].mxu0 %v1272
        %v1373 = vpop.f32.mrb[0].mxu0
        %v1374 = vadd.f32 0.0, %v1373
        %v1375 = vpop.f32.mrb[0].mxu0
        %v1376 = vpop.f32.mrb[0].mxu0
        %v1377 = vadd.f32 0.0, %v1376
        %v1378 = vpop.f32.mrb[0].mxu0
        %1379 = vmatprep.mubr.bf16.mxu0 0
        %1380 = vmatmul.mubr.bf16.gmra.mrb[0].mxu0 %v1273
        %v1381 = vpop.f32.mrb[0].mxu0
        %v1382 = vadd.f32 0.0, %v1381
        %v1383 = vpop.f32.mrb[0].mxu0
        %v1384 = vpop.f32.mrb[0].mxu0
        %v1385 = vadd.f32 0.0, %v1384
        %v1386 = vpop.f32.mrb[0].mxu0
        %1387 = vdwg.mxu0
        %v1388 = vadd.f32 %v1254, %v1374
        %v1389 = vadd.f32 %v1257, %v1377
        %v1390 = vadd.f32 %v1262, %v1382
        %v1391 = vadd.f32 %v1265, %v1385
        %v1392 = vld [vmem:[#allocation3 + $0x3] sm:$0xff]
        %v1393 = vld [vmem:[#allocation3 + $0xb] sm:$0xff]
        %v1394 = vld [vmem:[#allocation3 + $0x13] sm:$0xff]
        %v1395 = vld [vmem:[#allocation3 + $0x1b] sm:$0xff]
        %v1396 = vpack.c.bf16 %v1393, %v1392
        %v1397 = vpack.c.bf16 %v1395, %v1394
        %s1398 = scalar_lea.vmem [#allocation7], 192
        %v1399 = vld [vmem:[%s1398] sm:$0xf]
        %v1400 = vld [vmem:[%s1398 + $0x4] sm:$0xf]
        %v1401 = vld [vmem:[%s1398 + $0x8] sm:$0xf]
        %v1402 = vld [vmem:[%s1398 + $0xc] sm:$0xf]
        %v1403 = vld [vmem:[%s1398 + $0x10] sm:$0xf]
        %v1404 = vld [vmem:[%s1398 + $0x14] sm:$0xf]
        %v1405 = vld [vmem:[%s1398 + $0x18] sm:$0xf]
        %v1406 = vld [vmem:[%s1398 + $0x1c] sm:$0xf]
        %v1407 = vld [vmem:[%s1398 + $0x20] sm:$0xf]
        %v1408 = vld [vmem:[%s1398 + $0x24] sm:$0xf]
        %v1409 = vld [vmem:[%s1398 + $0x28] sm:$0xf]
        %v1410 = vld [vmem:[%s1398 + $0x2c] sm:$0xf]
        %v1411 = vld [vmem:[%s1398 + $0x30] sm:$0xf]
        %v1412 = vld [vmem:[%s1398 + $0x34] sm:$0xf]
        %v1413 = vld [vmem:[%s1398 + $0x38] sm:$0xf]
        %v1414 = vld [vmem:[%s1398 + $0x3c] sm:$0xf]
        %v1431 = vunpack.c.l.b16 %v1399
        %v1432 = vunpack.c.l.b16 %v1400
        %v1433 = vunpack.c.l.b16 %v1401
        %v1434 = vunpack.c.l.b16 %v1402
        %v1435 = vunpack.c.l.b16 %v1403
        %v1436 = vunpack.c.l.b16 %v1404
        %v1437 = vunpack.c.l.b16 %v1405
        %v1438 = vunpack.c.l.b16 %v1406
        %v1439 = vunpack.c.l.b16 %v1407
        %v1440 = vunpack.c.l.b16 %v1408
        %v1441 = vunpack.c.l.b16 %v1409
        %v1442 = vunpack.c.l.b16 %v1410
        %v1443 = vunpack.c.l.b16 %v1411
        %v1444 = vunpack.c.l.b16 %v1412
        %v1445 = vunpack.c.l.b16 %v1413
        %v1446 = vunpack.c.l.b16 %v1414
        %v1447 = vpack.c.b16 %v1432, %v1431
        %v1448 = vpack.c.b16 %v1434, %v1433
        %v1449 = vpack.c.b16 %v1436, %v1435
        %v1450 = vpack.c.b16 %v1438, %v1437
        %v1451 = vpack.c.b16 %v1440, %v1439
        %v1452 = vpack.c.b16 %v1442, %v1441
        %v1453 = vpack.c.b16 %v1444, %v1443
        %v1454 = vpack.c.b16 %v1446, %v1445
        %1463 = vmatprep.subr.bf16.mxu0 0
        %1464 = vmatpush1.bf16.msra.mxu0 %v1447
        %1465 = vmatprep.subr.bf16.mxu0 0
        %1466 = vmatpush1.bf16.msra.mxu0 %v1448
        %1467 = vmatprep.subr.bf16.mxu0 0
        %1468 = vmatpush1.bf16.msra.mxu0 %v1449
        %1469 = vmatprep.subr.bf16.mxu0 0
        %1470 = vmatpush1.bf16.msra.mxu0 %v1450
        %1471 = vmatprep.subr.bf16.mxu0 0
        %1472 = vmatpush1.bf16.msra.mxu0 %v1451
        %1473 = vmatprep.subr.bf16.mxu0 0
        %1474 = vmatpush1.bf16.msra.mxu0 %v1452
        %1475 = vmatprep.subr.bf16.mxu0 0
        %1476 = vmatpush1.bf16.msra.mxu0 %v1453
        %1477 = vmatprep.subr.bf16.mxu0 0
        %1478 = vmatpush1.bf16.msra.mxu0 %v1454
        %1479 = vmatprep.subr.bf16.mxu0 0
        %1480 = vmatpush1.bf16.msra.mxu0 0
        %1481 = vmatprep.subr.bf16.mxu0 0
        %1482 = vmatpush1.bf16.msra.mxu0 0
        %1483 = vmatprep.subr.bf16.mxu0 0
        %1484 = vmatpush1.bf16.msra.mxu0 0
        %1485 = vmatprep.subr.bf16.mxu0 0
        %1486 = vmatpush1.bf16.msra.mxu0 0
        %1487 = vmatprep.subr.bf16.mxu0 0
        %1488 = vmatpush1.bf16.msra.mxu0 0
        %1489 = vmatprep.subr.bf16.mxu0 0
        %1490 = vmatpush1.bf16.msra.mxu0 0
        %1491 = vmatprep.subr.bf16.mxu0 0
        %1492 = vmatpush1.bf16.msra.mxu0 0
        %1493 = vmatprep.subr.bf16.mxu0 0
        %1494 = vmatpush1.bf16.msra.mxu0 0
        %1495 = vmatprep.mubr.bf16.mxu0 0
        %1496 = vmatmul.mubr.bf16.gmra.mrb[0].mxu0 %v1396
        %v1497 = vpop.f32.mrb[0].mxu0
        %v1498 = vadd.f32 0.0, %v1497
        %v1499 = vpop.f32.mrb[0].mxu0
        %v1500 = vpop.f32.mrb[0].mxu0
        %v1501 = vadd.f32 0.0, %v1500
        %v1502 = vpop.f32.mrb[0].mxu0
        %1503 = vmatprep.mubr.bf16.mxu0 0
        %1504 = vmatmul.mubr.bf16.gmra.mrb[0].mxu0 %v1397
        %v1505 = vpop.f32.mrb[0].mxu0
        %v1506 = vadd.f32 0.0, %v1505
        %v1507 = vpop.f32.mrb[0].mxu0
        %v1508 = vpop.f32.mrb[0].mxu0
        %v1509 = vadd.f32 0.0, %v1508
        %v1510 = vpop.f32.mrb[0].mxu0
        %1511 = vdwg.mxu0
        %v1512 = vadd.f32 %v1388, %v1498
        %v1513 = vadd.f32 %v1389, %v1501
        %v1514 = vadd.f32 %v1390, %v1506
        %v1515 = vadd.f32 %v1391, %v1509
        %v1516 = vld [vmem:[#allocation3 + $0x4] sm:$0xff]
        %v1517 = vld [vmem:[#allocation3 + $0xc] sm:$0xff]
        %v1518 = vld [vmem:[#allocation3 + $0x14] sm:$0xff]
        %v1519 = vld [vmem:[#allocation3 + $0x1c] sm:$0xff]
        %v1520 = vpack.c.bf16 %v1517, %v1516
        %v1521 = vpack.c.bf16 %v1519, %v1518
        %s1522 = scalar_lea.vmem [#allocation7], 256
        %v1523 = vld [vmem:[%s1522] sm:$0xf]
        %v1524 = vld [vmem:[%s1522 + $0x4] sm:$0xf]
        %v1525 = vld [vmem:[%s1522 + $0x8] sm:$0xf]
        %v1526 = vld [vmem:[%s1522 + $0xc] sm:$0xf]
        %v1527 = vld [vmem:[%s1522 + $0x10] sm:$0xf]
        %v1528 = vld [vmem:[%s1522 + $0x14] sm:$0xf]
        %v1529 = vld [vmem:[%s1522 + $0x18] sm:$0xf]
        %v1530 = vld [vmem:[%s1522 + $0x1c] sm:$0xf]
        %v1531 = vld [vmem:[%s1522 + $0x20] sm:$0xf]
        %v1532 = vld [vmem:[%s1522 + $0x24] sm:$0xf]
        %v1533 = vld [vmem:[%s1522 + $0x28] sm:$0xf]
        %v1534 = vld [vmem:[%s1522 + $0x2c] sm:$0xf]
        %v1535 = vld [vmem:[%s1522 + $0x30] sm:$0xf]
        %v1536 = vld [vmem:[%s1522 + $0x34] sm:$0xf]
        %v1537 = vld [vmem:[%s1522 + $0x38] sm:$0xf]
        %v1538 = vld [vmem:[%s1522 + $0x3c] sm:$0xf]
        %v1555 = vunpack.c.l.b16 %v1523
        %v1556 = vunpack.c.l.b16 %v1524
        %v1557 = vunpack.c.l.b16 %v1525
        %v1558 = vunpack.c.l.b16 %v1526
        %v1559 = vunpack.c.l.b16 %v1527
        %v1560 = vunpack.c.l.b16 %v1528
        %v1561 = vunpack.c.l.b16 %v1529
        %v1562 = vunpack.c.l.b16 %v1530
        %v1563 = vunpack.c.l.b16 %v1531
        %v1564 = vunpack.c.l.b16 %v1532
        %v1565 = vunpack.c.l.b16 %v1533
        %v1566 = vunpack.c.l.b16 %v1534
        %v1567 = vunpack.c.l.b16 %v1535
        %v1568 = vunpack.c.l.b16 %v1536
        %v1569 = vunpack.c.l.b16 %v1537
        %v1570 = vunpack.c.l.b16 %v1538
        %v1571 = vpack.c.b16 %v1556, %v1555
        %v1572 = vpack.c.b16 %v1558, %v1557
        %v1573 = vpack.c.b16 %v1560, %v1559
        %v1574 = vpack.c.b16 %v1562, %v1561
        %v1575 = vpack.c.b16 %v1564, %v1563
        %v1576 = vpack.c.b16 %v1566, %v1565
        %v1577 = vpack.c.b16 %v1568, %v1567
        %v1578 = vpack.c.b16 %v1570, %v1569
        %1587 = vmatprep.subr.bf16.mxu0 0
        %1588 = vmatpush1.bf16.msra.mxu0 %v1571
        %1589 = vmatprep.subr.bf16.mxu0 0
        %1590 = vmatpush1.bf16.msra.mxu0 %v1572
        %1591 = vmatprep.subr.bf16.mxu0 0
        %1592 = vmatpush1.bf16.msra.mxu0 %v1573
        %1593 = vmatprep.subr.bf16.mxu0 0
        %1594 = vmatpush1.bf16.msra.mxu0 %v1574
        %1595 = vmatprep.subr.bf16.mxu0 0
        %1596 = vmatpush1.bf16.msra.mxu0 %v1575
        %1597 = vmatprep.subr.bf16.mxu0 0
        %1598 = vmatpush1.bf16.msra.mxu0 %v1576
        %1599 = vmatprep.subr.bf16.mxu0 0
        %1600 = vmatpush1.bf16.msra.mxu0 %v1577
        %1601 = vmatprep.subr.bf16.mxu0 0
        %1602 = vmatpush1.bf16.msra.mxu0 %v1578
        %1603 = vmatprep.subr.bf16.mxu0 0
        %1604 = vmatpush1.bf16.msra.mxu0 0
        %1605 = vmatprep.subr.bf16.mxu0 0
        %1606 = vmatpush1.bf16.msra.mxu0 0
        %1607 = vmatprep.subr.bf16.mxu0 0
        %1608 = vmatpush1.bf16.msra.mxu0 0
        %1609 = vmatprep.subr.bf16.mxu0 0
        %1610 = vmatpush1.bf16.msra.mxu0 0
        %1611 = vmatprep.subr.bf16.mxu0 0
        %1612 = vmatpush1.bf16.msra.mxu0 0
        %1613 = vmatprep.subr.bf16.mxu0 0
        %1614 = vmatpush1.bf16.msra.mxu0 0
        %1615 = vmatprep.subr.bf16.mxu0 0
        %1616 = vmatpush1.bf16.msra.mxu0 0
        %1617 = vmatprep.subr.bf16.mxu0 0
        %1618 = vmatpush1.bf16.msra.mxu0 0
        %1619 = vmatprep.mubr.bf16.mxu0 0
        %1620 = vmatmul.mubr.bf16.gmra.mrb[0].mxu0 %v1520
        %v1621 = vpop.f32.mrb[0].mxu0
        %v1622 = vadd.f32 0.0, %v1621
        %v1623 = vpop.f32.mrb[0].mxu0
        %v1624 = vpop.f32.mrb[0].mxu0
        %v1625 = vadd.f32 0.0, %v1624
        %v1626 = vpop.f32.mrb[0].mxu0
        %1627 = vmatprep.mubr.bf16.mxu0 0
        %1628 = vmatmul.mubr.bf16.gmra.mrb[0].mxu0 %v1521
        %v1629 = vpop.f32.mrb[0].mxu0
        %v1630 = vadd.f32 0.0, %v1629
        %v1631 = vpop.f32.mrb[0].mxu0
        %v1632 = vpop.f32.mrb[0].mxu0
        %v1633 = vadd.f32 0.0, %v1632
        %v1634 = vpop.f32.mrb[0].mxu0
        %1635 = vdwg.mxu0
        %v1636 = vadd.f32 %v1512, %v1622
        %v1637 = vadd.f32 %v1513, %v1625
        %v1638 = vadd.f32 %v1514, %v1630
        %v1639 = vadd.f32 %v1515, %v1633
        %v1640 = vld [vmem:[%s5] sm:$0x1]
        %v1642 = vlaneseq
        %v1643 = vshrl.u32 %v1642, 7
        %v1644 = vsub.s32 0, %v1643
        %v1645 = vrot.slane %v1640, %v1644
        %v1647 = vmul.f32 %v1636, %v1645
        %v1648 = vmul.f32 %v1637, %v1645
        %v1649 = vmul.f32 %v1638, %v1645
        %v1650 = vmul.f32 %v1639, %v1645
        %v1651 = vld [vmem:[%s6] sm:$0x1]
        %v1653 = vlaneseq
        %v1654 = vshrl.u32 %v1653, 7
        %v1655 = vsub.s32 0, %v1654
        %v1656 = vrot.slane %v1651, %v1655
        %v1658 = vadd.f32 %v1647, %v1656
        %v1659 = vadd.f32 %v1648, %v1656
        %v1660 = vadd.f32 %v1649, %v1656
        %v1661 = vadd.f32 %v1650, %v1656
        %v1662 = vmax.f32 %v1658, 0.0
        %v1663 = vmax.f32 %v1659, 0.0
        %v1664 = vmax.f32 %v1660, 0.0
        %v1665 = vmax.f32 %v1661, 0.0
        %1666 = vst [vmem:[#allocation4 + $0x2] sm:$0xff] %v1662
        %1667 = vst [vmem:[#allocation4 + $0xa] sm:$0xff] %v1663
        %1668 = vst [vmem:[#allocation4 + $0x12] sm:$0xff] %v1664
        %1669 = vst [vmem:[#allocation4 + $0x1a] sm:$0xff] %v1665
        %v1670 = vld [vmem:[#allocation4] sm:$0xff]
        %v1671 = vld [vmem:[#allocation4 + $0x8] sm:$0xff]
        %v1672 = vld [vmem:[#allocation4 + $0x10] sm:$0xff]
        %v1673 = vld [vmem:[#allocation4 + $0x18] sm:$0xff]
        %v1674 = vpack.c.bf16 %v1671, %v1670
        %v1675 = vpack.c.bf16 %v1673, %v1672
        %v1676 = vld [vmem:[#allocation9] sm:$0xf]
        %v1677 = vld [vmem:[#allocation9 + $0x4] sm:$0xf]
        %v1678 = vld [vmem:[#allocation9 + $0x8] sm:$0xf]
        %v1679 = vld [vmem:[#allocation9 + $0xc] sm:$0xf]
        %v1680 = vld [vmem:[#allocation9 + $0x10] sm:$0xf]
        %v1681 = vld [vmem:[#allocation9 + $0x14] sm:$0xf]
        %v1682 = vld [vmem:[#allocation9 + $0x18] sm:$0xf]
        %v1683 = vld [vmem:[#allocation9 + $0x1c] sm:$0xf]
        %v1684 = vld [vmem:[#allocation9 + $0x20] sm:$0xf]
        %v1685 = vld [vmem:[#allocation9 + $0x24] sm:$0xf]
        %v1686 = vld [vmem:[#allocation9 + $0x28] sm:$0xf]
        %v1687 = vld [vmem:[#allocation9 + $0x2c] sm:$0xf]
        %v1688 = vld [vmem:[#allocation9 + $0x30] sm:$0xf]
        %v1689 = vld [vmem:[#allocation9 + $0x34] sm:$0xf]
        %v1690 = vld [vmem:[#allocation9 + $0x38] sm:$0xf]
        %v1691 = vld [vmem:[#allocation9 + $0x3c] sm:$0xf]
        %v1692 = vld [vmem:[#allocation4 + $0x1] sm:$0xff]
        %v1693 = vld [vmem:[#allocation4 + $0x9] sm:$0xff]
        %v1694 = vld [vmem:[#allocation4 + $0x11] sm:$0xff]
        %v1695 = vld [vmem:[#allocation4 + $0x19] sm:$0xff]
        %v1696 = vpack.c.bf16 %v1693, %v1692
        %v1697 = vpack.c.bf16 %v1695, %v1694
        %s1698 = scalar_lea.vmem [#allocation9], 64
        %v1699 = vld [vmem:[%s1698] sm:$0xf]
        %v1700 = vld [vmem:[%s1698 + $0x4] sm:$0xf]
        %v1701 = vld [vmem:[%s1698 + $0x8] sm:$0xf]
        %v1702 = vld [vmem:[%s1698 + $0xc] sm:$0xf]
        %v1703 = vld [vmem:[%s1698 + $0x10] sm:$0xf]
        %v1704 = vld [vmem:[%s1698 + $0x14] sm:$0xf]
        %v1705 = vld [vmem:[%s1698 + $0x18] sm:$0xf]
        %v1706 = vld [vmem:[%s1698 + $0x1c] sm:$0xf]
        %v1707 = vld [vmem:[%s1698 + $0x20] sm:$0xf]
        %v1708 = vld [vmem:[%s1698 + $0x24] sm:$0xf]
        %v1709 = vld [vmem:[%s1698 + $0x28] sm:$0xf]
        %v1710 = vld [vmem:[%s1698 + $0x2c] sm:$0xf]
        %v1711 = vld [vmem:[%s1698 + $0x30] sm:$0xf]
        %v1712 = vld [vmem:[%s1698 + $0x34] sm:$0xf]
        %v1713 = vld [vmem:[%s1698 + $0x38] sm:$0xf]
        %v1714 = vld [vmem:[%s1698 + $0x3c] sm:$0xf]
        %v1731 = vunpack.c.l.b16 %v1699
        %v1732 = vunpack.c.l.b16 %v1700
        %v1733 = vunpack.c.l.b16 %v1701
        %v1734 = vunpack.c.l.b16 %v1702
        %v1735 = vunpack.c.l.b16 %v1703
        %v1736 = vunpack.c.l.b16 %v1704
        %v1737 = vunpack.c.l.b16 %v1705
        %v1738 = vunpack.c.l.b16 %v1706
        %v1739 = vunpack.c.l.b16 %v1707
        %v1740 = vunpack.c.l.b16 %v1708
        %v1741 = vunpack.c.l.b16 %v1709
        %v1742 = vunpack.c.l.b16 %v1710
        %v1743 = vunpack.c.l.b16 %v1711
        %v1744 = vunpack.c.l.b16 %v1712
        %v1745 = vunpack.c.l.b16 %v1713
        %v1746 = vunpack.c.l.b16 %v1714
        %v1747 = vpack.c.b16 %v1732, %v1731
        %v1748 = vpack.c.b16 %v1734, %v1733
        %v1749 = vpack.c.b16 %v1736, %v1735
        %v1750 = vpack.c.b16 %v1738, %v1737
        %v1751 = vpack.c.b16 %v1740, %v1739
        %v1752 = vpack.c.b16 %v1742, %v1741
        %v1753 = vpack.c.b16 %v1744, %v1743
        %v1754 = vpack.c.b16 %v1746, %v1745
        %1763 = vmatprep.subr.bf16.mxu0 0
        %1764 = vmatpush1.bf16.msra.mxu0 %v1747
        %1765 = vmatprep.subr.bf16.mxu0 0
        %1766 = vmatpush1.bf16.msra.mxu0 %v1748
        %1767 = vmatprep.subr.bf16.mxu0 0
        %1768 = vmatpush1.bf16.msra.mxu0 %v1749
        %1769 = vmatprep.subr.bf16.mxu0 0
        %1770 = vmatpush1.bf16.msra.mxu0 %v1750
        %1771 = vmatprep.subr.bf16.mxu0 0
        %1772 = vmatpush1.bf16.msra.mxu0 %v1751
        %1773 = vmatprep.subr.bf16.mxu0 0
        %1774 = vmatpush1.bf16.msra.mxu0 %v1752
        %1775 = vmatprep.subr.bf16.mxu0 0
        %1776 = vmatpush1.bf16.msra.mxu0 %v1753
        %1777 = vmatprep.subr.bf16.mxu0 0
        %1778 = vmatpush1.bf16.msra.mxu0 %v1754
        %1779 = vmatprep.subr.bf16.mxu0 0
        %1780 = vmatpush1.bf16.msra.mxu0 0
        %1781 = vmatprep.subr.bf16.mxu0 0
        %1782 = vmatpush1.bf16.msra.mxu0 0
        %1783 = vmatprep.subr.bf16.mxu0 0
        %1784 = vmatpush1.bf16.msra.mxu0 0
        %1785 = vmatprep.subr.bf16.mxu0 0
        %1786 = vmatpush1.bf16.msra.mxu0 0
        %1787 = vmatprep.subr.bf16.mxu0 0
        %1788 = vmatpush1.bf16.msra.mxu0 0
        %1789 = vmatprep.subr.bf16.mxu0 0
        %1790 = vmatpush1.bf16.msra.mxu0 0
        %1791 = vmatprep.subr.bf16.mxu0 0
        %1792 = vmatpush1.bf16.msra.mxu0 0
        %1793 = vmatprep.subr.bf16.mxu0 0
        %1794 = vmatpush1.bf16.msra.mxu0 0
        %1795 = vmatprep.mubr.bf16.mxu0 0
        %1796 = vmatmul.mubr.bf16.gmra.mrb[0].mxu0 %v1696
        %v1797 = vpop.f32.mrb[0].mxu0
        %v1798 = vadd.f32 0.0, %v1797
        %v1799 = vpop.f32.mrb[0].mxu0
        %v1800 = vpop.f32.mrb[0].mxu0
        %v1801 = vadd.f32 0.0, %v1800
        %v1802 = vpop.f32.mrb[0].mxu0
        %1803 = vmatprep.mubr.bf16.mxu0 0
        %1804 = vmatmul.mubr.bf16.gmra.mrb[0].mxu0 %v1697
        %v1805 = vpop.f32.mrb[0].mxu0
        %v1806 = vadd.f32 0.0, %v1805
        %v1807 = vpop.f32.mrb[0].mxu0
        %v1808 = vpop.f32.mrb[0].mxu0
        %v1809 = vadd.f32 0.0, %v1808
        %v1810 = vpop.f32.mrb[0].mxu0
        %1811 = vdwg.mxu0
        %v1828 = vunpack.c.l.b16 %v1676
        %v1829 = vunpack.c.l.b16 %v1677
        %v1830 = vunpack.c.l.b16 %v1678
        %v1831 = vunpack.c.l.b16 %v1679
        %v1832 = vunpack.c.l.b16 %v1680
        %v1833 = vunpack.c.l.b16 %v1681
        %v1834 = vunpack.c.l.b16 %v1682
        %v1835 = vunpack.c.l.b16 %v1683
        %v1836 = vunpack.c.l.b16 %v1684
        %v1837 = vunpack.c.l.b16 %v1685
        %v1838 = vunpack.c.l.b16 %v1686
        %v1839 = vunpack.c.l.b16 %v1687
        %v1840 = vunpack.c.l.b16 %v1688
        %v1841 = vunpack.c.l.b16 %v1689
        %v1842 = vunpack.c.l.b16 %v1690
        %v1843 = vunpack.c.l.b16 %v1691
        %v1844 = vpack.c.b16 %v1829, %v1828
        %v1845 = vpack.c.b16 %v1831, %v1830
        %v1846 = vpack.c.b16 %v1833, %v1832
        %v1847 = vpack.c.b16 %v1835, %v1834
        %v1848 = vpack.c.b16 %v1837, %v1836
        %v1849 = vpack.c.b16 %v1839, %v1838
        %v1850 = vpack.c.b16 %v1841, %v1840
        %v1851 = vpack.c.b16 %v1843, %v1842
        %1860 = vmatprep.subr.bf16.mxu0 0
        %1861 = vmatpush1.bf16.msra.mxu0 %v1844
        %1862 = vmatprep.subr.bf16.mxu0 0
        %1863 = vmatpush1.bf16.msra.mxu0 %v1845
        %1864 = vmatprep.subr.bf16.mxu0 0
        %1865 = vmatpush1.bf16.msra.mxu0 %v1846
        %1866 = vmatprep.subr.bf16.mxu0 0
        %1867 = vmatpush1.bf16.msra.mxu0 %v1847
        %1868 = vmatprep.subr.bf16.mxu0 0
        %1869 = vmatpush1.bf16.msra.mxu0 %v1848
        %1870 = vmatprep.subr.bf16.mxu0 0
        %1871 = vmatpush1.bf16.msra.mxu0 %v1849
        %1872 = vmatprep.subr.bf16.mxu0 0
        %1873 = vmatpush1.bf16.msra.mxu0 %v1850
        %1874 = vmatprep.subr.bf16.mxu0 0
        %1875 = vmatpush1.bf16.msra.mxu0 %v1851
        %1876 = vmatprep.subr.bf16.mxu0 0
        %1877 = vmatpush1.bf16.msra.mxu0 0
        %1878 = vmatprep.subr.bf16.mxu0 0
        %1879 = vmatpush1.bf16.msra.mxu0 0
        %1880 = vmatprep.subr.bf16.mxu0 0
        %1881 = vmatpush1.bf16.msra.mxu0 0
        %1882 = vmatprep.subr.bf16.mxu0 0
        %1883 = vmatpush1.bf16.msra.mxu0 0
        %1884 = vmatprep.subr.bf16.mxu0 0
        %1885 = vmatpush1.bf16.msra.mxu0 0
        %1886 = vmatprep.subr.bf16.mxu0 0
        %1887 = vmatpush1.bf16.msra.mxu0 0
        %1888 = vmatprep.subr.bf16.mxu0 0
        %1889 = vmatpush1.bf16.msra.mxu0 0
        %1890 = vmatprep.subr.bf16.mxu0 0
        %1891 = vmatpush1.bf16.msra.mxu0 0
        %1892 = vmatprep.mubr.bf16.mxu0 0
        %1893 = vmatmul.mubr.bf16.gmra.mrb[0].mxu0 %v1674
        %v1894 = vpop.f32.mrb[0].mxu0
        %v1895 = vadd.f32 %v1798, %v1894
        %v1896 = vpop.f32.mrb[0].mxu0
        %v1897 = vpop.f32.mrb[0].mxu0
        %v1898 = vadd.f32 %v1801, %v1897
        %v1899 = vpop.f32.mrb[0].mxu0
        %1900 = vmatprep.mubr.bf16.mxu0 0
        %1901 = vmatmul.mubr.bf16.gmra.mrb[0].mxu0 %v1675
        %v1902 = vpop.f32.mrb[0].mxu0
        %v1903 = vadd.f32 %v1806, %v1902
        %v1904 = vpop.f32.mrb[0].mxu0
        %v1905 = vpop.f32.mrb[0].mxu0
        %v1906 = vadd.f32 %v1809, %v1905
        %v1907 = vpop.f32.mrb[0].mxu0
        %1908 = vdwg.mxu0
        %v1909 = vld [vmem:[#allocation4 + $0x2] sm:$0xff]
        %v1910 = vld [vmem:[#allocation4 + $0xa] sm:$0xff]
        %v1911 = vld [vmem:[#allocation4 + $0x12] sm:$0xff]
        %v1912 = vld [vmem:[#allocation4 + $0x1a] sm:$0xff]
        %v1913 = vpack.c.bf16 %v1910, %v1909
        %v1914 = vpack.c.bf16 %v1912, %v1911
        %s1915 = scalar_lea.vmem [#allocation9], 128
        %v1916 = vld [vmem:[%s1915] sm:$0xf]
        %v1917 = vld [vmem:[%s1915 + $0x4] sm:$0xf]
        %v1918 = vld [vmem:[%s1915 + $0x8] sm:$0xf]
        %v1919 = vld [vmem:[%s1915 + $0xc] sm:$0xf]
        %v1920 = vld [vmem:[%s1915 + $0x10] sm:$0xf]
        %v1921 = vld [vmem:[%s1915 + $0x14] sm:$0xf]
        %v1922 = vld [vmem:[%s1915 + $0x18] sm:$0xf]
        %v1923 = vld [vmem:[%s1915 + $0x1c] sm:$0xf]
        %v1924 = vld [vmem:[%s1915 + $0x20] sm:$0xf]
        %v1925 = vld [vmem:[%s1915 + $0x24] sm:$0xf]
        %v1926 = vld [vmem:[%s1915 + $0x28] sm:$0xf]
        %v1927 = vld [vmem:[%s1915 + $0x2c] sm:$0xf]
        %v1928 = vld [vmem:[%s1915 + $0x30] sm:$0xf]
        %v1929 = vld [vmem:[%s1915 + $0x34] sm:$0xf]
        %v1930 = vld [vmem:[%s1915 + $0x38] sm:$0xf]
        %v1931 = vld [vmem:[%s1915 + $0x3c] sm:$0xf]
        %v1948 = vunpack.c.l.b16 %v1916
        %v1949 = vunpack.c.l.b16 %v1917
        %v1950 = vunpack.c.l.b16 %v1918
        %v1951 = vunpack.c.l.b16 %v1919
        %v1952 = vunpack.c.l.b16 %v1920
        %v1953 = vunpack.c.l.b16 %v1921
        %v1954 = vunpack.c.l.b16 %v1922
        %v1955 = vunpack.c.l.b16 %v1923
        %v1956 = vunpack.c.l.b16 %v1924
        %v1957 = vunpack.c.l.b16 %v1925
        %v1958 = vunpack.c.l.b16 %v1926
        %v1959 = vunpack.c.l.b16 %v1927
        %v1960 = vunpack.c.l.b16 %v1928
        %v1961 = vunpack.c.l.b16 %v1929
        %v1962 = vunpack.c.l.b16 %v1930
        %v1963 = vunpack.c.l.b16 %v1931
        %v1964 = vpack.c.b16 %v1949, %v1948
        %v1965 = vpack.c.b16 %v1951, %v1950
        %v1966 = vpack.c.b16 %v1953, %v1952
        %v1967 = vpack.c.b16 %v1955, %v1954
        %v1968 = vpack.c.b16 %v1957, %v1956
        %v1969 = vpack.c.b16 %v1959, %v1958
        %v1970 = vpack.c.b16 %v1961, %v1960
        %v1971 = vpack.c.b16 %v1963, %v1962
        %1980 = vmatprep.subr.bf16.mxu0 0
        %1981 = vmatpush1.bf16.msra.mxu0 %v1964
        %1982 = vmatprep.subr.bf16.mxu0 0
        %1983 = vmatpush1.bf16.msra.mxu0 %v1965
        %1984 = vmatprep.subr.bf16.mxu0 0
        %1985 = vmatpush1.bf16.msra.mxu0 %v1966
        %1986 = vmatprep.subr.bf16.mxu0 0
        %1987 = vmatpush1.bf16.msra.mxu0 %v1967
        %1988 = vmatprep.subr.bf16.mxu0 0
        %1989 = vmatpush1.bf16.msra.mxu0 %v1968
        %1990 = vmatprep.subr.bf16.mxu0 0
        %1991 = vmatpush1.bf16.msra.mxu0 %v1969
        %1992 = vmatprep.subr.bf16.mxu0 0
        %1993 = vmatpush1.bf16.msra.mxu0 %v1970
        %1994 = vmatprep.subr.bf16.mxu0 0
        %1995 = vmatpush1.bf16.msra.mxu0 %v1971
        %1996 = vmatprep.subr.bf16.mxu0 0
        %1997 = vmatpush1.bf16.msra.mxu0 0
        %1998 = vmatprep.subr.bf16.mxu0 0
        %1999 = vmatpush1.bf16.msra.mxu0 0
        %2000 = vmatprep.subr.bf16.mxu0 0
        %2001 = vmatpush1.bf16.msra.mxu0 0
        %2002 = vmatprep.subr.bf16.mxu0 0
        %2003 = vmatpush1.bf16.msra.mxu0 0
        %2004 = vmatprep.subr.bf16.mxu0 0
        %2005 = vmatpush1.bf16.msra.mxu0 0
        %2006 = vmatprep.subr.bf16.mxu0 0
        %2007 = vmatpush1.bf16.msra.mxu0 0
        %2008 = vmatprep.subr.bf16.mxu0 0
        %2009 = vmatpush1.bf16.msra.mxu0 0
        %2010 = vmatprep.subr.bf16.mxu0 0
        %2011 = vmatpush1.bf16.msra.mxu0 0
        %2012 = vmatprep.mubr.bf16.mxu0 0
        %2013 = vmatmul.mubr.bf16.gmra.mrb[0].mxu0 %v1913
        %v2014 = vpop.f32.mrb[0].mxu0
        %v2015 = vadd.f32 0.0, %v2014
        %v2016 = vpop.f32.mrb[0].mxu0
        %v2017 = vpop.f32.mrb[0].mxu0
        %v2018 = vadd.f32 0.0, %v2017
        %v2019 = vpop.f32.mrb[0].mxu0
        %2020 = vmatprep.mubr.bf16.mxu0 0
        %2021 = vmatmul.mubr.bf16.gmra.mrb[0].mxu0 %v1914
        %v2022 = vpop.f32.mrb[0].mxu0
        %v2023 = vadd.f32 0.0, %v2022
        %v2024 = vpop.f32.mrb[0].mxu0
        %v2025 = vpop.f32.mrb[0].mxu0
        %v2026 = vadd.f32 0.0, %v2025
        %v2027 = vpop.f32.mrb[0].mxu0
        %2028 = vdwg.mxu0
        %v2029 = vadd.f32 %v1895, %v2015
        %v2030 = vadd.f32 %v1898, %v2018
        %v2031 = vadd.f32 %v1903, %v2023
        %v2032 = vadd.f32 %v1906, %v2026
        %v2033 = vld [vmem:[#allocation4 + $0x3] sm:$0xff]
        %v2034 = vld [vmem:[#allocation4 + $0xb] sm:$0xff]
        %v2035 = vld [vmem:[#allocation4 + $0x13] sm:$0xff]
        %v2036 = vld [vmem:[#allocation4 + $0x1b] sm:$0xff]
        %v2037 = vpack.c.bf16 %v2034, %v2033
        %v2038 = vpack.c.bf16 %v2036, %v2035
        %s2039 = scalar_lea.vmem [#allocation9], 192
        %v2040 = vld [vmem:[%s2039] sm:$0xf]
        %v2041 = vld [vmem:[%s2039 + $0x4] sm:$0xf]
        %v2042 = vld [vmem:[%s2039 + $0x8] sm:$0xf]
        %v2043 = vld [vmem:[%s2039 + $0xc] sm:$0xf]
        %v2044 = vld [vmem:[%s2039 + $0x10] sm:$0xf]
        %v2045 = vld [vmem:[%s2039 + $0x14] sm:$0xf]
        %v2046 = vld [vmem:[%s2039 + $0x18] sm:$0xf]
        %v2047 = vld [vmem:[%s2039 + $0x1c] sm:$0xf]
        %v2048 = vld [vmem:[%s2039 + $0x20] sm:$0xf]
        %v2049 = vld [vmem:[%s2039 + $0x24] sm:$0xf]
        %v2050 = vld [vmem:[%s2039 + $0x28] sm:$0xf]
        %v2051 = vld [vmem:[%s2039 + $0x2c] sm:$0xf]
        %v2052 = vld [vmem:[%s2039 + $0x30] sm:$0xf]
        %v2053 = vld [vmem:[%s2039 + $0x34] sm:$0xf]
        %v2054 = vld [vmem:[%s2039 + $0x38] sm:$0xf]
        %v2055 = vld [vmem:[%s2039 + $0x3c] sm:$0xf]
        %v2072 = vunpack.c.l.b16 %v2040
        %v2073 = vunpack.c.l.b16 %v2041
        %v2074 = vunpack.c.l.b16 %v2042
        %v2075 = vunpack.c.l.b16 %v2043
        %v2076 = vunpack.c.l.b16 %v2044
        %v2077 = vunpack.c.l.b16 %v2045
        %v2078 = vunpack.c.l.b16 %v2046
        %v2079 = vunpack.c.l.b16 %v2047
        %v2080 = vunpack.c.l.b16 %v2048
        %v2081 = vunpack.c.l.b16 %v2049
        %v2082 = vunpack.c.l.b16 %v2050
        %v2083 = vunpack.c.l.b16 %v2051
        %v2084 = vunpack.c.l.b16 %v2052
        %v2085 = vunpack.c.l.b16 %v2053
        %v2086 = vunpack.c.l.b16 %v2054
        %v2087 = vunpack.c.l.b16 %v2055
        %v2088 = vpack.c.b16 %v2073, %v2072
        %v2089 = vpack.c.b16 %v2075, %v2074
        %v2090 = vpack.c.b16 %v2077, %v2076
        %v2091 = vpack.c.b16 %v2079, %v2078
        %v2092 = vpack.c.b16 %v2081, %v2080
        %v2093 = vpack.c.b16 %v2083, %v2082
        %v2094 = vpack.c.b16 %v2085, %v2084
        %v2095 = vpack.c.b16 %v2087, %v2086
        %2104 = vmatprep.subr.bf16.mxu0 0
        %2105 = vmatpush1.bf16.msra.mxu0 %v2088
        %2106 = vmatprep.subr.bf16.mxu0 0
        %2107 = vmatpush1.bf16.msra.mxu0 %v2089
        %2108 = vmatprep.subr.bf16.mxu0 0
        %2109 = vmatpush1.bf16.msra.mxu0 %v2090
        %2110 = vmatprep.subr.bf16.mxu0 0
        %2111 = vmatpush1.bf16.msra.mxu0 %v2091
        %2112 = vmatprep.subr.bf16.mxu0 0
        %2113 = vmatpush1.bf16.msra.mxu0 %v2092
        %2114 = vmatprep.subr.bf16.mxu0 0
        %2115 = vmatpush1.bf16.msra.mxu0 %v2093
        %2116 = vmatprep.subr.bf16.mxu0 0
        %2117 = vmatpush1.bf16.msra.mxu0 %v2094
        %2118 = vmatprep.subr.bf16.mxu0 0
        %2119 = vmatpush1.bf16.msra.mxu0 %v2095
        %2120 = vmatprep.subr.bf16.mxu0 0
        %2121 = vmatpush1.bf16.msra.mxu0 0
        %2122 = vmatprep.subr.bf16.mxu0 0
        %2123 = vmatpush1.bf16.msra.mxu0 0
        %2124 = vmatprep.subr.bf16.mxu0 0
        %2125 = vmatpush1.bf16.msra.mxu0 0
        %2126 = vmatprep.subr.bf16.mxu0 0
        %2127 = vmatpush1.bf16.msra.mxu0 0
        %2128 = vmatprep.subr.bf16.mxu0 0
        %2129 = vmatpush1.bf16.msra.mxu0 0
        %2130 = vmatprep.subr.bf16.mxu0 0
        %2131 = vmatpush1.bf16.msra.mxu0 0
        %2132 = vmatprep.subr.bf16.mxu0 0
        %2133 = vmatpush1.bf16.msra.mxu0 0
        %2134 = vmatprep.subr.bf16.mxu0 0
        %2135 = vmatpush1.bf16.msra.mxu0 0
        %2136 = vmatprep.mubr.bf16.mxu0 0
        %2137 = vmatmul.mubr.bf16.gmra.mrb[0].mxu0 %v2037
        %v2138 = vpop.f32.mrb[0].mxu0
        %v2139 = vadd.f32 0.0, %v2138
        %v2140 = vpop.f32.mrb[0].mxu0
        %v2141 = vpop.f32.mrb[0].mxu0
        %v2142 = vadd.f32 0.0, %v2141
        %v2143 = vpop.f32.mrb[0].mxu0
        %2144 = vmatprep.mubr.bf16.mxu0 0
        %2145 = vmatmul.mubr.bf16.gmra.mrb[0].mxu0 %v2038
        %v2146 = vpop.f32.mrb[0].mxu0
        %v2147 = vadd.f32 0.0, %v2146
        %v2148 = vpop.f32.mrb[0].mxu0
        %v2149 = vpop.f32.mrb[0].mxu0
        %v2150 = vadd.f32 0.0, %v2149
        %v2151 = vpop.f32.mrb[0].mxu0
        %2152 = vdwg.mxu0
        %v2153 = vadd.f32 %v2029, %v2139
        %v2154 = vadd.f32 %v2030, %v2142
        %v2155 = vadd.f32 %v2031, %v2147
        %v2156 = vadd.f32 %v2032, %v2150
        %v2157 = vld [vmem:[#allocation4 + $0x4] sm:$0xff]
        %v2158 = vld [vmem:[#allocation4 + $0xc] sm:$0xff]
        %v2159 = vld [vmem:[#allocation4 + $0x14] sm:$0xff]
        %v2160 = vld [vmem:[#allocation4 + $0x1c] sm:$0xff]
        %v2161 = vpack.c.bf16 %v2158, %v2157
        %v2162 = vpack.c.bf16 %v2160, %v2159
        %s2163 = scalar_lea.vmem [#allocation9], 256
        %v2164 = vld [vmem:[%s2163] sm:$0xf]
        %v2165 = vld [vmem:[%s2163 + $0x4] sm:$0xf]
        %v2166 = vld [vmem:[%s2163 + $0x8] sm:$0xf]
        %v2167 = vld [vmem:[%s2163 + $0xc] sm:$0xf]
        %v2168 = vld [vmem:[%s2163 + $0x10] sm:$0xf]
        %v2169 = vld [vmem:[%s2163 + $0x14] sm:$0xf]
        %v2170 = vld [vmem:[%s2163 + $0x18] sm:$0xf]
        %v2171 = vld [vmem:[%s2163 + $0x1c] sm:$0xf]
        %v2172 = vld [vmem:[%s2163 + $0x20] sm:$0xf]
        %v2173 = vld [vmem:[%s2163 + $0x24] sm:$0xf]
        %v2174 = vld [vmem:[%s2163 + $0x28] sm:$0xf]
        %v2175 = vld [vmem:[%s2163 + $0x2c] sm:$0xf]
        %v2176 = vld [vmem:[%s2163 + $0x30] sm:$0xf]
        %v2177 = vld [vmem:[%s2163 + $0x34] sm:$0xf]
        %v2178 = vld [vmem:[%s2163 + $0x38] sm:$0xf]
        %v2179 = vld [vmem:[%s2163 + $0x3c] sm:$0xf]
        %v2196 = vunpack.c.l.b16 %v2164
        %v2197 = vunpack.c.l.b16 %v2165
        %v2198 = vunpack.c.l.b16 %v2166
        %v2199 = vunpack.c.l.b16 %v2167
        %v2200 = vunpack.c.l.b16 %v2168
        %v2201 = vunpack.c.l.b16 %v2169
        %v2202 = vunpack.c.l.b16 %v2170
        %v2203 = vunpack.c.l.b16 %v2171
        %v2204 = vunpack.c.l.b16 %v2172
        %v2205 = vunpack.c.l.b16 %v2173
        %v2206 = vunpack.c.l.b16 %v2174
        %v2207 = vunpack.c.l.b16 %v2175
        %v2208 = vunpack.c.l.b16 %v2176
        %v2209 = vunpack.c.l.b16 %v2177
        %v2210 = vunpack.c.l.b16 %v2178
        %v2211 = vunpack.c.l.b16 %v2179
        %v2212 = vpack.c.b16 %v2197, %v2196
        %v2213 = vpack.c.b16 %v2199, %v2198
        %v2214 = vpack.c.b16 %v2201, %v2200
        %v2215 = vpack.c.b16 %v2203, %v2202
        %v2216 = vpack.c.b16 %v2205, %v2204
        %v2217 = vpack.c.b16 %v2207, %v2206
        %v2218 = vpack.c.b16 %v2209, %v2208
        %v2219 = vpack.c.b16 %v2211, %v2210
        %2228 = vmatprep.subr.bf16.mxu0 0
        %2229 = vmatpush1.bf16.msra.mxu0 %v2212
        %2230 = vmatprep.subr.bf16.mxu0 0
        %2231 = vmatpush1.bf16.msra.mxu0 %v2213
        %2232 = vmatprep.subr.bf16.mxu0 0
        %2233 = vmatpush1.bf16.msra.mxu0 %v2214
        %2234 = vmatprep.subr.bf16.mxu0 0
        %2235 = vmatpush1.bf16.msra.mxu0 %v2215
        %2236 = vmatprep.subr.bf16.mxu0 0
        %2237 = vmatpush1.bf16.msra.mxu0 %v2216
        %2238 = vmatprep.subr.bf16.mxu0 0
        %2239 = vmatpush1.bf16.msra.mxu0 %v2217
        %2240 = vmatprep.subr.bf16.mxu0 0
        %2241 = vmatpush1.bf16.msra.mxu0 %v2218
        %2242 = vmatprep.subr.bf16.mxu0 0
        %2243 = vmatpush1.bf16.msra.mxu0 %v2219
        %2244 = vmatprep.subr.bf16.mxu0 0
        %2245 = vmatpush1.bf16.msra.mxu0 0
        %2246 = vmatprep.subr.bf16.mxu0 0
        %2247 = vmatpush1.bf16.msra.mxu0 0
        %2248 = vmatprep.subr.bf16.mxu0 0
        %2249 = vmatpush1.bf16.msra.mxu0 0
        %2250 = vmatprep.subr.bf16.mxu0 0
        %2251 = vmatpush1.bf16.msra.mxu0 0
        %2252 = vmatprep.subr.bf16.mxu0 0
        %2253 = vmatpush1.bf16.msra.mxu0 0
        %2254 = vmatprep.subr.bf16.mxu0 0
        %2255 = vmatpush1.bf16.msra.mxu0 0
        %2256 = vmatprep.subr.bf16.mxu0 0
        %2257 = vmatpush1.bf16.msra.mxu0 0
        %2258 = vmatprep.subr.bf16.mxu0 0
        %2259 = vmatpush1.bf16.msra.mxu0 0
        %2260 = vmatprep.mubr.bf16.mxu0 0
        %2261 = vmatmul.mubr.bf16.gmra.mrb[0].mxu0 %v2161
        %v2262 = vpop.f32.mrb[0].mxu0
        %v2263 = vadd.f32 0.0, %v2262
        %v2264 = vpop.f32.mrb[0].mxu0
        %v2265 = vpop.f32.mrb[0].mxu0
        %v2266 = vadd.f32 0.0, %v2265
        %v2267 = vpop.f32.mrb[0].mxu0
        %2268 = vmatprep.mubr.bf16.mxu0 0
        %2269 = vmatmul.mubr.bf16.gmra.mrb[0].mxu0 %v2162
        %v2270 = vpop.f32.mrb[0].mxu0
        %v2271 = vadd.f32 0.0, %v2270
        %v2272 = vpop.f32.mrb[0].mxu0
        %v2273 = vpop.f32.mrb[0].mxu0
        %v2274 = vadd.f32 0.0, %v2273
        %v2275 = vpop.f32.mrb[0].mxu0
        %2276 = vdwg.mxu0
        %v2277 = vadd.f32 %v2153, %v2263
        %v2278 = vadd.f32 %v2154, %v2266
        %v2279 = vadd.f32 %v2155, %v2271
        %v2280 = vadd.f32 %v2156, %v2274
        %v2281 = vadd.f32 %v2277, %v1021
        %v2282 = vadd.f32 %v2278, %v1022
        %v2283 = vadd.f32 %v2279, %v1023
        %v2284 = vadd.f32 %v2280, %v1024
        %v2285 = vpack.c.bf16 %v2282, %v2281
        %v2286 = vpack.c.bf16 %v2284, %v2283
        %v2289 = vunpack.c.l.b16 %v2285
        %v2290 = vunpack.c.h.b16 %v2285
        %v2291 = vunpack.c.l.b16 %v2286
        %v2292 = vunpack.c.h.b16 %v2286
        %v2293 = vpack.c.b16 %v2289, %v2289
        %v2294 = vpack.c.b16 %v2290, %v2290
        %v2295 = vpack.c.b16 %v2291, %v2291
        %v2296 = vpack.c.b16 %v2292, %v2292
        %2301 = vst [vmem:[%s349] sm:$0xf] %v2293
        %2302 = vst [vmem:[%s349 + $0x4] sm:$0xf] %v2294
        %2303 = vst [vmem:[%s349 + $0x8] sm:$0xf] %v2295
        %2304 = vst [vmem:[%s349 + $0xc] sm:$0xf] %v2296
        %p2305 = scmp.lt.s32.totalorder %s21, 1
        %s2306 = scalar_select %p2305, %s21, 1
        %s2307 = smul.addr %s2306, 4
        %s2308 = smul.addr %s2307, 4
        %s2309 = scalar_lea.vmem %s8, %s2308
        // Predicated region
        $region65: #{_lambda_.3} parent=51 // pred_check
          %p2310 = pneg %p212
        $region66: #{_lambda_.3} parent=51 // pred_check_branch
          %2312 = sbr.rel (%p2310) target = $region68
        $region67: #{_lambda_.3} parent=51 // pred_region
          _
        $region68: #{_lambda_.3} parent=51 // pred_fallthru
          _
      $region52: #{_lambda_.3} parent=5 // pred_fallthru
        _
      %p2313 = scmp.le.s32.totalorder 2, %s16
      // Predicated region
      $region69: #{_lambda_.3} parent=5 // pred_check
        %p2314 = pneg %p2313
      $region70: #{_lambda_.3} parent=5 // pred_check_branch
        %2316 = sbr.rel (%p2314) target = $region72
      $region71: #{_lambda_.3} parent=5 // pred_region
        %s2317 = ssub.s32 %s16, 2
        // Predicated region
        $region73: #{_lambda_.3} parent=71 // pred_check
          %p2318 = pneg %p218
        $region74: #{_lambda_.3} parent=71 // pred_check_branch
          %2320 = sbr.rel (%p2318) target = $region76
        $region75: #{_lambda_.3} parent=71 // pred_region
          %p2321 = scmp.lt.s32.totalorder %s22, 1
          %s2322 = scalar_select %p2321, %s22, 1
          %s2323 = smul.addr %s2322, 4
          %s2324 = smul.addr %s2323, 4
          %s2325 = scalar_lea.vmem %s8, %s2324
        $region76: #{_lambda_.3} parent=71 // pred_fallthru
          _
      $region72: #{_lambda_.3} parent=5 // pred_fallthru
        _
    $region6: #{_lambda_.3} parent=1 // loop_footer
      %s20 = sadd.s32 1, %s16
    $region7: #{_lambda_.3} parent=1 // loop_footer_branch
      %15 = sbr.rel target = $region3
    $region8: #{_lambda_.3} parent=1 // loop_exit
      _
    %2326 = vsyncpa [#allocation6], 1
    %s2327 = scalar_lea.sflag [#allocation6], 1
    %2328 = vsyncpa %s2327, 1
    %2329 = vsyncpa [#allocation8], 1

</llo_original>
